<compile_context>
chip_gen: v7x
topology: tpu7x:2x2x1
jax: 0.10.0
libtpu: 0.0.40
codegen_flags: <defaults>
</compile_context>

<pallas_src>
import functools

import jax
import jax.numpy as jnp
from jax.experimental import pallas as pl
from jax.experimental.pallas import tpu as pltpu


# ----------------------------------------------------------------------------
# helpers
# ----------------------------------------------------------------------------
def _choose_tile(dim, candidates):
    for c in candidates:
        if dim % c == 0:
            return c
    return dim  # single full-extent block (always legal: equals the full dim)


def _apply_act(y, act):
    if act == "leaky":
        return jnp.where(y > 0, y, 0.2 * y)
    if act == "sigmoid":
        # numerically stable sigmoid (no exp overflow for large |y|)
        z = jnp.exp(-jnp.abs(y))
        return jnp.where(y >= 0, 1.0 / (1.0 + z), z / (1.0 + z))
    return y


# ----------------------------------------------------------------------------
# Pallas kernels: M-tiled matmul, bf16 operands, f32 accumulation,
# fused bias + activation epilogue (optionally fused BN statistics).
# ----------------------------------------------------------------------------
def _mm_kernel_single_k(a_ref, b_ref, bias_ref, o_ref, *, act):
    y = jnp.dot(a_ref[...], b_ref[...], preferred_element_type=jnp.float32)
    y = y + bias_ref[...]
    o_ref[...] = _apply_act(y, act).astype(o_ref.dtype)


def _mm_kernel_ktiled(a_ref, b_ref, bias_ref, o_ref, *, act):
    k = pl.program_id(1)

    @pl.when(k == 0)
    def _init():
        o_ref[...] = jnp.zeros_like(o_ref)

    # accumulate directly into the resident f32 output block (no acc scratch)
    o_ref[...] += jnp.dot(a_ref[...], b_ref[...],
                          preferred_element_type=jnp.float32)

    @pl.when(k == pl.num_programs(1) - 1)
    def _finalize():
        y = o_ref[...] + bias_ref[...]
        o_ref[...] = _apply_act(y, act)


def _mm_stats_kernel_single_k(a_ref, b_ref, bias_ref, o_ref, sum_ref, sq_ref):
    @pl.when(pl.program_id(0) == 0)
    def _init_stats():
        sum_ref[...] = jnp.zeros_like(sum_ref)
        sq_ref[...] = jnp.zeros_like(sq_ref)

    y = jnp.dot(a_ref[...], b_ref[...], preferred_element_type=jnp.float32)
    y = y + bias_ref[...]
    o_ref[...] = y
    sum_ref[...] += jnp.sum(y, axis=0, keepdims=True)
    sq_ref[...] += jnp.sum(y * y, axis=0, keepdims=True)


def _mm_stats_kernel_ktiled(a_ref, b_ref, bias_ref, o_ref, sum_ref, sq_ref):
    m = pl.program_id(0)
    k = pl.program_id(1)

    @pl.when(jnp.logical_and(m == 0, k == 0))
    def _init_stats():
        sum_ref[...] = jnp.zeros_like(sum_ref)
        sq_ref[...] = jnp.zeros_like(sq_ref)

    @pl.when(k == 0)
    def _init_acc():
        o_ref[...] = jnp.zeros_like(o_ref)

    o_ref[...] += jnp.dot(a_ref[...], b_ref[...],
                          preferred_element_type=jnp.float32)

    @pl.when(k == pl.num_programs(1) - 1)
    def _finalize():
        y = o_ref[...] + bias_ref[...]
        o_ref[...] = y
        sum_ref[...] += jnp.sum(y, axis=0, keepdims=True)
        sq_ref[...] += jnp.sum(y * y, axis=0, keepdims=True)


def matmul_bias_act(a, b, bias, act="none", out_dtype=jnp.float32):
    """(M, K) @ (K, N) + bias, fused LeakyReLU / stable Sigmoid epilogue."""
    M, K = a.shape
    K2, N = b.shape
    assert K == K2, (K, K2)
    a = a.astype(jnp.bfloat16)
    b = b.astype(jnp.bfloat16)
    bias2 = bias.reshape(1, N).astype(jnp.float32)

    tm = _choose_tile(M, (512, 256, 128))
    grid_m = M // tm

    if K <= 2048:
        # K fits a single block: no K grid axis, no init/finalize accumulator.
        kernel = functools.partial(_mm_kernel_single_k, act=act)
        return pl.pallas_call(
            kernel,
            out_shape=jax.ShapeDtypeStruct((M, N), out_dtype),
            grid_spec=pltpu.PrefetchScalarGridSpec(
                num_scalar_prefetch=0,
                grid=(grid_m,),
                in_specs=[
                    pl.BlockSpec((tm, K), lambda m: (m, 0)),
                    pl.BlockSpec((K, N), lambda m: (0, 0)),
                    pl.BlockSpec((1, N), lambda m: (0, 0)),
                ],
                out_specs=pl.BlockSpec((tm, N), lambda m: (m, 0)),
            ),
            compiler_params=pltpu.CompilerParams(
                dimension_semantics=("parallel",)),
        )(a, b, bias2)

    tk = _choose_tile(K, (2048, 1024, 512, 256, 128))
    grid_k = K // tk
    kernel = functools.partial(_mm_kernel_ktiled, act=act)
    out = pl.pallas_call(
        kernel,
        out_shape=jax.ShapeDtypeStruct((M, N), jnp.float32),
        grid_spec=pltpu.PrefetchScalarGridSpec(
            num_scalar_prefetch=0,
            grid=(grid_m, grid_k),
            in_specs=[
                pl.BlockSpec((tm, tk), lambda m, k: (m, k)),
                pl.BlockSpec((tk, N), lambda m, k: (k, 0)),
                pl.BlockSpec((1, N), lambda m, k: (0, 0)),
            ],
            out_specs=pl.BlockSpec((tm, N), lambda m, k: (m, 0)),
        ),
        compiler_params=pltpu.CompilerParams(
            dimension_semantics=("parallel", "arbitrary")),
    )(a, b, bias2)
    return out if out_dtype == jnp.float32 else out.astype(out_dtype)


def matmul_bias_stats(a, b, bias):
    """(M, K) @ (K, N) + bias -> (y_f32, col_sum, col_sumsq).

    The BatchNorm statistics are fused into the matmul epilogue as resident
    (1, N) accumulator outputs, removing the separate stats pass over y.
    """
    M, K = a.shape
    K2, N = b.shape
    assert K == K2, (K, K2)
    a = a.astype(jnp.bfloat16)
    b = b.astype(jnp.bfloat16)
    bias2 = bias.reshape(1, N).astype(jnp.float32)

    tm = _choose_tile(M, (512, 256, 128))
    grid_m = M // tm
    out_shape = (jax.ShapeDtypeStruct((M, N), jnp.float32),
                 jax.ShapeDtypeStruct((1, N), jnp.float32),
                 jax.ShapeDtypeStruct((1, N), jnp.float32))

    if K <= 2048:
        return pl.pallas_call(
            _mm_stats_kernel_single_k,
            out_shape=out_shape,
            grid_spec=pltpu.PrefetchScalarGridSpec(
                num_scalar_prefetch=0,
                grid=(grid_m,),
                in_specs=[
                    pl.BlockSpec((tm, K), lambda m: (m, 0)),
                    pl.BlockSpec((K, N), lambda m: (0, 0)),
                    pl.BlockSpec((1, N), lambda m: (0, 0)),
                ],
                out_specs=(pl.BlockSpec((tm, N), lambda m: (m, 0)),
                           pl.BlockSpec((1, N), lambda m: (0, 0)),
                           pl.BlockSpec((1, N), lambda m: (0, 0))),
            ),
            # stats accumulate across M -> this axis must stay "arbitrary"
            compiler_params=pltpu.CompilerParams(
                dimension_semantics=("arbitrary",)),
        )(a, b, bias2)

    tk = _choose_tile(K, (2048, 1024, 512, 256, 128))
    grid_k = K // tk
    return pl.pallas_call(
        _mm_stats_kernel_ktiled,
        out_shape=out_shape,
        grid_spec=pltpu.PrefetchScalarGridSpec(
            num_scalar_prefetch=0,
            grid=(grid_m, grid_k),
            in_specs=[
                pl.BlockSpec((tm, tk), lambda m, k: (m, k)),
                pl.BlockSpec((tk, N), lambda m, k: (k, 0)),
                pl.BlockSpec((1, N), lambda m, k: (0, 0)),
            ],
            out_specs=(pl.BlockSpec((tm, N), lambda m, k: (m, 0)),
                       pl.BlockSpec((1, N), lambda m, k: (0, 0)),
                       pl.BlockSpec((1, N), lambda m, k: (0, 0))),
        ),
        compiler_params=pltpu.CompilerParams(
            dimension_semantics=("arbitrary", "arbitrary")),
    )(a, b, bias2)


# ----------------------------------------------------------------------------
# BatchNorm2d (training-mode batch stats) + LeakyReLU(0.2)
#   glue  : (1, C)-sized scale/shift from the fused sum / sumsq
#   kernel: "parallel" tiled affine + LeakyReLU
# ----------------------------------------------------------------------------
def _bn_scale_shift(s, sq, gamma, beta, M, eps=1e-5):
    inv_m = 1.0 / float(M)
    mean = s * inv_m
    var = sq * inv_m - mean * mean                       # biased (training mode)
    scale = gamma.reshape(1, -1).astype(jnp.float32) * jax.lax.rsqrt(var + eps)
    shift = beta.reshape(1, -1).astype(jnp.float32) - mean * scale
    return scale, shift


def _affine_act_kernel(x_ref, scale_ref, shift_ref, o_ref, *, slope):
    y = x_ref[...] * scale_ref[...] + shift_ref[...]
    o_ref[...] = jnp.where(y > 0, y, slope * y).astype(o_ref.dtype)


def affine_leaky(x, scale, shift, slope=0.2, out_dtype=jnp.bfloat16):
    M, C = x.shape
    tm = _choose_tile(M, (512, 256, 128))
    grid_m = M // tm
    kernel = functools.partial(_affine_act_kernel, slope=slope)
    return pl.pallas_call(
        kernel,
        out_shape=jax.ShapeDtypeStruct((M, C), out_dtype),
        grid_spec=pltpu.PrefetchScalarGridSpec(
            num_scalar_prefetch=0,
            grid=(grid_m,),
            in_specs=[pl.BlockSpec((tm, C), lambda m: (m, 0)),
                      pl.BlockSpec((1, C), lambda m: (0, 0)),
                      pl.BlockSpec((1, C), lambda m: (0, 0))],
            out_specs=pl.BlockSpec((tm, C), lambda m: (m, 0)),
        ),
        compiler_params=pltpu.CompilerParams(
            dimension_semantics=("parallel",)),
    )(x, scale, shift)


# ----------------------------------------------------------------------------
# Glue: im2col for Conv2d(kernel=4, stride=2, padding=1), NHWC, bf16 patches.
# Patch ordering along K is (kh, kw, Cin); conv weights are stored pre-reshaped
# as (kh*kw*Cin, Cout) to match (i.e. torch weight.permute(2, 3, 1, 0)).
# ----------------------------------------------------------------------------
def _im2col(x_nhwc, k=4, s=2, p=1):
    N, H, W, C = x_nhwc.shape
    Ho = (H + 2 * p - k) // s + 1
    Wo = (W + 2 * p - k) // s + 1
    xp = jnp.pad(x_nhwc, ((0, 0), (p, p), (p, p), (0, 0)))
    cols = []
    for di in range(k):
        for dj in range(k):
            cols.append(xp[:, di:di + s * Ho:s, dj:dj + s * Wo:s, :])
    pat = jnp.stack(cols, axis=3)                  # (N, Ho, Wo, k*k, C)
    return pat.reshape(N * Ho * Wo, k * k * C), (N, Ho, Wo)


# ----------------------------------------------------------------------------
# Parameters
# ----------------------------------------------------------------------------
def _nchw_rows_to_nhwc_rows(w, C, H, W):
    """One-time permutation of Linear rows: NCHW-flatten -> NHWC-flatten order."""
    return jnp.transpose(w.reshape(C, H, W, -1), (1, 2, 0, 3)).reshape(H * W * C, -1)


def init_params(key, img_channels, tile_size):
    ks = jax.random.split(key, 4)
    f = tile_size // 8

    def w(k, shape, scale):
        return jax.random.normal(k, shape, jnp.float32) * scale

    # Conv1: Cout zero-padded 64 -> 128 (lane-dense output).
    w1 = jnp.pad(w(ks[0], (4 * 4 * img_channels, 64), 0.05), ((0, 0), (0, 64)))
    # Conv2: Cin zero-padded 64 -> 128 so Conv1's padded channels are ignored.
    w2 = jnp.pad(w(ks[1], (4, 4, 64, 128), 0.02),
                 ((0, 0), (0, 0), (0, 64), (0, 0))).reshape(4 * 4 * 128, 128)
    w3 = w(ks[2], (4 * 4 * 128, 256), 0.02)
    # Linear: generated in torch/NCHW-flatten row order, permuted once to
    # NHWC-flatten order (removes the runtime transpose), N padded 1 -> 128.
    wl = _nchw_rows_to_nhwc_rows(w(ks[3], (256 * f * f, 1), 0.02), 256, f, f)
    wl = jnp.pad(wl, ((0, 0), (0, 127)))

    return {
        "w1": w1.astype(jnp.bfloat16), "b1": jnp.zeros((128,), jnp.float32),
        "w2": w2.astype(jnp.bfloat16), "b2": jnp.zeros((128,), jnp.float32),
        "g2": jnp.ones((128,), jnp.float32), "be2": jnp.zeros((128,), jnp.float32),
        "w3": w3.astype(jnp.bfloat16), "b3": jnp.zeros((256,), jnp.float32),
        "g3": jnp.ones((256,), jnp.float32), "be3": jnp.zeros((256,), jnp.float32),
        "wl": wl.astype(jnp.bfloat16), "bl": jnp.zeros((128,), jnp.float32),
    }


# ----------------------------------------------------------------------------
# Discriminator_GAN forward
# ----------------------------------------------------------------------------
@jax.jit
def discriminator_gan_forward(img_nchw, params):
    # NCHW (PyTorch convention) -> NHWC for the internal pipeline, bf16 operands.
    x = jnp.transpose(img_nchw, (0, 2, 3, 1)).astype(jnp.bfloat16)

    # Conv2d(img_channels, 64, 4, 2, 1) + LeakyReLU(0.2)   (fused; Cout padded)
    a, (n, ho, wo) = _im2col(x)
    y = matmul_bias_act(a, params["w1"], params["b1"], act="leaky",
                        out_dtype=jnp.bfloat16)
    x = y.reshape(n, ho, wo, 128)

    # Conv2d(64, 128, 4, 2, 1) + BatchNorm2d(128) + LeakyReLU(0.2)
    # (BN sum/sumsq fused into the conv matmul epilogue)
    a, (n, ho, wo) = _im2col(x)
    y, s, sq = matmul_bias_stats(a, params["w2"], params["b2"])
    scale, shift = _bn_scale_shift(s, sq, params["g2"], params["be2"], y.shape[0])
    y = affine_leaky(y, scale, shift, out_dtype=jnp.bfloat16)
    x = y.reshape(n, ho, wo, 128)

    # Conv2d(128, 256, 4, 2, 1) + BatchNorm2d(256) + LeakyReLU(0.2)
    a, (n, ho, wo) = _im2col(x)
    y, s, sq = matmul_bias_stats(a, params["w3"], params["b3"])
    scale, shift = _bn_scale_shift(s, sq, params["g3"], params["be3"], y.shape[0])
    y = affine_leaky(y, scale, shift, out_dtype=jnp.bfloat16)
    x = y.reshape(n, ho, wo, 256)

    # Flatten directly in NHWC order (wl rows were permuted at init to match
    # torch.nn.Flatten on NCHW).
    flat = x.reshape(n, -1)

    # Linear(Tile//8 * Tile//8 * 256, 1) + Sigmoid (fused); N padded to 128,
    # take column 0.
    out = matmul_bias_act(flat, params["wl"], params["bl"], act="sigmoid",
                          out_dtype=jnp.float32)
    return out[:, :1]


if __name__ == "__main__":
    batch = 2
    img_channels = 4
    tile_size = 16  # spatial: 16 -> 8 -> 4 -> 2; linear in-features = 2*2*256

    key = jax.random.PRNGKey(0)
    k_img, k_par = jax.random.split(key)
    img = jax.random.normal(k_img, (batch, img_channels, tile_size, tile_size),
                            jnp.float32)
    params = init_params(k_par, img_channels, tile_size)

    out = discriminator_gan_forward(img, params)
    out = jax.block_until_ready(out)
    assert out.shape == (batch, 1), out.shape
    assert bool(jnp.all(jnp.isfinite(out)))
    assert bool(jnp.all((out >= 0.0) & (out <= 1.0)))
    print("KERNEL_OK")
</pallas_src>

<mosaic_0001>
module attributes {stable_mosaic.version = 11 : i64} {
  func.func @_mm_kernel_single_k(%arg0: i32, %arg1: memref<128x64xbf16, #tpu.memory_space<vmem>>, %arg2: memref<64x128xbf16, #tpu.memory_space<vmem>>, %arg3: memref<1x128xf32, #tpu.memory_space<vmem>>, %arg4: memref<128x128xbf16, #tpu.memory_space<vmem>>) attributes {dimension_semantics = [#tpu.dimension_semantics<parallel>], iteration_bounds = array<i64: 1>, scalar_prefetch = 0 : i64, scratch_operands = 0 : i64, tpu.core_type = #tpu.core_type<tc>, window_params = [{transform_indices = @transform_0, window_bounds = array<i64: 128, 64>}, {pipeline_mode = #tpu.pipeline_mode<synchronous>, transform_indices = @transform_1, window_bounds = array<i64: 64, 128>}, {pipeline_mode = #tpu.pipeline_mode<synchronous>, transform_indices = @transform_2, window_bounds = array<i64: 1, 128>}, {transform_indices = @transform_3, window_bounds = array<i64: 128, 128>}]} {
    %c0 = arith.constant 0 : index
    %c0_0 = arith.constant 0 : index
    %0 = vector.load %arg1[%c0, %c0_0] : memref<128x64xbf16, #tpu.memory_space<vmem>>, vector<128x64xbf16>
    %c0_1 = arith.constant 0 : index
    %c0_2 = arith.constant 0 : index
    %1 = vector.load %arg2[%c0_1, %c0_2] : memref<64x128xbf16, #tpu.memory_space<vmem>>, vector<64x128xbf16>
    %cst = arith.constant dense<0.000000e+00> : vector<128x128xf32>
    %2 = tpu.matmul %0, %1, %cst {dimension_numbers = #tpu.dot_dimension_numbers<[1], [0], [0], [1], [0, 0, 1, 1], [], []>} : vector<128x64xbf16>, vector<64x128xbf16>, vector<128x128xf32> -> vector<128x128xf32>
    %c0_3 = arith.constant 0 : index
    %c0_4 = arith.constant 0 : index
    %3 = vector.load %arg3[%c0_3, %c0_4] : memref<1x128xf32, #tpu.memory_space<vmem>>, vector<1x128xf32>
    %4 = vector.broadcast %3 : vector<1x128xf32> to vector<128x128xf32>
    %5 = arith.addf %2, %4 : vector<128x128xf32>
    %cst_5 = arith.constant 0.000000e+00 : f32
    %6 = vector.broadcast %cst_5 : f32 to vector<128x128xf32>
    %7 = arith.cmpf ogt, %5, %6 : vector<128x128xf32>
    %cst_6 = arith.constant 2.000000e-01 : f32
    %8 = vector.broadcast %cst_6 : f32 to vector<128x128xf32>
    %9 = arith.mulf %8, %5 : vector<128x128xf32>
    %10 = arith.select %7, %5, %9 : vector<128x128xi1>, vector<128x128xf32>
    %11 = arith.truncf %10 : vector<128x128xf32> to vector<128x128xbf16>
    %c0_7 = arith.constant 0 : index
    %c0_8 = arith.constant 0 : index
    %12 = vector.load %arg4[%c0_7, %c0_8] : memref<128x128xbf16, #tpu.memory_space<vmem>>, vector<128x128xbf16>
    tpu.vector_store %arg4[%c0_7, %c0_8], %11 {strides = array<i32>} : memref<128x128xbf16, #tpu.memory_space<vmem>>, vector<128x128xbf16>,
    return
  }
  func.func @transform_0(%arg0: i32) -> (i32, i32) {
    %c0_i32 = arith.constant 0 : i32
    %c0_i32_0 = arith.constant 0 : i32
    return %arg0, %c0_i32 : i32, i32
  }
  func.func @transform_1(%arg0: i32) -> (i32, i32) {
    %c0_i32 = arith.constant 0 : i32
    %c0_i32_0 = arith.constant 0 : i32
    %c0_i32_1 = arith.constant 0 : i32
    return %c0_i32, %c0_i32_0 : i32, i32
  }
  func.func @transform_2(%arg0: i32) -> (i32, i32) {
    %c0_i32 = arith.constant 0 : i32
    %c0_i32_0 = arith.constant 0 : i32
    %c0_i32_1 = arith.constant 0 : i32
    return %c0_i32, %c0_i32_0 : i32, i32
  }
  func.func @transform_3(%arg0: i32) -> (i32, i32) {
    %c0_i32 = arith.constant 0 : i32
    %c0_i32_0 = arith.constant 0 : i32
    return %arg0, %c0_i32 : i32, i32
  }
}

module attributes {stable_mosaic.version = 11 : i64} {
  func.func @_mm_stats_kernel_single_k(%arg0: i32, %arg1: memref<32x2048xbf16, #tpu.memory_space<vmem>>, %arg2: memref<2048x128xbf16, #tpu.memory_space<vmem>>, %arg3: memref<1x128xf32, #tpu.memory_space<vmem>>, %arg4: memref<32x128xf32, #tpu.memory_space<vmem>>, %arg5: memref<1x128xf32, #tpu.memory_space<vmem>>, %arg6: memref<1x128xf32, #tpu.memory_space<vmem>>) attributes {dimension_semantics = [#tpu.dimension_semantics<arbitrary>], iteration_bounds = array<i64: 1>, scalar_prefetch = 0 : i64, scratch_operands = 0 : i64, tpu.core_type = #tpu.core_type<tc>, window_params = [{transform_indices = @transform_0, window_bounds = array<i64: 32, 2048>}, {pipeline_mode = #tpu.pipeline_mode<synchronous>, transform_indices = @transform_1, window_bounds = array<i64: 2048, 128>}, {pipeline_mode = #tpu.pipeline_mode<synchronous>, transform_indices = @transform_2, window_bounds = array<i64: 1, 128>}, {transform_indices = @transform_3, window_bounds = array<i64: 32, 128>}, {pipeline_mode = #tpu.pipeline_mode<synchronous>, transform_indices = @transform_4, window_bounds = array<i64: 1, 128>}, {pipeline_mode = #tpu.pipeline_mode<synchronous>, transform_indices = @transform_5, window_bounds = array<i64: 1, 128>}]} {
    %c0_i32 = arith.constant 0 : i32
    %0 = arith.cmpi eq, %arg0, %c0_i32 : i32
    %1 = arith.extui %0 : i1 to i32
    %c0_i32_0 = arith.constant 0 : i32
    %2 = arith.cmpi ne, %1, %c0_i32_0 : i32
    scf.if %2 {
      %cst_18 = arith.constant 0.000000e+00 : f32
      %21 = vector.broadcast %cst_18 : f32 to vector<1x128xf32>
      %c0_19 = arith.constant 0 : index
      %c0_20 = arith.constant 0 : index
      %22 = vector.load %arg5[%c0_19, %c0_20] : memref<1x128xf32, #tpu.memory_space<vmem>>, vector<1x128xf32>
      tpu.vector_store %arg5[%c0_19, %c0_20], %21 {strides = array<i32>} : memref<1x128xf32, #tpu.memory_space<vmem>>, vector<1x128xf32>,
      %cst_21 = arith.constant 0.000000e+00 : f32
      %23 = vector.broadcast %cst_21 : f32 to vector<1x128xf32>
      %c0_22 = arith.constant 0 : index
      %c0_23 = arith.constant 0 : index
      %24 = vector.load %arg6[%c0_22, %c0_23] : memref<1x128xf32, #tpu.memory_space<vmem>>, vector<1x128xf32>
      tpu.vector_store %arg6[%c0_22, %c0_23], %23 {strides = array<i32>} : memref<1x128xf32, #tpu.memory_space<vmem>>, vector<1x128xf32>,
    } else {
    }
    %c0 = arith.constant 0 : index
    %c0_1 = arith.constant 0 : index
    %3 = vector.load %arg1[%c0, %c0_1] : memref<32x2048xbf16, #tpu.memory_space<vmem>>, vector<32x2048xbf16>
    %c0_2 = arith.constant 0 : index
    %c0_3 = arith.constant 0 : index
    %4 = vector.load %arg2[%c0_2, %c0_3] : memref<2048x128xbf16, #tpu.memory_space<vmem>>, vector<2048x128xbf16>
    %cst = arith.constant dense<0.000000e+00> : vector<32x128xf32>
    %5 = tpu.matmul %3, %4, %cst {dimension_numbers = #tpu.dot_dimension_numbers<[1], [0], [0], [1], [0, 0, 1, 1], [], []>} : vector<32x2048xbf16>, vector<2048x128xbf16>, vector<32x128xf32> -> vector<32x128xf32>
    %c0_4 = arith.constant 0 : index
    %c0_5 = arith.constant 0 : index
    %6 = vector.load %arg3[%c0_4, %c0_5] : memref<1x128xf32, #tpu.memory_space<vmem>>, vector<1x128xf32>
    %7 = vector.broadcast %6 : vector<1x128xf32> to vector<32x128xf32>
    %8 = arith.addf %5, %7 : vector<32x128xf32>
    %c0_6 = arith.constant 0 : index
    %c0_7 = arith.constant 0 : index
    %9 = vector.load %arg4[%c0_6, %c0_7] : memref<32x128xf32, #tpu.memory_space<vmem>>, vector<32x128xf32>
    tpu.vector_store %arg4[%c0_6, %c0_7], %8 {strides = array<i32>} : memref<32x128xf32, #tpu.memory_space<vmem>>, vector<32x128xf32>,
    %c0_8 = arith.constant 0 : index
    %c0_9 = arith.constant 0 : index
    %10 = vector.load %arg5[%c0_8, %c0_9] : memref<1x128xf32, #tpu.memory_space<vmem>>, vector<1x128xf32>
    %cst_10 = arith.constant dense<0.000000e+00> : vector<128xf32>
    %11 = vector.multi_reduction <add>, %8, %cst_10 [0] : vector<32x128xf32> to vector<128xf32>
    %12 = vector.shape_cast %11 : vector<128xf32> to vector<1x128xf32>
    %13 = arith.addf %10, %12 : vector<1x128xf32>
    %c0_11 = arith.constant 0 : index
    %c0_12 = arith.constant 0 : index
    %14 = vector.load %arg5[%c0_11, %c0_12] : memref<1x128xf32, #tpu.memory_space<vmem>>, vector<1x128xf32>
    tpu.vector_store %arg5[%c0_11, %c0_12], %13 {strides = array<i32>} : memref<1x128xf32, #tpu.memory_space<vmem>>, vector<1x128xf32>,
    %c0_13 = arith.constant 0 : index
    %c0_14 = arith.constant 0 : index
    %15 = vector.load %arg6[%c0_13, %c0_14] : memref<1x128xf32, #tpu.memory_space<vmem>>, vector<1x128xf32>
    %16 = arith.mulf %8, %8 : vector<32x128xf32>
    %cst_15 = arith.constant dense<0.000000e+00> : vector<128xf32>
    %17 = vector.multi_reduction <add>, %16, %cst_15 [0] : vector<32x128xf32> to vector<128xf32>
    %18 = vector.shape_cast %17 : vector<128xf32> to vector<1x128xf32>
    %19 = arith.addf %15, %18 : vector<1x128xf32>
    %c0_16 = arith.constant 0 : index
    %c0_17 = arith.constant 0 : index
    %20 = vector.load %arg6[%c0_16, %c0_17] : memref<1x128xf32, #tpu.memory_space<vmem>>, vector<1x128xf32>
    tpu.vector_store %arg6[%c0_16, %c0_17], %19 {strides = array<i32>} : memref<1x128xf32, #tpu.memory_space<vmem>>, vector<1x128xf32>,
    return
  }
  func.func @transform_0(%arg0: i32) -> (i32, i32) {
    %c0_i32 = arith.constant 0 : i32
    %c0_i32_0 = arith.constant 0 : i32
    return %arg0, %c0_i32 : i32, i32
  }
  func.func @transform_1(%arg0: i32) -> (i32, i32) {
    %c0_i32 = arith.constant 0 : i32
    %c0_i32_0 = arith.constant 0 : i32
    %c0_i32_1 = arith.constant 0 : i32
    return %c0_i32, %c0_i32_0 : i32, i32
  }
  func.func @transform_2(%arg0: i32) -> (i32, i32) {
    %c0_i32 = arith.constant 0 : i32
    %c0_i32_0 = arith.constant 0 : i32
    %c0_i32_1 = arith.constant 0 : i32
    return %c0_i32, %c0_i32_0 : i32, i32
  }
  func.func @transform_3(%arg0: i32) -> (i32, i32) {
    %c0_i32 = arith.constant 0 : i32
    %c0_i32_0 = arith.constant 0 : i32
    return %arg0, %c0_i32 : i32, i32
  }
  func.func @transform_4(%arg0: i32) -> (i32, i32) {
    %c0_i32 = arith.constant 0 : i32
    %c0_i32_0 = arith.constant 0 : i32
    %c0_i32_1 = arith.constant 0 : i32
    return %c0_i32, %c0_i32_0 : i32, i32
  }
  func.func @transform_5(%arg0: i32) -> (i32, i32) {
    %c0_i32 = arith.constant 0 : i32
    %c0_i32_0 = arith.constant 0 : i32
    %c0_i32_1 = arith.constant 0 : i32
    return %c0_i32, %c0_i32_0 : i32, i32
  }
}

module attributes {stable_mosaic.version = 11 : i64} {
  func.func @_affine_act_kernel(%arg0: i32, %arg1: memref<32x128xf32, #tpu.memory_space<vmem>>, %arg2: memref<1x128xf32, #tpu.memory_space<vmem>>, %arg3: memref<1x128xf32, #tpu.memory_space<vmem>>, %arg4: memref<32x128xbf16, #tpu.memory_space<vmem>>) attributes {dimension_semantics = [#tpu.dimension_semantics<parallel>], iteration_bounds = array<i64: 1>, scalar_prefetch = 0 : i64, scratch_operands = 0 : i64, tpu.core_type = #tpu.core_type<tc>, window_params = [{transform_indices = @transform_0, window_bounds = array<i64: 32, 128>}, {pipeline_mode = #tpu.pipeline_mode<synchronous>, transform_indices = @transform_1, window_bounds = array<i64: 1, 128>}, {pipeline_mode = #tpu.pipeline_mode<synchronous>, transform_indices = @transform_2, window_bounds = array<i64: 1, 128>}, {transform_indices = @transform_3, window_bounds = array<i64: 32, 128>}]} {
    %c0 = arith.constant 0 : index
    %c0_0 = arith.constant 0 : index
    %0 = vector.load %arg1[%c0, %c0_0] : memref<32x128xf32, #tpu.memory_space<vmem>>, vector<32x128xf32>
    %c0_1 = arith.constant 0 : index
    %c0_2 = arith.constant 0 : index
    %1 = vector.load %arg2[%c0_1, %c0_2] : memref<1x128xf32, #tpu.memory_space<vmem>>, vector<1x128xf32>
    %2 = vector.broadcast %1 : vector<1x128xf32> to vector<32x128xf32>
    %3 = arith.mulf %0, %2 : vector<32x128xf32>
    %c0_3 = arith.constant 0 : index
    %c0_4 = arith.constant 0 : index
    %4 = vector.load %arg3[%c0_3, %c0_4] : memref<1x128xf32, #tpu.memory_space<vmem>>, vector<1x128xf32>
    %5 = vector.broadcast %4 : vector<1x128xf32> to vector<32x128xf32>
    %6 = arith.addf %3, %5 : vector<32x128xf32>
    %cst = arith.constant 0.000000e+00 : f32
    %7 = vector.broadcast %cst : f32 to vector<32x128xf32>
    %8 = arith.cmpf ogt, %6, %7 : vector<32x128xf32>
    %cst_5 = arith.constant 2.000000e-01 : f32
    %9 = vector.broadcast %cst_5 : f32 to vector<32x128xf32>
    %10 = arith.mulf %9, %6 : vector<32x128xf32>
    %11 = arith.select %8, %6, %10 : vector<32x128xi1>, vector<32x128xf32>
    %12 = arith.truncf %11 : vector<32x128xf32> to vector<32x128xbf16>
    %c0_6 = arith.constant 0 : index
    %c0_7 = arith.constant 0 : index
    %13 = vector.load %arg4[%c0_6, %c0_7] : memref<32x128xbf16, #tpu.memory_space<vmem>>, vector<32x128xbf16>
    tpu.vector_store %arg4[%c0_6, %c0_7], %12 {strides = array<i32>} : memref<32x128xbf16, #tpu.memory_space<vmem>>, vector<32x128xbf16>,
    return
  }
  func.func @transform_0(%arg0: i32) -> (i32, i32) {
    %c0_i32 = arith.constant 0 : i32
    %c0_i32_0 = arith.constant 0 : i32
    return %arg0, %c0_i32 : i32, i32
  }
  func.func @transform_1(%arg0: i32) -> (i32, i32) {
    %c0_i32 = arith.constant 0 : i32
    %c0_i32_0 = arith.constant 0 : i32
    %c0_i32_1 = arith.constant 0 : i32
    return %c0_i32, %c0_i32_0 : i32, i32
  }
  func.func @transform_2(%arg0: i32) -> (i32, i32) {
    %c0_i32 = arith.constant 0 : i32
    %c0_i32_0 = arith.constant 0 : i32
    %c0_i32_1 = arith.constant 0 : i32
    return %c0_i32, %c0_i32_0 : i32, i32
  }
  func.func @transform_3(%arg0: i32) -> (i32, i32) {
    %c0_i32 = arith.constant 0 : i32
    %c0_i32_0 = arith.constant 0 : i32
    return %arg0, %c0_i32 : i32, i32
  }
}

module attributes {stable_mosaic.version = 11 : i64} {
  func.func @_mm_stats_kernel_single_k(%arg0: i32, %arg1: memref<8x2048xbf16, #tpu.memory_space<vmem>>, %arg2: memref<2048x256xbf16, #tpu.memory_space<vmem>>, %arg3: memref<1x256xf32, #tpu.memory_space<vmem>>, %arg4: memref<8x256xf32, #tpu.memory_space<vmem>>, %arg5: memref<1x256xf32, #tpu.memory_space<vmem>>, %arg6: memref<1x256xf32, #tpu.memory_space<vmem>>) attributes {dimension_semantics = [#tpu.dimension_semantics<arbitrary>], iteration_bounds = array<i64: 1>, scalar_prefetch = 0 : i64, scratch_operands = 0 : i64, tpu.core_type = #tpu.core_type<tc>, window_params = [{transform_indices = @transform_0, window_bounds = array<i64: 8, 2048>}, {pipeline_mode = #tpu.pipeline_mode<synchronous>, transform_indices = @transform_1, window_bounds = array<i64: 2048, 256>}, {pipeline_mode = #tpu.pipeline_mode<synchronous>, transform_indices = @transform_2, window_bounds = array<i64: 1, 256>}, {transform_indices = @transform_3, window_bounds = array<i64: 8, 256>}, {pipeline_mode = #tpu.pipeline_mode<synchronous>, transform_indices = @transform_4, window_bounds = array<i64: 1, 256>}, {pipeline_mode = #tpu.pipeline_mode<synchronous>, transform_indices = @transform_5, window_bounds = array<i64: 1, 256>}]} {
    %c0_i32 = arith.constant 0 : i32
    %0 = arith.cmpi eq, %arg0, %c0_i32 : i32
    %1 = arith.extui %0 : i1 to i32
    %c0_i32_0 = arith.constant 0 : i32
    %2 = arith.cmpi ne, %1, %c0_i32_0 : i32
    scf.if %2 {
      %cst_18 = arith.constant 0.000000e+00 : f32
      %21 = vector.broadcast %cst_18 : f32 to vector<1x256xf32>
      %c0_19 = arith.constant 0 : index
      %c0_20 = arith.constant 0 : index
      %22 = vector.load %arg5[%c0_19, %c0_20] : memref<1x256xf32, #tpu.memory_space<vmem>>, vector<1x256xf32>
      tpu.vector_store %arg5[%c0_19, %c0_20], %21 {strides = array<i32>} : memref<1x256xf32, #tpu.memory_space<vmem>>, vector<1x256xf32>,
      %cst_21 = arith.constant 0.000000e+00 : f32
      %23 = vector.broadcast %cst_21 : f32 to vector<1x256xf32>
      %c0_22 = arith.constant 0 : index
      %c0_23 = arith.constant 0 : index
      %24 = vector.load %arg6[%c0_22, %c0_23] : memref<1x256xf32, #tpu.memory_space<vmem>>, vector<1x256xf32>
      tpu.vector_store %arg6[%c0_22, %c0_23], %23 {strides = array<i32>} : memref<1x256xf32, #tpu.memory_space<vmem>>, vector<1x256xf32>,
    } else {
    }
    %c0 = arith.constant 0 : index
    %c0_1 = arith.constant 0 : index
    %3 = vector.load %arg1[%c0, %c0_1] : memref<8x2048xbf16, #tpu.memory_space<vmem>>, vector<8x2048xbf16>
    %c0_2 = arith.constant 0 : index
    %c0_3 = arith.constant 0 : index
    %4 = vector.load %arg2[%c0_2, %c0_3] : memref<2048x256xbf16, #tpu.memory_space<vmem>>, vector<2048x256xbf16>
    %cst = arith.constant dense<0.000000e+00> : vector<8x256xf32>
    %5 = tpu.matmul %3, %4, %cst {dimension_numbers = #tpu.dot_dimension_numbers<[1], [0], [0], [1], [0, 0, 1, 1], [], []>} : vector<8x2048xbf16>, vector<2048x256xbf16>, vector<8x256xf32> -> vector<8x256xf32>
    %c0_4 = arith.constant 0 : index
    %c0_5 = arith.constant 0 : index
    %6 = vector.load %arg3[%c0_4, %c0_5] : memref<1x256xf32, #tpu.memory_space<vmem>>, vector<1x256xf32>
    %7 = vector.broadcast %6 : vector<1x256xf32> to vector<8x256xf32>
    %8 = arith.addf %5, %7 : vector<8x256xf32>
    %c0_6 = arith.constant 0 : index
    %c0_7 = arith.constant 0 : index
    %9 = vector.load %arg4[%c0_6, %c0_7] : memref<8x256xf32, #tpu.memory_space<vmem>>, vector<8x256xf32>
    tpu.vector_store %arg4[%c0_6, %c0_7], %8 {strides = array<i32>} : memref<8x256xf32, #tpu.memory_space<vmem>>, vector<8x256xf32>,
    %c0_8 = arith.constant 0 : index
    %c0_9 = arith.constant 0 : index
    %10 = vector.load %arg5[%c0_8, %c0_9] : memref<1x256xf32, #tpu.memory_space<vmem>>, vector<1x256xf32>
    %cst_10 = arith.constant dense<0.000000e+00> : vector<256xf32>
    %11 = vector.multi_reduction <add>, %8, %cst_10 [0] : vector<8x256xf32> to vector<256xf32>
    %12 = vector.shape_cast %11 : vector<256xf32> to vector<1x256xf32>
    %13 = arith.addf %10, %12 : vector<1x256xf32>
    %c0_11 = arith.constant 0 : index
    %c0_12 = arith.constant 0 : index
    %14 = vector.load %arg5[%c0_11, %c0_12] : memref<1x256xf32, #tpu.memory_space<vmem>>, vector<1x256xf32>
    tpu.vector_store %arg5[%c0_11, %c0_12], %13 {strides = array<i32>} : memref<1x256xf32, #tpu.memory_space<vmem>>, vector<1x256xf32>,
    %c0_13 = arith.constant 0 : index
    %c0_14 = arith.constant 0 : index
    %15 = vector.load %arg6[%c0_13, %c0_14] : memref<1x256xf32, #tpu.memory_space<vmem>>, vector<1x256xf32>
    %16 = arith.mulf %8, %8 : vector<8x256xf32>
    %cst_15 = arith.constant dense<0.000000e+00> : vector<256xf32>
    %17 = vector.multi_reduction <add>, %16, %cst_15 [0] : vector<8x256xf32> to vector<256xf32>
    %18 = vector.shape_cast %17 : vector<256xf32> to vector<1x256xf32>
    %19 = arith.addf %15, %18 : vector<1x256xf32>
    %c0_16 = arith.constant 0 : index
    %c0_17 = arith.constant 0 : index
    %20 = vector.load %arg6[%c0_16, %c0_17] : memref<1x256xf32, #tpu.memory_space<vmem>>, vector<1x256xf32>
    tpu.vector_store %arg6[%c0_16, %c0_17], %19 {strides = array<i32>} : memref<1x256xf32, #tpu.memory_space<vmem>>, vector<1x256xf32>,
    return
  }
  func.func @transform_0(%arg0: i32) -> (i32, i32) {
    %c0_i32 = arith.constant 0 : i32
    %c0_i32_0 = arith.constant 0 : i32
    return %arg0, %c0_i32 : i32, i32
  }
  func.func @transform_1(%arg0: i32) -> (i32, i32) {
    %c0_i32 = arith.constant 0 : i32
    %c0_i32_0 = arith.constant 0 : i32
    %c0_i32_1 = arith.constant 0 : i32
    return %c0_i32, %c0_i32_0 : i32, i32
  }
  func.func @transform_2(%arg0: i32) -> (i32, i32) {
    %c0_i32 = arith.constant 0 : i32
    %c0_i32_0 = arith.constant 0 : i32
    %c0_i32_1 = arith.constant 0 : i32
    return %c0_i32, %c0_i32_0 : i32, i32
  }
  func.func @transform_3(%arg0: i32) -> (i32, i32) {
    %c0_i32 = arith.constant 0 : i32
    %c0_i32_0 = arith.constant 0 : i32
    return %arg0, %c0_i32 : i32, i32
  }
  func.func @transform_4(%arg0: i32) -> (i32, i32) {
    %c0_i32 = arith.constant 0 : i32
    %c0_i32_0 = arith.constant 0 : i32
    %c0_i32_1 = arith.constant 0 : i32
    return %c0_i32, %c0_i32_0 : i32, i32
  }
  func.func @transform_5(%arg0: i32) -> (i32, i32) {
    %c0_i32 = arith.constant 0 : i32
    %c0_i32_0 = arith.constant 0 : i32
    %c0_i32_1 = arith.constant 0 : i32
    return %c0_i32, %c0_i32_0 : i32, i32
  }
}

module attributes {stable_mosaic.version = 11 : i64} {
  func.func @_affine_act_kernel(%arg0: i32, %arg1: memref<8x256xf32, #tpu.memory_space<vmem>>, %arg2: memref<1x256xf32, #tpu.memory_space<vmem>>, %arg3: memref<1x256xf32, #tpu.memory_space<vmem>>, %arg4: memref<8x256xbf16, #tpu.memory_space<vmem>>) attributes {dimension_semantics = [#tpu.dimension_semantics<parallel>], iteration_bounds = array<i64: 1>, scalar_prefetch = 0 : i64, scratch_operands = 0 : i64, tpu.core_type = #tpu.core_type<tc>, window_params = [{transform_indices = @transform_0, window_bounds = array<i64: 8, 256>}, {pipeline_mode = #tpu.pipeline_mode<synchronous>, transform_indices = @transform_1, window_bounds = array<i64: 1, 256>}, {pipeline_mode = #tpu.pipeline_mode<synchronous>, transform_indices = @transform_2, window_bounds = array<i64: 1, 256>}, {transform_indices = @transform_3, window_bounds = array<i64: 8, 256>}]} {
    %c0 = arith.constant 0 : index
    %c0_0 = arith.constant 0 : index
    %0 = vector.load %arg1[%c0, %c0_0] : memref<8x256xf32, #tpu.memory_space<vmem>>, vector<8x256xf32>
    %c0_1 = arith.constant 0 : index
    %c0_2 = arith.constant 0 : index
    %1 = vector.load %arg2[%c0_1, %c0_2] : memref<1x256xf32, #tpu.memory_space<vmem>>, vector<1x256xf32>
    %2 = vector.broadcast %1 : vector<1x256xf32> to vector<8x256xf32>
    %3 = arith.mulf %0, %2 : vector<8x256xf32>
    %c0_3 = arith.constant 0 : index
    %c0_4 = arith.constant 0 : index
    %4 = vector.load %arg3[%c0_3, %c0_4] : memref<1x256xf32, #tpu.memory_space<vmem>>, vector<1x256xf32>
    %5 = vector.broadcast %4 : vector<1x256xf32> to vector<8x256xf32>
    %6 = arith.addf %3, %5 : vector<8x256xf32>
    %cst = arith.constant 0.000000e+00 : f32
    %7 = vector.broadcast %cst : f32 to vector<8x256xf32>
    %8 = arith.cmpf ogt, %6, %7 : vector<8x256xf32>
    %cst_5 = arith.constant 2.000000e-01 : f32
    %9 = vector.broadcast %cst_5 : f32 to vector<8x256xf32>
    %10 = arith.mulf %9, %6 : vector<8x256xf32>
    %11 = arith.select %8, %6, %10 : vector<8x256xi1>, vector<8x256xf32>
    %12 = arith.truncf %11 : vector<8x256xf32> to vector<8x256xbf16>
    %c0_6 = arith.constant 0 : index
    %c0_7 = arith.constant 0 : index
    %13 = vector.load %arg4[%c0_6, %c0_7] : memref<8x256xbf16, #tpu.memory_space<vmem>>, vector<8x256xbf16>
    tpu.vector_store %arg4[%c0_6, %c0_7], %12 {strides = array<i32>} : memref<8x256xbf16, #tpu.memory_space<vmem>>, vector<8x256xbf16>,
    return
  }
  func.func @transform_0(%arg0: i32) -> (i32, i32) {
    %c0_i32 = arith.constant 0 : i32
    %c0_i32_0 = arith.constant 0 : i32
    return %arg0, %c0_i32 : i32, i32
  }
  func.func @transform_1(%arg0: i32) -> (i32, i32) {
    %c0_i32 = arith.constant 0 : i32
    %c0_i32_0 = arith.constant 0 : i32
    %c0_i32_1 = arith.constant 0 : i32
    return %c0_i32, %c0_i32_0 : i32, i32
  }
  func.func @transform_2(%arg0: i32) -> (i32, i32) {
    %c0_i32 = arith.constant 0 : i32
    %c0_i32_0 = arith.constant 0 : i32
    %c0_i32_1 = arith.constant 0 : i32
    return %c0_i32, %c0_i32_0 : i32, i32
  }
  func.func @transform_3(%arg0: i32) -> (i32, i32) {
    %c0_i32 = arith.constant 0 : i32
    %c0_i32_0 = arith.constant 0 : i32
    return %arg0, %c0_i32 : i32, i32
  }
}

module attributes {stable_mosaic.version = 11 : i64} {
  func.func @_mm_kernel_single_k(%arg0: i32, %arg1: memref<2x1024xbf16, #tpu.memory_space<vmem>>, %arg2: memref<1024x128xbf16, #tpu.memory_space<vmem>>, %arg3: memref<1x128xf32, #tpu.memory_space<vmem>>, %arg4: memref<2x128xf32, #tpu.memory_space<vmem>>) attributes {dimension_semantics = [#tpu.dimension_semantics<parallel>], iteration_bounds = array<i64: 1>, scalar_prefetch = 0 : i64, scratch_operands = 0 : i64, tpu.core_type = #tpu.core_type<tc>, window_params = [{transform_indices = @transform_0, window_bounds = array<i64: 2, 1024>}, {pipeline_mode = #tpu.pipeline_mode<synchronous>, transform_indices = @transform_1, window_bounds = array<i64: 1024, 128>}, {pipeline_mode = #tpu.pipeline_mode<synchronous>, transform_indices = @transform_2, window_bounds = array<i64: 1, 128>}, {transform_indices = @transform_3, window_bounds = array<i64: 2, 128>}]} {
    %c0 = arith.constant 0 : index
    %c0_0 = arith.constant 0 : index
    %0 = vector.load %arg1[%c0, %c0_0] : memref<2x1024xbf16, #tpu.memory_space<vmem>>, vector<2x1024xbf16>
    %c0_1 = arith.constant 0 : index
    %c0_2 = arith.constant 0 : index
    %1 = vector.load %arg2[%c0_1, %c0_2] : memref<1024x128xbf16, #tpu.memory_space<vmem>>, vector<1024x128xbf16>
    %cst = arith.constant dense<0.000000e+00> : vector<2x128xf32>
    %2 = tpu.matmul %0, %1, %cst {dimension_numbers = #tpu.dot_dimension_numbers<[1], [0], [0], [1], [0, 0, 1, 1], [], []>} : vector<2x1024xbf16>, vector<1024x128xbf16>, vector<2x128xf32> -> vector<2x128xf32>
    %c0_3 = arith.constant 0 : index
    %c0_4 = arith.constant 0 : index
    %3 = vector.load %arg3[%c0_3, %c0_4] : memref<1x128xf32, #tpu.memory_space<vmem>>, vector<1x128xf32>
    %4 = vector.broadcast %3 : vector<1x128xf32> to vector<2x128xf32>
    %5 = arith.addf %2, %4 : vector<2x128xf32>
    %6 = math.absf %5 : vector<2x128xf32>
    %cst_5 = arith.constant 0.000000e+00 : f32
    %7 = vector.broadcast %cst_5 : f32 to vector<2x128xf32>
    %8 = arith.subf %7, %6 : vector<2x128xf32>
    %9 = math.exp %8 : vector<2x128xf32>
    %cst_6 = arith.constant 0.000000e+00 : f32
    %10 = vector.broadcast %cst_6 : f32 to vector<2x128xf32>
    %11 = arith.cmpf oge, %5, %10 : vector<2x128xf32>
    %cst_7 = arith.constant 1.000000e+00 : f32
    %12 = vector.broadcast %cst_7 : f32 to vector<2x128xf32>
    %13 = arith.addf %12, %9 : vector<2x128xf32>
    %cst_8 = arith.constant 1.000000e+00 : f32
    %14 = vector.broadcast %cst_8 : f32 to vector<2x128xf32>
    %15 = arith.divf %14, %13 : vector<2x128xf32>
    %cst_9 = arith.constant 1.000000e+00 : f32
    %16 = vector.broadcast %cst_9 : f32 to vector<2x128xf32>
    %17 = arith.addf %16, %9 : vector<2x128xf32>
    %18 = arith.divf %9, %17 : vector<2x128xf32>
    %19 = arith.select %11, %15, %18 : vector<2x128xi1>, vector<2x128xf32>
    %c0_10 = arith.constant 0 : index
    %c0_11 = arith.constant 0 : index
    %20 = vector.load %arg4[%c0_10, %c0_11] : memref<2x128xf32, #tpu.memory_space<vmem>>, vector<2x128xf32>
    tpu.vector_store %arg4[%c0_10, %c0_11], %19 {strides = array<i32>} : memref<2x128xf32, #tpu.memory_space<vmem>>, vector<2x128xf32>,
    return
  }
  func.func @transform_0(%arg0: i32) -> (i32, i32) {
    %c0_i32 = arith.constant 0 : i32
    %c0_i32_0 = arith.constant 0 : i32
    return %arg0, %c0_i32 : i32, i32
  }
  func.func @transform_1(%arg0: i32) -> (i32, i32) {
    %c0_i32 = arith.constant 0 : i32
    %c0_i32_0 = arith.constant 0 : i32
    %c0_i32_1 = arith.constant 0 : i32
    return %c0_i32, %c0_i32_0 : i32, i32
  }
  func.func @transform_2(%arg0: i32) -> (i32, i32) {
    %c0_i32 = arith.constant 0 : i32
    %c0_i32_0 = arith.constant 0 : i32
    %c0_i32_1 = arith.constant 0 : i32
    return %c0_i32, %c0_i32_0 : i32, i32
  }
  func.func @transform_3(%arg0: i32) -> (i32, i32) {
    %c0_i32 = arith.constant 0 : i32
    %c0_i32_0 = arith.constant 0 : i32
    return %arg0, %c0_i32 : i32, i32
  }
}

</mosaic_0001>

<llo_original>
// kernel: discriminator_gan_forward.6
$region0: #{discriminator_gan_forward.6}
  #allocation0 [shape = 'u32[]', space=smem, size = 0x4, offset = 0x4, fixed_abs, tag = 'smem constant byte address 0x4 - core index']
  #allocation1 [shape = 'u32[144,128]{1,0:T(1,128)}', space=vmem, size = 0x12000, scoped, tag = 'internal scratch']
  %s0 = inlined_call_operand.vmem [shape: bf16[128,64], index: 0, kind: input, shape index: {}]
  %s1 = inlined_call_operand.vmem [shape: bf16[64,128], index: 1, kind: input, shape index: {}]
  %s2 = inlined_call_operand.vmem [shape: f32[1,128], index: 2, kind: input, shape index: {}]
  %s3 = inlined_call_operand.vmem [shape: bf16[128,128], index: 3, kind: output, shape index: {}]
  %s4 = sld [smem:[#allocation0]]
  $region22: #{discriminator_gan_forward.6} parent=0
    _
  %s6 = ssub.s32 1, %s4
  %s7 = scalar_select 0, %s6, %s4
  // Predicated region
  $region2: #{discriminator_gan_forward.6} parent=0 // pred_check
    _
  $region3: #{discriminator_gan_forward.6} parent=0 // pred_check_branch
    %9 = sbr.rel (0) target = $region5
  $region4: #{discriminator_gan_forward.6} parent=0 // pred_region
    _
  $region5: #{discriminator_gan_forward.6} parent=0 // pred_fallthru
    _
  // Predicated region
  $region6: #{discriminator_gan_forward.6} parent=0 // pred_check
    _
  $region7: #{discriminator_gan_forward.6} parent=0 // pred_check_branch
    %11 = sbr.rel (0) target = $region9
  $region8: #{discriminator_gan_forward.6} parent=0 // pred_region
    _
  $region9: #{discriminator_gan_forward.6} parent=0 // pred_fallthru
    _
  // Predicated region
  $region10: #{discriminator_gan_forward.6} parent=0 // pred_check
    _
  $region11: #{discriminator_gan_forward.6} parent=0 // pred_check_branch
    %13 = sbr.rel (0) target = $region13
  $region12: #{discriminator_gan_forward.6} parent=0 // pred_region
    _
  $region13: #{discriminator_gan_forward.6} parent=0 // pred_fallthru
    _
  %v15 = vld [vmem:[%s0] sm:$0xf]
  %v16 = vld [vmem:[%s0 + $0x4] sm:$0xf]
  %v17 = vld [vmem:[%s0 + $0x8] sm:$0xf]
  %v18 = vld [vmem:[%s0 + $0xc] sm:$0xf]
  %v19 = vld [vmem:[%s0 + $0x10] sm:$0xf]
  %v20 = vld [vmem:[%s0 + $0x14] sm:$0xf]
  %v21 = vld [vmem:[%s0 + $0x18] sm:$0xf]
  %v22 = vld [vmem:[%s0 + $0x1c] sm:$0xf]
  %v23 = vld [vmem:[%s0 + $0x20] sm:$0xf]
  %v24 = vld [vmem:[%s0 + $0x24] sm:$0xf]
  %v25 = vld [vmem:[%s0 + $0x28] sm:$0xf]
  %v26 = vld [vmem:[%s0 + $0x2c] sm:$0xf]
  %v27 = vld [vmem:[%s0 + $0x30] sm:$0xf]
  %v28 = vld [vmem:[%s0 + $0x34] sm:$0xf]
  %v29 = vld [vmem:[%s0 + $0x38] sm:$0xf]
  %v30 = vld [vmem:[%s0 + $0x3c] sm:$0xf]
  %v31 = vld [vmem:[%s1] sm:$0xf]
  %v32 = vld [vmem:[%s1 + $0x4] sm:$0xf]
  %v33 = vld [vmem:[%s1 + $0x8] sm:$0xf]
  %v34 = vld [vmem:[%s1 + $0xc] sm:$0xf]
  %v35 = vld [vmem:[%s1 + $0x10] sm:$0xf]
  %v36 = vld [vmem:[%s1 + $0x14] sm:$0xf]
  %v37 = vld [vmem:[%s1 + $0x18] sm:$0xf]
  %v38 = vld [vmem:[%s1 + $0x1c] sm:$0xf]
  %v39 = vld [vmem:[%s2] sm:$0x1]
  %v41 = vlaneseq
  %v42 = vshrl.u32 %v41, 7
  %v43 = vsub.s32 0, %v42
  %v44 = vrot.slane %v39, %v43
  %v62 = vunpack.c.l.b16 %v15
  %v63 = vunpack.c.l.b16 %v16
  %v64 = vunpack.c.l.b16 %v17
  %v65 = vunpack.c.l.b16 %v18
  %v66 = vunpack.c.l.b16 %v19
  %v67 = vunpack.c.l.b16 %v20
  %v68 = vunpack.c.l.b16 %v21
  %v69 = vunpack.c.l.b16 %v22
  %v70 = vunpack.c.l.b16 %v23
  %v71 = vunpack.c.l.b16 %v24
  %v72 = vunpack.c.l.b16 %v25
  %v73 = vunpack.c.l.b16 %v26
  %v74 = vunpack.c.l.b16 %v27
  %v75 = vunpack.c.l.b16 %v28
  %v76 = vunpack.c.l.b16 %v29
  %v77 = vunpack.c.l.b16 %v30
  %v78 = vpack.c.b16 %v63, %v62
  %v79 = vpack.c.b16 %v65, %v64
  %v80 = vpack.c.b16 %v67, %v66
  %v81 = vpack.c.b16 %v69, %v68
  %v82 = vpack.c.b16 %v71, %v70
  %v83 = vpack.c.b16 %v73, %v72
  %v84 = vpack.c.b16 %v75, %v74
  %v85 = vpack.c.b16 %v77, %v76
  %v94 = vunpack.c.l.b16 %v31
  %v95 = vunpack.c.l.b16 %v32
  %v96 = vunpack.c.l.b16 %v33
  %v97 = vunpack.c.l.b16 %v34
  %v98 = vunpack.c.l.b16 %v35
  %v99 = vunpack.c.l.b16 %v36
  %v100 = vunpack.c.l.b16 %v37
  %v101 = vunpack.c.l.b16 %v38
  %v102 = vpack.c.b16 %v95, %v94
  %v103 = vpack.c.b16 %v97, %v96
  %v104 = vpack.c.b16 %v99, %v98
  %v105 = vpack.c.b16 %v101, %v100
  %vm110 = vcmask 523264
  %v112 = vsel %vm110, %v78, 0
  %v115 = vsel %vm110, %v79, 0
  %v118 = vsel %vm110, %v80, 0
  %v121 = vsel %vm110, %v81, 0
  %v124 = vsel %vm110, %v82, 0
  %v127 = vsel %vm110, %v83, 0
  %v130 = vsel %vm110, %v84, 0
  %v133 = vsel %vm110, %v85, 0
  %135 = vmatprep.subr.bf16.mxu0 0
  %136 = vmatpush1.bf16.msra.mxu0 %v102
  %137 = vmatprep.subr.bf16.mxu0 0
  %138 = vmatpush1.bf16.msra.mxu0 %v103
  %139 = vmatprep.subr.bf16.mxu0 0
  %140 = vmatpush1.bf16.msra.mxu0 %v104
  %141 = vmatprep.subr.bf16.mxu0 0
  %142 = vmatpush1.bf16.msra.mxu0 %v105
  %143 = vmatprep.subr.bf16.mxu0 0
  %144 = vmatpush1.bf16.msra.mxu0 0
  %145 = vmatprep.subr.bf16.mxu0 0
  %146 = vmatpush1.bf16.msra.mxu0 0
  %147 = vmatprep.subr.bf16.mxu0 0
  %148 = vmatpush1.bf16.msra.mxu0 0
  %149 = vmatprep.subr.bf16.mxu0 0
  %150 = vmatpush1.bf16.msra.mxu0 0
  %151 = vmatprep.subr.bf16.mxu0 0
  %152 = vmatpush1.bf16.msra.mxu0 0
  %153 = vmatprep.subr.bf16.mxu0 0
  %154 = vmatpush1.bf16.msra.mxu0 0
  %155 = vmatprep.subr.bf16.mxu0 0
  %156 = vmatpush1.bf16.msra.mxu0 0
  %157 = vmatprep.subr.bf16.mxu0 0
  %158 = vmatpush1.bf16.msra.mxu0 0
  %159 = vmatprep.subr.bf16.mxu0 0
  %160 = vmatpush1.bf16.msra.mxu0 0
  %161 = vmatprep.subr.bf16.mxu0 0
  %162 = vmatpush1.bf16.msra.mxu0 0
  %163 = vmatprep.subr.bf16.mxu0 0
  %164 = vmatpush1.bf16.msra.mxu0 0
  %165 = vmatprep.subr.bf16.mxu0 0
  %166 = vmatpush1.bf16.msra.mxu0 0
  %167 = vmatprep.mubr.bf16.mxu0 0
  %168 = vmatmul.mubr.bf16.gmra.mrb[0].mxu0 %v112
  %v169 = vpop.f32.mrb[0].mxu0
  %v170 = vadd.f32 %v44, %v169
  %v171 = vpop.f32.mrb[0].mxu0
  %v172 = vpop.f32.mrb[0].mxu0
  %v173 = vadd.f32 %v44, %v172
  %v174 = vpop.f32.mrb[0].mxu0
  %175 = vmatprep.mubr.bf16.mxu0 0
  %176 = vmatmul.mubr.bf16.gmra.mrb[0].mxu0 %v115
  %v177 = vpop.f32.mrb[0].mxu0
  %v178 = vadd.f32 %v44, %v177
  %v179 = vpop.f32.mrb[0].mxu0
  %v180 = vpop.f32.mrb[0].mxu0
  %v181 = vadd.f32 %v44, %v180
  %v182 = vpop.f32.mrb[0].mxu0
  %183 = vmatprep.mubr.bf16.mxu0 0
  %184 = vmatmul.mubr.bf16.gmra.mrb[0].mxu0 %v118
  %v185 = vpop.f32.mrb[0].mxu0
  %v186 = vadd.f32 %v44, %v185
  %v187 = vpop.f32.mrb[0].mxu0
  %v188 = vpop.f32.mrb[0].mxu0
  %v189 = vadd.f32 %v44, %v188
  %v190 = vpop.f32.mrb[0].mxu0
  %191 = vmatprep.mubr.bf16.mxu0 0
  %192 = vmatmul.mubr.bf16.gmra.mrb[0].mxu0 %v121
  %v193 = vpop.f32.mrb[0].mxu0
  %v194 = vadd.f32 %v44, %v193
  %v195 = vpop.f32.mrb[0].mxu0
  %v196 = vpop.f32.mrb[0].mxu0
  %v197 = vadd.f32 %v44, %v196
  %v198 = vpop.f32.mrb[0].mxu0
  %199 = vmatprep.mubr.bf16.mxu0 0
  %200 = vmatmul.mubr.bf16.gmra.mrb[0].mxu0 %v124
  %v201 = vpop.f32.mrb[0].mxu0
  %v202 = vadd.f32 %v44, %v201
  %v203 = vpop.f32.mrb[0].mxu0
  %v204 = vpop.f32.mrb[0].mxu0
  %v205 = vadd.f32 %v44, %v204
  %v206 = vpop.f32.mrb[0].mxu0
  %207 = vmatprep.mubr.bf16.mxu0 0
  %208 = vmatmul.mubr.bf16.gmra.mrb[0].mxu0 %v127
  %v209 = vpop.f32.mrb[0].mxu0
  %v210 = vadd.f32 %v44, %v209
  %v211 = vpop.f32.mrb[0].mxu0
  %v212 = vpop.f32.mrb[0].mxu0
  %v213 = vadd.f32 %v44, %v212
  %v214 = vpop.f32.mrb[0].mxu0
  %215 = vmatprep.mubr.bf16.mxu0 0
  %216 = vmatmul.mubr.bf16.gmra.mrb[0].mxu0 %v130
  %v217 = vpop.f32.mrb[0].mxu0
  %v218 = vadd.f32 %v44, %v217
  %v219 = vpop.f32.mrb[0].mxu0
  %v220 = vpop.f32.mrb[0].mxu0
  %v221 = vadd.f32 %v44, %v220
  %v222 = vpop.f32.mrb[0].mxu0
  %223 = vmatprep.mubr.bf16.mxu0 0
  %224 = vmatmul.mubr.bf16.gmra.mrb[0].mxu0 %v133
  %v225 = vpop.f32.mrb[0].mxu0
  %v226 = vadd.f32 %v44, %v225
  %v227 = vpop.f32.mrb[0].mxu0
  %v228 = vpop.f32.mrb[0].mxu0
  %v229 = vadd.f32 %v44, %v228
  %v230 = vpop.f32.mrb[0].mxu0
  %231 = vdwg.mxu0
  %vm232 = vcmp.gt.f32.partialorder %v170, 0.0
  %vm233 = vcmp.gt.f32.partialorder %v173, 0.0
  %vm234 = vcmp.gt.f32.partialorder %v178, 0.0
  %vm235 = vcmp.gt.f32.partialorder %v181, 0.0
  %vm236 = vcmp.gt.f32.partialorder %v186, 0.0
  %vm237 = vcmp.gt.f32.partialorder %v189, 0.0
  %vm238 = vcmp.gt.f32.partialorder %v194, 0.0
  %vm239 = vcmp.gt.f32.partialorder %v197, 0.0
  %vm240 = vcmp.gt.f32.partialorder %v202, 0.0
  %vm241 = vcmp.gt.f32.partialorder %v205, 0.0
  %vm242 = vcmp.gt.f32.partialorder %v210, 0.0
  %vm243 = vcmp.gt.f32.partialorder %v213, 0.0
  %vm244 = vcmp.gt.f32.partialorder %v218, 0.0
  %vm245 = vcmp.gt.f32.partialorder %v221, 0.0
  %vm246 = vcmp.gt.f32.partialorder %v226, 0.0
  %vm247 = vcmp.gt.f32.partialorder %v229, 0.0
  %v248 = vmul.f32 %v170, 0.2
  %v249 = vmul.f32 %v173, 0.2
  %v250 = vmul.f32 %v178, 0.2
  %v251 = vmul.f32 %v181, 0.2
  %v252 = vmul.f32 %v186, 0.2
  %v253 = vmul.f32 %v189, 0.2
  %v254 = vmul.f32 %v194, 0.2
  %v255 = vmul.f32 %v197, 0.2
  %v256 = vmul.f32 %v202, 0.2
  %v257 = vmul.f32 %v205, 0.2
  %v258 = vmul.f32 %v210, 0.2
  %v259 = vmul.f32 %v213, 0.2
  %v260 = vmul.f32 %v218, 0.2
  %v261 = vmul.f32 %v221, 0.2
  %v262 = vmul.f32 %v226, 0.2
  %v263 = vmul.f32 %v229, 0.2
  %v264 = vsel %vm232, %v170, %v248
  %v265 = vsel %vm233, %v173, %v249
  %v266 = vsel %vm234, %v178, %v250
  %v267 = vsel %vm235, %v181, %v251
  %v268 = vsel %vm236, %v186, %v252
  %v269 = vsel %vm237, %v189, %v253
  %v270 = vsel %vm238, %v194, %v254
  %v271 = vsel %vm239, %v197, %v255
  %v272 = vsel %vm240, %v202, %v256
  %v273 = vsel %vm241, %v205, %v257
  %v274 = vsel %vm242, %v210, %v258
  %v275 = vsel %vm243, %v213, %v259
  %v276 = vsel %vm244, %v218, %v260
  %v277 = vsel %vm245, %v221, %v261
  %v278 = vsel %vm246, %v226, %v262
  %v279 = vsel %vm247, %v229, %v263
  %v280 = vpack.c.bf16 %v265, %v264
  %v281 = vpack.c.bf16 %v267, %v266
  %v282 = vpack.c.bf16 %v269, %v268
  %v283 = vpack.c.bf16 %v271, %v270
  %v284 = vpack.c.bf16 %v273, %v272
  %v285 = vpack.c.bf16 %v275, %v274
  %v286 = vpack.c.bf16 %v277, %v276
  %v287 = vpack.c.bf16 %v279, %v278
  %v296 = vunpack.c.l.b16 %v280
  %v297 = vunpack.c.h.b16 %v280
  %v298 = vunpack.c.l.b16 %v281
  %v299 = vunpack.c.h.b16 %v281
  %v300 = vunpack.c.l.b16 %v282
  %v301 = vunpack.c.h.b16 %v282
  %v302 = vunpack.c.l.b16 %v283
  %v303 = vunpack.c.h.b16 %v283
  %v304 = vunpack.c.l.b16 %v284
  %v305 = vunpack.c.h.b16 %v284
  %v306 = vunpack.c.l.b16 %v285
  %v307 = vunpack.c.h.b16 %v285
  %v308 = vunpack.c.l.b16 %v286
  %v309 = vunpack.c.h.b16 %v286
  %v310 = vunpack.c.l.b16 %v287
  %v311 = vunpack.c.h.b16 %v287
  %v312 = vpack.c.b16 %v296, %v296
  %v313 = vpack.c.b16 %v297, %v297
  %v314 = vpack.c.b16 %v298, %v298
  %v315 = vpack.c.b16 %v299, %v299
  %v316 = vpack.c.b16 %v300, %v300
  %v317 = vpack.c.b16 %v301, %v301
  %v318 = vpack.c.b16 %v302, %v302
  %v319 = vpack.c.b16 %v303, %v303
  %v320 = vpack.c.b16 %v304, %v304
  %v321 = vpack.c.b16 %v305, %v305
  %v322 = vpack.c.b16 %v306, %v306
  %v323 = vpack.c.b16 %v307, %v307
  %v324 = vpack.c.b16 %v308, %v308
  %v325 = vpack.c.b16 %v309, %v309
  %v326 = vpack.c.b16 %v310, %v310
  %v327 = vpack.c.b16 %v311, %v311
  %344 = vst [vmem:[%s3] sm:$0xf] %v312
  %345 = vst [vmem:[%s3 + $0x4] sm:$0xf] %v313
  %346 = vst [vmem:[%s3 + $0x8] sm:$0xf] %v314
  %347 = vst [vmem:[%s3 + $0xc] sm:$0xf] %v315
  %348 = vst [vmem:[%s3 + $0x10] sm:$0xf] %v316
  %349 = vst [vmem:[%s3 + $0x14] sm:$0xf] %v317
  %350 = vst [vmem:[%s3 + $0x18] sm:$0xf] %v318
  %351 = vst [vmem:[%s3 + $0x1c] sm:$0xf] %v319
  %352 = vst [vmem:[%s3 + $0x20] sm:$0xf] %v320
  %353 = vst [vmem:[%s3 + $0x24] sm:$0xf] %v321
  %354 = vst [vmem:[%s3 + $0x28] sm:$0xf] %v322
  %355 = vst [vmem:[%s3 + $0x2c] sm:$0xf] %v323
  %356 = vst [vmem:[%s3 + $0x30] sm:$0xf] %v324
  %357 = vst [vmem:[%s3 + $0x34] sm:$0xf] %v325
  %358 = vst [vmem:[%s3 + $0x38] sm:$0xf] %v326
  %359 = vst [vmem:[%s3 + $0x3c] sm:$0xf] %v327
  // Predicated region
  $region14: #{discriminator_gan_forward.6} parent=0 // pred_check
    _
  $region15: #{discriminator_gan_forward.6} parent=0 // pred_check_branch
    %361 = sbr.rel (0) target = $region17
  $region16: #{discriminator_gan_forward.6} parent=0 // pred_region
    _
  $region17: #{discriminator_gan_forward.6} parent=0 // pred_fallthru
    _
  // Predicated region
  $region18: #{discriminator_gan_forward.6} parent=0 // pred_check
    _
  $region19: #{discriminator_gan_forward.6} parent=0 // pred_check_branch
    %363 = sbr.rel (0) target = $region21
  $region20: #{discriminator_gan_forward.6} parent=0 // pred_region
    _
  $region21: #{discriminator_gan_forward.6} parent=0 // pred_fallthru
    _

// kernel: discriminator_gan_forward.8
$region0: #{discriminator_gan_forward.8}
  #allocation0 [shape = 'u32[]', space=smem, size = 0x4, offset = 0x4, fixed_abs, tag = 'smem constant byte address 0x4 - core index']
  #allocation1 [shape = 'u32[144,128]{1,0:T(1,128)}', space=vmem, size = 0x12000, scoped, tag = 'internal scratch']
  %s0 = inlined_call_operand.vmem [shape: f32[32,128], index: 0, kind: input, shape index: {}]
  %s1 = inlined_call_operand.vmem [shape: f32[1,128], index: 1, kind: input, shape index: {}]
  %s2 = inlined_call_operand.vmem [shape: f32[1,128], index: 2, kind: input, shape index: {}]
  %s3 = inlined_call_operand.vmem [shape: bf16[32,128], index: 3, kind: output, shape index: {}]
  %s4 = sld [smem:[#allocation0]]
  $region22: #{discriminator_gan_forward.8} parent=0
    _
  %s6 = ssub.s32 1, %s4
  %s7 = scalar_select 0, %s6, %s4
  // Predicated region
  $region2: #{discriminator_gan_forward.8} parent=0 // pred_check
    _
  $region3: #{discriminator_gan_forward.8} parent=0 // pred_check_branch
    %9 = sbr.rel (0) target = $region5
  $region4: #{discriminator_gan_forward.8} parent=0 // pred_region
    _
  $region5: #{discriminator_gan_forward.8} parent=0 // pred_fallthru
    _
  // Predicated region
  $region6: #{discriminator_gan_forward.8} parent=0 // pred_check
    _
  $region7: #{discriminator_gan_forward.8} parent=0 // pred_check_branch
    %11 = sbr.rel (0) target = $region9
  $region8: #{discriminator_gan_forward.8} parent=0 // pred_region
    _
  $region9: #{discriminator_gan_forward.8} parent=0 // pred_fallthru
    _
  // Predicated region
  $region10: #{discriminator_gan_forward.8} parent=0 // pred_check
    _
  $region11: #{discriminator_gan_forward.8} parent=0 // pred_check_branch
    %13 = sbr.rel (0) target = $region13
  $region12: #{discriminator_gan_forward.8} parent=0 // pred_region
    _
  $region13: #{discriminator_gan_forward.8} parent=0 // pred_fallthru
    _
  %v14 = vld [vmem:[%s0] sm:$0xff]
  %v15 = vld [vmem:[%s0 + $0x8] sm:$0xff]
  %v16 = vld [vmem:[%s0 + $0x10] sm:$0xff]
  %v17 = vld [vmem:[%s0 + $0x18] sm:$0xff]
  %v18 = vld [vmem:[%s1] sm:$0x1]
  %v20 = vlaneseq
  %v21 = vshrl.u32 %v20, 7
  %v22 = vsub.s32 0, %v21
  %v23 = vrot.slane %v18, %v22
  %v25 = vmul.f32 %v14, %v23
  %v26 = vmul.f32 %v15, %v23
  %v27 = vmul.f32 %v16, %v23
  %v28 = vmul.f32 %v17, %v23
  %v29 = vld [vmem:[%s2] sm:$0x1]
  %v31 = vlaneseq
  %v32 = vshrl.u32 %v31, 7
  %v33 = vsub.s32 0, %v32
  %v34 = vrot.slane %v29, %v33
  %v36 = vadd.f32 %v25, %v34
  %v37 = vadd.f32 %v26, %v34
  %v38 = vadd.f32 %v27, %v34
  %v39 = vadd.f32 %v28, %v34
  %vm40 = vcmp.gt.f32.partialorder %v36, 0.0
  %vm41 = vcmp.gt.f32.partialorder %v37, 0.0
  %vm42 = vcmp.gt.f32.partialorder %v38, 0.0
  %vm43 = vcmp.gt.f32.partialorder %v39, 0.0
  %v44 = vmul.f32 %v36, 0.2
  %v45 = vmul.f32 %v37, 0.2
  %v46 = vmul.f32 %v38, 0.2
  %v47 = vmul.f32 %v39, 0.2
  %v48 = vsel %vm40, %v36, %v44
  %v49 = vsel %vm41, %v37, %v45
  %v50 = vsel %vm42, %v38, %v46
  %v51 = vsel %vm43, %v39, %v47
  %v52 = vpack.c.bf16 %v49, %v48
  %v53 = vpack.c.bf16 %v51, %v50
  %v56 = vunpack.c.l.b16 %v52
  %v57 = vunpack.c.h.b16 %v52
  %v58 = vunpack.c.l.b16 %v53
  %v59 = vunpack.c.h.b16 %v53
  %v60 = vpack.c.b16 %v56, %v56
  %v61 = vpack.c.b16 %v57, %v57
  %v62 = vpack.c.b16 %v58, %v58
  %v63 = vpack.c.b16 %v59, %v59
  %68 = vst [vmem:[%s3] sm:$0xf] %v60
  %69 = vst [vmem:[%s3 + $0x4] sm:$0xf] %v61
  %70 = vst [vmem:[%s3 + $0x8] sm:$0xf] %v62
  %71 = vst [vmem:[%s3 + $0xc] sm:$0xf] %v63
  // Predicated region
  $region14: #{discriminator_gan_forward.8} parent=0 // pred_check
    _
  $region15: #{discriminator_gan_forward.8} parent=0 // pred_check_branch
    %73 = sbr.rel (0) target = $region17
  $region16: #{discriminator_gan_forward.8} parent=0 // pred_region
    _
  $region17: #{discriminator_gan_forward.8} parent=0 // pred_fallthru
    _
  // Predicated region
  $region18: #{discriminator_gan_forward.8} parent=0 // pred_check
    _
  $region19: #{discriminator_gan_forward.8} parent=0 // pred_check_branch
    %75 = sbr.rel (0) target = $region21
  $region20: #{discriminator_gan_forward.8} parent=0 // pred_region
    _
  $region21: #{discriminator_gan_forward.8} parent=0 // pred_fallthru
    _

// kernel: discriminator_gan_forward.7
$region0: #{discriminator_gan_forward.7}
  #allocation0 [shape = 'u32[]', space=smem, size = 0x4, offset = 0x4, fixed_abs, tag = 'smem constant byte address 0x4 - core index']
  #allocation1 [shape = 'u32[144,128]{1,0:T(1,128)}', space=vmem, size = 0x12000, scoped, tag = 'internal scratch']
  %s0 = inlined_call_operand.vmem [shape: bf16[32,2048], index: 0, kind: input, shape index: {}]
  %s1 = inlined_call_operand.vmem [shape: bf16[2048,128], index: 1, kind: input, shape index: {}]
  %s2 = inlined_call_operand.vmem [shape: f32[1,128], index: 2, kind: input, shape index: {}]
  %s3 = inlined_call_operand.vmem [shape: f32[32,128], index: 3, kind: output, shape index: {0}]
  %s4 = inlined_call_operand.vmem [shape: f32[1,128], index: 4, kind: output, shape index: {1}]
  %s5 = inlined_call_operand.vmem [shape: f32[1,128], index: 5, kind: output, shape index: {2}]
  %6 = xla_tuple %s3, %s4, %s5
  %s7 = sld [smem:[#allocation0]]
  $region42: #{discriminator_gan_forward.7} parent=0
    _
  %s9 = ssub.s32 1, %s7
  %s10 = scalar_select 0, %s9, %s7
  // Predicated region
  $region2: #{discriminator_gan_forward.7} parent=0 // pred_check
    _
  $region3: #{discriminator_gan_forward.7} parent=0 // pred_check_branch
    %12 = sbr.rel (0) target = $region5
  $region4: #{discriminator_gan_forward.7} parent=0 // pred_region
    _
  $region5: #{discriminator_gan_forward.7} parent=0 // pred_fallthru
    _
  // Predicated region
  $region6: #{discriminator_gan_forward.7} parent=0 // pred_check
    _
  $region7: #{discriminator_gan_forward.7} parent=0 // pred_check_branch
    %14 = sbr.rel (0) target = $region9
  $region8: #{discriminator_gan_forward.7} parent=0 // pred_region
    _
  $region9: #{discriminator_gan_forward.7} parent=0 // pred_fallthru
    _
  // Predicated region
  $region10: #{discriminator_gan_forward.7} parent=0 // pred_check
    _
  $region11: #{discriminator_gan_forward.7} parent=0 // pred_check_branch
    %16 = sbr.rel (0) target = $region13
  $region12: #{discriminator_gan_forward.7} parent=0 // pred_region
    _
  $region13: #{discriminator_gan_forward.7} parent=0 // pred_fallthru
    _
  %p18 = scmp.eq.s32.totalorder 0, 0
  // Predicated region
  $region14: #{discriminator_gan_forward.7} parent=0 // pred_check
    %p19 = pneg %p18
  $region15: #{discriminator_gan_forward.7} parent=0 // pred_check_branch
    %21 = sbr.rel (%p19) target = $region17
  $region16: #{discriminator_gan_forward.7} parent=0 // pred_region
    %22 = vst [vmem:[%s4] sm:$0x1] 0.0
    %23 = vst [vmem:[%s5] sm:$0x1] 0.0
  $region17: #{discriminator_gan_forward.7} parent=0 // pred_fallthru
    _
  %v24 = vld [vmem:[%s0] sm:$0xff]
  %v25 = vld [vmem:[%s0 + $0x8] sm:$0xff]
  %v26 = vld [vmem:[%s0 + $0x10] sm:$0xff]
  %v27 = vld [vmem:[%s0 + $0x18] sm:$0xff]
  %v28 = vld [vmem:[%s0 + $0x20] sm:$0xff]
  %v29 = vld [vmem:[%s0 + $0x28] sm:$0xff]
  %v30 = vld [vmem:[%s0 + $0x30] sm:$0xff]
  %v31 = vld [vmem:[%s0 + $0x38] sm:$0xff]
  %v32 = vld [vmem:[%s0 + $0x40] sm:$0xff]
  %v33 = vld [vmem:[%s0 + $0x48] sm:$0xff]
  %v34 = vld [vmem:[%s0 + $0x50] sm:$0xff]
  %v35 = vld [vmem:[%s0 + $0x58] sm:$0xff]
  %v36 = vld [vmem:[%s0 + $0x60] sm:$0xff]
  %v37 = vld [vmem:[%s0 + $0x68] sm:$0xff]
  %v38 = vld [vmem:[%s0 + $0x70] sm:$0xff]
  %v39 = vld [vmem:[%s0 + $0x78] sm:$0xff]
  %v40 = vld [vmem:[%s0 + $0x80] sm:$0xff]
  %v41 = vld [vmem:[%s0 + $0x88] sm:$0xff]
  %v42 = vld [vmem:[%s0 + $0x90] sm:$0xff]
  %v43 = vld [vmem:[%s0 + $0x98] sm:$0xff]
  %v44 = vld [vmem:[%s0 + $0xa0] sm:$0xff]
  %v45 = vld [vmem:[%s0 + $0xa8] sm:$0xff]
  %v46 = vld [vmem:[%s0 + $0xb0] sm:$0xff]
  %v47 = vld [vmem:[%s0 + $0xb8] sm:$0xff]
  %v48 = vld [vmem:[%s0 + $0xc0] sm:$0xff]
  %v49 = vld [vmem:[%s0 + $0xc8] sm:$0xff]
  %v50 = vld [vmem:[%s0 + $0xd0] sm:$0xff]
  %v51 = vld [vmem:[%s0 + $0xd8] sm:$0xff]
  %v52 = vld [vmem:[%s0 + $0xe0] sm:$0xff]
  %v53 = vld [vmem:[%s0 + $0xe8] sm:$0xff]
  %v54 = vld [vmem:[%s0 + $0xf0] sm:$0xff]
  %v55 = vld [vmem:[%s0 + $0xf8] sm:$0xff]
  %v56 = vld [vmem:[%s1] sm:$0xf]
  %v57 = vld [vmem:[%s1 + $0x4] sm:$0xf]
  %v58 = vld [vmem:[%s1 + $0x8] sm:$0xf]
  %v59 = vld [vmem:[%s1 + $0xc] sm:$0xf]
  %v60 = vld [vmem:[%s1 + $0x10] sm:$0xf]
  %v61 = vld [vmem:[%s1 + $0x14] sm:$0xf]
  %v62 = vld [vmem:[%s1 + $0x18] sm:$0xf]
  %v63 = vld [vmem:[%s1 + $0x1c] sm:$0xf]
  %v64 = vld [vmem:[%s1 + $0x20] sm:$0xf]
  %v65 = vld [vmem:[%s1 + $0x24] sm:$0xf]
  %v66 = vld [vmem:[%s1 + $0x28] sm:$0xf]
  %v67 = vld [vmem:[%s1 + $0x2c] sm:$0xf]
  %v68 = vld [vmem:[%s1 + $0x30] sm:$0xf]
  %v69 = vld [vmem:[%s1 + $0x34] sm:$0xf]
  %v70 = vld [vmem:[%s1 + $0x38] sm:$0xf]
  %v71 = vld [vmem:[%s1 + $0x3c] sm:$0xf]
  %v72 = vld [vmem:[%s1 + $0x40] sm:$0xf]
  %v73 = vld [vmem:[%s1 + $0x44] sm:$0xf]
  %v74 = vld [vmem:[%s1 + $0x48] sm:$0xf]
  %v75 = vld [vmem:[%s1 + $0x4c] sm:$0xf]
  %v76 = vld [vmem:[%s1 + $0x50] sm:$0xf]
  %v77 = vld [vmem:[%s1 + $0x54] sm:$0xf]
  %v78 = vld [vmem:[%s1 + $0x58] sm:$0xf]
  %v79 = vld [vmem:[%s1 + $0x5c] sm:$0xf]
  %v80 = vld [vmem:[%s1 + $0x60] sm:$0xf]
  %v81 = vld [vmem:[%s1 + $0x64] sm:$0xf]
  %v82 = vld [vmem:[%s1 + $0x68] sm:$0xf]
  %v83 = vld [vmem:[%s1 + $0x6c] sm:$0xf]
  %v84 = vld [vmem:[%s1 + $0x70] sm:$0xf]
  %v85 = vld [vmem:[%s1 + $0x74] sm:$0xf]
  %v86 = vld [vmem:[%s1 + $0x78] sm:$0xf]
  %v87 = vld [vmem:[%s1 + $0x7c] sm:$0xf]
  %v88 = vld [vmem:[%s1 + $0x80] sm:$0xf]
  %v89 = vld [vmem:[%s1 + $0x84] sm:$0xf]
  %v90 = vld [vmem:[%s1 + $0x88] sm:$0xf]
  %v91 = vld [vmem:[%s1 + $0x8c] sm:$0xf]
  %v92 = vld [vmem:[%s1 + $0x90] sm:$0xf]
  %v93 = vld [vmem:[%s1 + $0x94] sm:$0xf]
  %v94 = vld [vmem:[%s1 + $0x98] sm:$0xf]
  %v95 = vld [vmem:[%s1 + $0x9c] sm:$0xf]
  %v96 = vld [vmem:[%s1 + $0xa0] sm:$0xf]
  %v97 = vld [vmem:[%s1 + $0xa4] sm:$0xf]
  %v98 = vld [vmem:[%s1 + $0xa8] sm:$0xf]
  %v99 = vld [vmem:[%s1 + $0xac] sm:$0xf]
  %v100 = vld [vmem:[%s1 + $0xb0] sm:$0xf]
  %v101 = vld [vmem:[%s1 + $0xb4] sm:$0xf]
  %v102 = vld [vmem:[%s1 + $0xb8] sm:$0xf]
  %v103 = vld [vmem:[%s1 + $0xbc] sm:$0xf]
  %v104 = vld [vmem:[%s1 + $0xc0] sm:$0xf]
  %v105 = vld [vmem:[%s1 + $0xc4] sm:$0xf]
  %v106 = vld [vmem:[%s1 + $0xc8] sm:$0xf]
  %v107 = vld [vmem:[%s1 + $0xcc] sm:$0xf]
  %v108 = vld [vmem:[%s1 + $0xd0] sm:$0xf]
  %v109 = vld [vmem:[%s1 + $0xd4] sm:$0xf]
  %v110 = vld [vmem:[%s1 + $0xd8] sm:$0xf]
  %v111 = vld [vmem:[%s1 + $0xdc] sm:$0xf]
  %v112 = vld [vmem:[%s1 + $0xe0] sm:$0xf]
  %v113 = vld [vmem:[%s1 + $0xe4] sm:$0xf]
  %v114 = vld [vmem:[%s1 + $0xe8] sm:$0xf]
  %v115 = vld [vmem:[%s1 + $0xec] sm:$0xf]
  %v116 = vld [vmem:[%s1 + $0xf0] sm:$0xf]
  %v117 = vld [vmem:[%s1 + $0xf4] sm:$0xf]
  %v118 = vld [vmem:[%s1 + $0xf8] sm:$0xf]
  %v119 = vld [vmem:[%s1 + $0xfc] sm:$0xf]
  %v120 = vld [vmem:[%s1 + $0x100] sm:$0xf]
  %v121 = vld [vmem:[%s1 + $0x104] sm:$0xf]
  %v122 = vld [vmem:[%s1 + $0x108] sm:$0xf]
  %v123 = vld [vmem:[%s1 + $0x10c] sm:$0xf]
  %v124 = vld [vmem:[%s1 + $0x110] sm:$0xf]
  %v125 = vld [vmem:[%s1 + $0x114] sm:$0xf]
  %v126 = vld [vmem:[%s1 + $0x118] sm:$0xf]
  %v127 = vld [vmem:[%s1 + $0x11c] sm:$0xf]
  %v128 = vld [vmem:[%s1 + $0x120] sm:$0xf]
  %v129 = vld [vmem:[%s1 + $0x124] sm:$0xf]
  %v130 = vld [vmem:[%s1 + $0x128] sm:$0xf]
  %v131 = vld [vmem:[%s1 + $0x12c] sm:$0xf]
  %v132 = vld [vmem:[%s1 + $0x130] sm:$0xf]
  %v133 = vld [vmem:[%s1 + $0x134] sm:$0xf]
  %v134 = vld [vmem:[%s1 + $0x138] sm:$0xf]
  %v135 = vld [vmem:[%s1 + $0x13c] sm:$0xf]
  %v136 = vld [vmem:[%s1 + $0x140] sm:$0xf]
  %v137 = vld [vmem:[%s1 + $0x144] sm:$0xf]
  %v138 = vld [vmem:[%s1 + $0x148] sm:$0xf]
  %v139 = vld [vmem:[%s1 + $0x14c] sm:$0xf]
  %v140 = vld [vmem:[%s1 + $0x150] sm:$0xf]
  %v141 = vld [vmem:[%s1 + $0x154] sm:$0xf]
  %v142 = vld [vmem:[%s1 + $0x158] sm:$0xf]
  %v143 = vld [vmem:[%s1 + $0x15c] sm:$0xf]
  %v144 = vld [vmem:[%s1 + $0x160] sm:$0xf]
  %v145 = vld [vmem:[%s1 + $0x164] sm:$0xf]
  %v146 = vld [vmem:[%s1 + $0x168] sm:$0xf]
  %v147 = vld [vmem:[%s1 + $0x16c] sm:$0xf]
  %v148 = vld [vmem:[%s1 + $0x170] sm:$0xf]
  %v149 = vld [vmem:[%s1 + $0x174] sm:$0xf]
  %v150 = vld [vmem:[%s1 + $0x178] sm:$0xf]
  %v151 = vld [vmem:[%s1 + $0x17c] sm:$0xf]
  %v152 = vld [vmem:[%s1 + $0x180] sm:$0xf]
  %v153 = vld [vmem:[%s1 + $0x184] sm:$0xf]
  %v154 = vld [vmem:[%s1 + $0x188] sm:$0xf]
  %v155 = vld [vmem:[%s1 + $0x18c] sm:$0xf]
  %v156 = vld [vmem:[%s1 + $0x190] sm:$0xf]
  %v157 = vld [vmem:[%s1 + $0x194] sm:$0xf]
  %v158 = vld [vmem:[%s1 + $0x198] sm:$0xf]
  %v159 = vld [vmem:[%s1 + $0x19c] sm:$0xf]
  %v160 = vld [vmem:[%s1 + $0x1a0] sm:$0xf]
  %v161 = vld [vmem:[%s1 + $0x1a4] sm:$0xf]
  %v162 = vld [vmem:[%s1 + $0x1a8] sm:$0xf]
  %v163 = vld [vmem:[%s1 + $0x1ac] sm:$0xf]
  %v164 = vld [vmem:[%s1 + $0x1b0] sm:$0xf]
  %v165 = vld [vmem:[%s1 + $0x1b4] sm:$0xf]
  %v166 = vld [vmem:[%s1 + $0x1b8] sm:$0xf]
  %v167 = vld [vmem:[%s1 + $0x1bc] sm:$0xf]
  %v168 = vld [vmem:[%s1 + $0x1c0] sm:$0xf]
  %v169 = vld [vmem:[%s1 + $0x1c4] sm:$0xf]
  %v170 = vld [vmem:[%s1 + $0x1c8] sm:$0xf]
  %v171 = vld [vmem:[%s1 + $0x1cc] sm:$0xf]
  %v172 = vld [vmem:[%s1 + $0x1d0] sm:$0xf]
  %v173 = vld [vmem:[%s1 + $0x1d4] sm:$0xf]
  %v174 = vld [vmem:[%s1 + $0x1d8] sm:$0xf]
  %v175 = vld [vmem:[%s1 + $0x1dc] sm:$0xf]
  %v176 = vld [vmem:[%s1 + $0x1e0] sm:$0xf]
  %v177 = vld [vmem:[%s1 + $0x1e4] sm:$0xf]
  %v178 = vld [vmem:[%s1 + $0x1e8] sm:$0xf]
  %v179 = vld [vmem:[%s1 + $0x1ec] sm:$0xf]
  %v180 = vld [vmem:[%s1 + $0x1f0] sm:$0xf]
  %v181 = vld [vmem:[%s1 + $0x1f4] sm:$0xf]
  %v182 = vld [vmem:[%s1 + $0x1f8] sm:$0xf]
  %v183 = vld [vmem:[%s1 + $0x1fc] sm:$0xf]
  %v184 = vld [vmem:[%s1 + $0x200] sm:$0xf]
  %v185 = vld [vmem:[%s1 + $0x204] sm:$0xf]
  %v186 = vld [vmem:[%s1 + $0x208] sm:$0xf]
  %v187 = vld [vmem:[%s1 + $0x20c] sm:$0xf]
  %v188 = vld [vmem:[%s1 + $0x210] sm:$0xf]
  %v189 = vld [vmem:[%s1 + $0x214] sm:$0xf]
  %v190 = vld [vmem:[%s1 + $0x218] sm:$0xf]
  %v191 = vld [vmem:[%s1 + $0x21c] sm:$0xf]
  %v192 = vld [vmem:[%s1 + $0x220] sm:$0xf]
  %v193 = vld [vmem:[%s1 + $0x224] sm:$0xf]
  %v194 = vld [vmem:[%s1 + $0x228] sm:$0xf]
  %v195 = vld [vmem:[%s1 + $0x22c] sm:$0xf]
  %v196 = vld [vmem:[%s1 + $0x230] sm:$0xf]
  %v197 = vld [vmem:[%s1 + $0x234] sm:$0xf]
  %v198 = vld [vmem:[%s1 + $0x238] sm:$0xf]
  %v199 = vld [vmem:[%s1 + $0x23c] sm:$0xf]
  %v200 = vld [vmem:[%s1 + $0x240] sm:$0xf]
  %v201 = vld [vmem:[%s1 + $0x244] sm:$0xf]
  %v202 = vld [vmem:[%s1 + $0x248] sm:$0xf]
  %v203 = vld [vmem:[%s1 + $0x24c] sm:$0xf]
  %v204 = vld [vmem:[%s1 + $0x250] sm:$0xf]
  %v205 = vld [vmem:[%s1 + $0x254] sm:$0xf]
  %v206 = vld [vmem:[%s1 + $0x258] sm:$0xf]
  %v207 = vld [vmem:[%s1 + $0x25c] sm:$0xf]
  %v208 = vld [vmem:[%s1 + $0x260] sm:$0xf]
  %v209 = vld [vmem:[%s1 + $0x264] sm:$0xf]
  %v210 = vld [vmem:[%s1 + $0x268] sm:$0xf]
  %v211 = vld [vmem:[%s1 + $0x26c] sm:$0xf]
  %v212 = vld [vmem:[%s1 + $0x270] sm:$0xf]
  %v213 = vld [vmem:[%s1 + $0x274] sm:$0xf]
  %v214 = vld [vmem:[%s1 + $0x278] sm:$0xf]
  %v215 = vld [vmem:[%s1 + $0x27c] sm:$0xf]
  %v216 = vld [vmem:[%s1 + $0x280] sm:$0xf]
  %v217 = vld [vmem:[%s1 + $0x284] sm:$0xf]
  %v218 = vld [vmem:[%s1 + $0x288] sm:$0xf]
  %v219 = vld [vmem:[%s1 + $0x28c] sm:$0xf]
  %v220 = vld [vmem:[%s1 + $0x290] sm:$0xf]
  %v221 = vld [vmem:[%s1 + $0x294] sm:$0xf]
  %v222 = vld [vmem:[%s1 + $0x298] sm:$0xf]
  %v223 = vld [vmem:[%s1 + $0x29c] sm:$0xf]
  %v224 = vld [vmem:[%s1 + $0x2a0] sm:$0xf]
  %v225 = vld [vmem:[%s1 + $0x2a4] sm:$0xf]
  %v226 = vld [vmem:[%s1 + $0x2a8] sm:$0xf]
  %v227 = vld [vmem:[%s1 + $0x2ac] sm:$0xf]
  %v228 = vld [vmem:[%s1 + $0x2b0] sm:$0xf]
  %v229 = vld [vmem:[%s1 + $0x2b4] sm:$0xf]
  %v230 = vld [vmem:[%s1 + $0x2b8] sm:$0xf]
  %v231 = vld [vmem:[%s1 + $0x2bc] sm:$0xf]
  %v232 = vld [vmem:[%s1 + $0x2c0] sm:$0xf]
  %v233 = vld [vmem:[%s1 + $0x2c4] sm:$0xf]
  %v234 = vld [vmem:[%s1 + $0x2c8] sm:$0xf]
  %v235 = vld [vmem:[%s1 + $0x2cc] sm:$0xf]
  %v236 = vld [vmem:[%s1 + $0x2d0] sm:$0xf]
  %v237 = vld [vmem:[%s1 + $0x2d4] sm:$0xf]
  %v238 = vld [vmem:[%s1 + $0x2d8] sm:$0xf]
  %v239 = vld [vmem:[%s1 + $0x2dc] sm:$0xf]
  %v240 = vld [vmem:[%s1 + $0x2e0] sm:$0xf]
  %v241 = vld [vmem:[%s1 + $0x2e4] sm:$0xf]
  %v242 = vld [vmem:[%s1 + $0x2e8] sm:$0xf]
  %v243 = vld [vmem:[%s1 + $0x2ec] sm:$0xf]
  %v244 = vld [vmem:[%s1 + $0x2f0] sm:$0xf]
  %v245 = vld [vmem:[%s1 + $0x2f4] sm:$0xf]
  %v246 = vld [vmem:[%s1 + $0x2f8] sm:$0xf]
  %v247 = vld [vmem:[%s1 + $0x2fc] sm:$0xf]
  %v248 = vld [vmem:[%s1 + $0x300] sm:$0xf]
  %v249 = vld [vmem:[%s1 + $0x304] sm:$0xf]
  %v250 = vld [vmem:[%s1 + $0x308] sm:$0xf]
  %v251 = vld [vmem:[%s1 + $0x30c] sm:$0xf]
  %v252 = vld [vmem:[%s1 + $0x310] sm:$0xf]
  %v253 = vld [vmem:[%s1 + $0x314] sm:$0xf]
  %v254 = vld [vmem:[%s1 + $0x318] sm:$0xf]
  %v255 = vld [vmem:[%s1 + $0x31c] sm:$0xf]
  %v256 = vld [vmem:[%s1 + $0x320] sm:$0xf]
  %v257 = vld [vmem:[%s1 + $0x324] sm:$0xf]
  %v258 = vld [vmem:[%s1 + $0x328] sm:$0xf]
  %v259 = vld [vmem:[%s1 + $0x32c] sm:$0xf]
  %v260 = vld [vmem:[%s1 + $0x330] sm:$0xf]
  %v261 = vld [vmem:[%s1 + $0x334] sm:$0xf]
  %v262 = vld [vmem:[%s1 + $0x338] sm:$0xf]
  %v263 = vld [vmem:[%s1 + $0x33c] sm:$0xf]
  %v264 = vld [vmem:[%s1 + $0x340] sm:$0xf]
  %v265 = vld [vmem:[%s1 + $0x344] sm:$0xf]
  %v266 = vld [vmem:[%s1 + $0x348] sm:$0xf]
  %v267 = vld [vmem:[%s1 + $0x34c] sm:$0xf]
  %v268 = vld [vmem:[%s1 + $0x350] sm:$0xf]
  %v269 = vld [vmem:[%s1 + $0x354] sm:$0xf]
  %v270 = vld [vmem:[%s1 + $0x358] sm:$0xf]
  %v271 = vld [vmem:[%s1 + $0x35c] sm:$0xf]
  %v272 = vld [vmem:[%s1 + $0x360] sm:$0xf]
  %v273 = vld [vmem:[%s1 + $0x364] sm:$0xf]
  %v274 = vld [vmem:[%s1 + $0x368] sm:$0xf]
  %v275 = vld [vmem:[%s1 + $0x36c] sm:$0xf]
  %v276 = vld [vmem:[%s1 + $0x370] sm:$0xf]
  %v277 = vld [vmem:[%s1 + $0x374] sm:$0xf]
  %v278 = vld [vmem:[%s1 + $0x378] sm:$0xf]
  %v279 = vld [vmem:[%s1 + $0x37c] sm:$0xf]
  %v280 = vld [vmem:[%s1 + $0x380] sm:$0xf]
  %v281 = vld [vmem:[%s1 + $0x384] sm:$0xf]
  %v282 = vld [vmem:[%s1 + $0x388] sm:$0xf]
  %v283 = vld [vmem:[%s1 + $0x38c] sm:$0xf]
  %v284 = vld [vmem:[%s1 + $0x390] sm:$0xf]
  %v285 = vld [vmem:[%s1 + $0x394] sm:$0xf]
  %v286 = vld [vmem:[%s1 + $0x398] sm:$0xf]
  %v287 = vld [vmem:[%s1 + $0x39c] sm:$0xf]
  %v288 = vld [vmem:[%s1 + $0x3a0] sm:$0xf]
  %v289 = vld [vmem:[%s1 + $0x3a4] sm:$0xf]
  %v290 = vld [vmem:[%s1 + $0x3a8] sm:$0xf]
  %v291 = vld [vmem:[%s1 + $0x3ac] sm:$0xf]
  %v292 = vld [vmem:[%s1 + $0x3b0] sm:$0xf]
  %v293 = vld [vmem:[%s1 + $0x3b4] sm:$0xf]
  %v294 = vld [vmem:[%s1 + $0x3b8] sm:$0xf]
  %v295 = vld [vmem:[%s1 + $0x3bc] sm:$0xf]
  %v296 = vld [vmem:[%s1 + $0x3c0] sm:$0xf]
  %v297 = vld [vmem:[%s1 + $0x3c4] sm:$0xf]
  %v298 = vld [vmem:[%s1 + $0x3c8] sm:$0xf]
  %v299 = vld [vmem:[%s1 + $0x3cc] sm:$0xf]
  %v300 = vld [vmem:[%s1 + $0x3d0] sm:$0xf]
  %v301 = vld [vmem:[%s1 + $0x3d4] sm:$0xf]
  %v302 = vld [vmem:[%s1 + $0x3d8] sm:$0xf]
  %v303 = vld [vmem:[%s1 + $0x3dc] sm:$0xf]
  %v304 = vld [vmem:[%s1 + $0x3e0] sm:$0xf]
  %v305 = vld [vmem:[%s1 + $0x3e4] sm:$0xf]
  %v306 = vld [vmem:[%s1 + $0x3e8] sm:$0xf]
  %v307 = vld [vmem:[%s1 + $0x3ec] sm:$0xf]
  %v308 = vld [vmem:[%s1 + $0x3f0] sm:$0xf]
  %v309 = vld [vmem:[%s1 + $0x3f4] sm:$0xf]
  %v310 = vld [vmem:[%s1 + $0x3f8] sm:$0xf]
  %v311 = vld [vmem:[%s1 + $0x3fc] sm:$0xf]
  %v312 = vld [vmem:[%s2] sm:$0x1]
  %v314 = vlaneseq
  %v315 = vshrl.u32 %v314, 7
  %v316 = vsub.s32 0, %v315
  %v317 = vrot.slane %v312, %v316
  %v351 = vunpack.c.l.b16 %v24
  %v352 = vunpack.c.h.b16 %v24
  %v353 = vunpack.c.l.b16 %v25
  %v354 = vunpack.c.h.b16 %v25
  %v355 = vunpack.c.l.b16 %v26
  %v356 = vunpack.c.h.b16 %v26
  %v357 = vunpack.c.l.b16 %v27
  %v358 = vunpack.c.h.b16 %v27
  %v359 = vunpack.c.l.b16 %v28
  %v360 = vunpack.c.h.b16 %v28
  %v361 = vunpack.c.l.b16 %v29
  %v362 = vunpack.c.h.b16 %v29
  %v363 = vunpack.c.l.b16 %v30
  %v364 = vunpack.c.h.b16 %v30
  %v365 = vunpack.c.l.b16 %v31
  %v366 = vunpack.c.h.b16 %v31
  %v367 = vunpack.c.l.b16 %v32
  %v368 = vunpack.c.h.b16 %v32
  %v369 = vunpack.c.l.b16 %v33
  %v370 = vunpack.c.h.b16 %v33
  %v371 = vunpack.c.l.b16 %v34
  %v372 = vunpack.c.h.b16 %v34
  %v373 = vunpack.c.l.b16 %v35
  %v374 = vunpack.c.h.b16 %v35
  %v375 = vunpack.c.l.b16 %v36
  %v376 = vunpack.c.h.b16 %v36
  %v377 = vunpack.c.l.b16 %v37
  %v378 = vunpack.c.h.b16 %v37
  %v379 = vunpack.c.l.b16 %v38
  %v380 = vunpack.c.h.b16 %v38
  %v381 = vunpack.c.l.b16 %v39
  %v382 = vunpack.c.h.b16 %v39
  %v383 = vunpack.c.l.b16 %v40
  %v384 = vunpack.c.h.b16 %v40
  %v385 = vunpack.c.l.b16 %v41
  %v386 = vunpack.c.h.b16 %v41
  %v387 = vunpack.c.l.b16 %v42
  %v388 = vunpack.c.h.b16 %v42
  %v389 = vunpack.c.l.b16 %v43
  %v390 = vunpack.c.h.b16 %v43
  %v391 = vunpack.c.l.b16 %v44
  %v392 = vunpack.c.h.b16 %v44
  %v393 = vunpack.c.l.b16 %v45
  %v394 = vunpack.c.h.b16 %v45
  %v395 = vunpack.c.l.b16 %v46
  %v396 = vunpack.c.h.b16 %v46
  %v397 = vunpack.c.l.b16 %v47
  %v398 = vunpack.c.h.b16 %v47
  %v399 = vunpack.c.l.b16 %v48
  %v400 = vunpack.c.h.b16 %v48
  %v401 = vunpack.c.l.b16 %v49
  %v402 = vunpack.c.h.b16 %v49
  %v403 = vunpack.c.l.b16 %v50
  %v404 = vunpack.c.h.b16 %v50
  %v405 = vunpack.c.l.b16 %v51
  %v406 = vunpack.c.h.b16 %v51
  %v407 = vunpack.c.l.b16 %v52
  %v408 = vunpack.c.h.b16 %v52
  %v409 = vunpack.c.l.b16 %v53
  %v410 = vunpack.c.h.b16 %v53
  %v411 = vunpack.c.l.b16 %v54
  %v412 = vunpack.c.h.b16 %v54
  %v413 = vunpack.c.l.b16 %v55
  %v414 = vunpack.c.h.b16 %v55
  %v415 = vpack.c.b16 %v367, %v351
  %v416 = vpack.c.b16 %v368, %v352
  %v417 = vpack.c.b16 %v369, %v353
  %v418 = vpack.c.b16 %v370, %v354
  %v419 = vpack.c.b16 %v371, %v355
  %v420 = vpack.c.b16 %v372, %v356
  %v421 = vpack.c.b16 %v373, %v357
  %v422 = vpack.c.b16 %v374, %v358
  %v423 = vpack.c.b16 %v375, %v359
  %v424 = vpack.c.b16 %v376, %v360
  %v425 = vpack.c.b16 %v377, %v361
  %v426 = vpack.c.b16 %v378, %v362
  %v427 = vpack.c.b16 %v379, %v363
  %v428 = vpack.c.b16 %v380, %v364
  %v429 = vpack.c.b16 %v381, %v365
  %v430 = vpack.c.b16 %v382, %v366
  %v431 = vpack.c.b16 %v399, %v383
  %v432 = vpack.c.b16 %v400, %v384
  %v433 = vpack.c.b16 %v401, %v385
  %v434 = vpack.c.b16 %v402, %v386
  %v435 = vpack.c.b16 %v403, %v387
  %v436 = vpack.c.b16 %v404, %v388
  %v437 = vpack.c.b16 %v405, %v389
  %v438 = vpack.c.b16 %v406, %v390
  %v439 = vpack.c.b16 %v407, %v391
  %v440 = vpack.c.b16 %v408, %v392
  %v441 = vpack.c.b16 %v409, %v393
  %v442 = vpack.c.b16 %v410, %v394
  %v443 = vpack.c.b16 %v411, %v395
  %v444 = vpack.c.b16 %v412, %v396
  %v445 = vpack.c.b16 %v413, %v397
  %v446 = vpack.c.b16 %v414, %v398
  %v735 = vunpack.c.l.b16 %v56
  %v736 = vunpack.c.l.b16 %v57
  %v737 = vunpack.c.l.b16 %v58
  %v738 = vunpack.c.l.b16 %v59
  %v739 = vunpack.c.l.b16 %v60
  %v740 = vunpack.c.l.b16 %v61
  %v741 = vunpack.c.l.b16 %v62
  %v742 = vunpack.c.l.b16 %v63
  %v743 = vunpack.c.l.b16 %v64
  %v744 = vunpack.c.l.b16 %v65
  %v745 = vunpack.c.l.b16 %v66
  %v746 = vunpack.c.l.b16 %v67
  %v747 = vunpack.c.l.b16 %v68
  %v748 = vunpack.c.l.b16 %v69
  %v749 = vunpack.c.l.b16 %v70
  %v750 = vunpack.c.l.b16 %v71
  %v751 = vunpack.c.l.b16 %v72
  %v752 = vunpack.c.l.b16 %v73
  %v753 = vunpack.c.l.b16 %v74
  %v754 = vunpack.c.l.b16 %v75
  %v755 = vunpack.c.l.b16 %v76
  %v756 = vunpack.c.l.b16 %v77
  %v757 = vunpack.c.l.b16 %v78
  %v758 = vunpack.c.l.b16 %v79
  %v759 = vunpack.c.l.b16 %v80
  %v760 = vunpack.c.l.b16 %v81
  %v761 = vunpack.c.l.b16 %v82
  %v762 = vunpack.c.l.b16 %v83
  %v763 = vunpack.c.l.b16 %v84
  %v764 = vunpack.c.l.b16 %v85
  %v765 = vunpack.c.l.b16 %v86
  %v766 = vunpack.c.l.b16 %v87
  %v767 = vunpack.c.l.b16 %v88
  %v768 = vunpack.c.l.b16 %v89
  %v769 = vunpack.c.l.b16 %v90
  %v770 = vunpack.c.l.b16 %v91
  %v771 = vunpack.c.l.b16 %v92
  %v772 = vunpack.c.l.b16 %v93
  %v773 = vunpack.c.l.b16 %v94
  %v774 = vunpack.c.l.b16 %v95
  %v775 = vunpack.c.l.b16 %v96
  %v776 = vunpack.c.l.b16 %v97
  %v777 = vunpack.c.l.b16 %v98
  %v778 = vunpack.c.l.b16 %v99
  %v779 = vunpack.c.l.b16 %v100
  %v780 = vunpack.c.l.b16 %v101
  %v781 = vunpack.c.l.b16 %v102
  %v782 = vunpack.c.l.b16 %v103
  %v783 = vunpack.c.l.b16 %v104
  %v784 = vunpack.c.l.b16 %v105
  %v785 = vunpack.c.l.b16 %v106
  %v786 = vunpack.c.l.b16 %v107
  %v787 = vunpack.c.l.b16 %v108
  %v788 = vunpack.c.l.b16 %v109
  %v789 = vunpack.c.l.b16 %v110
  %v790 = vunpack.c.l.b16 %v111
  %v791 = vunpack.c.l.b16 %v112
  %v792 = vunpack.c.l.b16 %v113
  %v793 = vunpack.c.l.b16 %v114
  %v794 = vunpack.c.l.b16 %v115
  %v795 = vunpack.c.l.b16 %v116
  %v796 = vunpack.c.l.b16 %v117
  %v797 = vunpack.c.l.b16 %v118
  %v798 = vunpack.c.l.b16 %v119
  %v799 = vunpack.c.l.b16 %v120
  %v800 = vunpack.c.l.b16 %v121
  %v801 = vunpack.c.l.b16 %v122
  %v802 = vunpack.c.l.b16 %v123
  %v803 = vunpack.c.l.b16 %v124
  %v804 = vunpack.c.l.b16 %v125
  %v805 = vunpack.c.l.b16 %v126
  %v806 = vunpack.c.l.b16 %v127
  %v807 = vunpack.c.l.b16 %v128
  %v808 = vunpack.c.l.b16 %v129
  %v809 = vunpack.c.l.b16 %v130
  %v810 = vunpack.c.l.b16 %v131
  %v811 = vunpack.c.l.b16 %v132
  %v812 = vunpack.c.l.b16 %v133
  %v813 = vunpack.c.l.b16 %v134
  %v814 = vunpack.c.l.b16 %v135
  %v815 = vunpack.c.l.b16 %v136
  %v816 = vunpack.c.l.b16 %v137
  %v817 = vunpack.c.l.b16 %v138
  %v818 = vunpack.c.l.b16 %v139
  %v819 = vunpack.c.l.b16 %v140
  %v820 = vunpack.c.l.b16 %v141
  %v821 = vunpack.c.l.b16 %v142
  %v822 = vunpack.c.l.b16 %v143
  %v823 = vunpack.c.l.b16 %v144
  %v824 = vunpack.c.l.b16 %v145
  %v825 = vunpack.c.l.b16 %v146
  %v826 = vunpack.c.l.b16 %v147
  %v827 = vunpack.c.l.b16 %v148
  %v828 = vunpack.c.l.b16 %v149
  %v829 = vunpack.c.l.b16 %v150
  %v830 = vunpack.c.l.b16 %v151
  %v831 = vunpack.c.l.b16 %v152
  %v832 = vunpack.c.l.b16 %v153
  %v833 = vunpack.c.l.b16 %v154
  %v834 = vunpack.c.l.b16 %v155
  %v835 = vunpack.c.l.b16 %v156
  %v836 = vunpack.c.l.b16 %v157
  %v837 = vunpack.c.l.b16 %v158
  %v838 = vunpack.c.l.b16 %v159
  %v839 = vunpack.c.l.b16 %v160
  %v840 = vunpack.c.l.b16 %v161
  %v841 = vunpack.c.l.b16 %v162
  %v842 = vunpack.c.l.b16 %v163
  %v843 = vunpack.c.l.b16 %v164
  %v844 = vunpack.c.l.b16 %v165
  %v845 = vunpack.c.l.b16 %v166
  %v846 = vunpack.c.l.b16 %v167
  %v847 = vunpack.c.l.b16 %v168
  %v848 = vunpack.c.l.b16 %v169
  %v849 = vunpack.c.l.b16 %v170
  %v850 = vunpack.c.l.b16 %v171
  %v851 = vunpack.c.l.b16 %v172
  %v852 = vunpack.c.l.b16 %v173
  %v853 = vunpack.c.l.b16 %v174
  %v854 = vunpack.c.l.b16 %v175
  %v855 = vunpack.c.l.b16 %v176
  %v856 = vunpack.c.l.b16 %v177
  %v857 = vunpack.c.l.b16 %v178
  %v858 = vunpack.c.l.b16 %v179
  %v859 = vunpack.c.l.b16 %v180
  %v860 = vunpack.c.l.b16 %v181
  %v861 = vunpack.c.l.b16 %v182
  %v862 = vunpack.c.l.b16 %v183
  %v863 = vunpack.c.l.b16 %v184
  %v864 = vunpack.c.l.b16 %v185
  %v865 = vunpack.c.l.b16 %v186
  %v866 = vunpack.c.l.b16 %v187
  %v867 = vunpack.c.l.b16 %v188
  %v868 = vunpack.c.l.b16 %v189
  %v869 = vunpack.c.l.b16 %v190
  %v870 = vunpack.c.l.b16 %v191
  %v871 = vunpack.c.l.b16 %v192
  %v872 = vunpack.c.l.b16 %v193
  %v873 = vunpack.c.l.b16 %v194
  %v874 = vunpack.c.l.b16 %v195
  %v875 = vunpack.c.l.b16 %v196
  %v876 = vunpack.c.l.b16 %v197
  %v877 = vunpack.c.l.b16 %v198
  %v878 = vunpack.c.l.b16 %v199
  %v879 = vunpack.c.l.b16 %v200
  %v880 = vunpack.c.l.b16 %v201
  %v881 = vunpack.c.l.b16 %v202
  %v882 = vunpack.c.l.b16 %v203
  %v883 = vunpack.c.l.b16 %v204
  %v884 = vunpack.c.l.b16 %v205
  %v885 = vunpack.c.l.b16 %v206
  %v886 = vunpack.c.l.b16 %v207
  %v887 = vunpack.c.l.b16 %v208
  %v888 = vunpack.c.l.b16 %v209
  %v889 = vunpack.c.l.b16 %v210
  %v890 = vunpack.c.l.b16 %v211
  %v891 = vunpack.c.l.b16 %v212
  %v892 = vunpack.c.l.b16 %v213
  %v893 = vunpack.c.l.b16 %v214
  %v894 = vunpack.c.l.b16 %v215
  %v895 = vunpack.c.l.b16 %v216
  %v896 = vunpack.c.l.b16 %v217
  %v897 = vunpack.c.l.b16 %v218
  %v898 = vunpack.c.l.b16 %v219
  %v899 = vunpack.c.l.b16 %v220
  %v900 = vunpack.c.l.b16 %v221
  %v901 = vunpack.c.l.b16 %v222
  %v902 = vunpack.c.l.b16 %v223
  %v903 = vunpack.c.l.b16 %v224
  %v904 = vunpack.c.l.b16 %v225
  %v905 = vunpack.c.l.b16 %v226
  %v906 = vunpack.c.l.b16 %v227
  %v907 = vunpack.c.l.b16 %v228
  %v908 = vunpack.c.l.b16 %v229
  %v909 = vunpack.c.l.b16 %v230
  %v910 = vunpack.c.l.b16 %v231
  %v911 = vunpack.c.l.b16 %v232
  %v912 = vunpack.c.l.b16 %v233
  %v913 = vunpack.c.l.b16 %v234
  %v914 = vunpack.c.l.b16 %v235
  %v915 = vunpack.c.l.b16 %v236
  %v916 = vunpack.c.l.b16 %v237
  %v917 = vunpack.c.l.b16 %v238
  %v918 = vunpack.c.l.b16 %v239
  %v919 = vunpack.c.l.b16 %v240
  %v920 = vunpack.c.l.b16 %v241
  %v921 = vunpack.c.l.b16 %v242
  %v922 = vunpack.c.l.b16 %v243
  %v923 = vunpack.c.l.b16 %v244
  %v924 = vunpack.c.l.b16 %v245
  %v925 = vunpack.c.l.b16 %v246
  %v926 = vunpack.c.l.b16 %v247
  %v927 = vunpack.c.l.b16 %v248
  %v928 = vunpack.c.l.b16 %v249
  %v929 = vunpack.c.l.b16 %v250
  %v930 = vunpack.c.l.b16 %v251
  %v931 = vunpack.c.l.b16 %v252
  %v932 = vunpack.c.l.b16 %v253
  %v933 = vunpack.c.l.b16 %v254
  %v934 = vunpack.c.l.b16 %v255
  %v935 = vunpack.c.l.b16 %v256
  %v936 = vunpack.c.l.b16 %v257
  %v937 = vunpack.c.l.b16 %v258
  %v938 = vunpack.c.l.b16 %v259
  %v939 = vunpack.c.l.b16 %v260
  %v940 = vunpack.c.l.b16 %v261
  %v941 = vunpack.c.l.b16 %v262
  %v942 = vunpack.c.l.b16 %v263
  %v943 = vunpack.c.l.b16 %v264
  %v944 = vunpack.c.l.b16 %v265
  %v945 = vunpack.c.l.b16 %v266
  %v946 = vunpack.c.l.b16 %v267
  %v947 = vunpack.c.l.b16 %v268
  %v948 = vunpack.c.l.b16 %v269
  %v949 = vunpack.c.l.b16 %v270
  %v950 = vunpack.c.l.b16 %v271
  %v951 = vunpack.c.l.b16 %v272
  %v952 = vunpack.c.l.b16 %v273
  %v953 = vunpack.c.l.b16 %v274
  %v954 = vunpack.c.l.b16 %v275
  %v955 = vunpack.c.l.b16 %v276
  %v956 = vunpack.c.l.b16 %v277
  %v957 = vunpack.c.l.b16 %v278
  %v958 = vunpack.c.l.b16 %v279
  %v959 = vunpack.c.l.b16 %v280
  %v960 = vunpack.c.l.b16 %v281
  %v961 = vunpack.c.l.b16 %v282
  %v962 = vunpack.c.l.b16 %v283
  %v963 = vunpack.c.l.b16 %v284
  %v964 = vunpack.c.l.b16 %v285
  %v965 = vunpack.c.l.b16 %v286
  %v966 = vunpack.c.l.b16 %v287
  %v967 = vunpack.c.l.b16 %v288
  %v968 = vunpack.c.l.b16 %v289
  %v969 = vunpack.c.l.b16 %v290
  %v970 = vunpack.c.l.b16 %v291
  %v971 = vunpack.c.l.b16 %v292
  %v972 = vunpack.c.l.b16 %v293
  %v973 = vunpack.c.l.b16 %v294
  %v974 = vunpack.c.l.b16 %v295
  %v975 = vunpack.c.l.b16 %v296
  %v976 = vunpack.c.l.b16 %v297
  %v977 = vunpack.c.l.b16 %v298
  %v978 = vunpack.c.l.b16 %v299
  %v979 = vunpack.c.l.b16 %v300
  %v980 = vunpack.c.l.b16 %v301
  %v981 = vunpack.c.l.b16 %v302
  %v982 = vunpack.c.l.b16 %v303
  %v983 = vunpack.c.l.b16 %v304
  %v984 = vunpack.c.l.b16 %v305
  %v985 = vunpack.c.l.b16 %v306
  %v986 = vunpack.c.l.b16 %v307
  %v987 = vunpack.c.l.b16 %v308
  %v988 = vunpack.c.l.b16 %v309
  %v989 = vunpack.c.l.b16 %v310
  %v990 = vunpack.c.l.b16 %v311
  %v991 = vpack.c.b16 %v736, %v735
  %v992 = vpack.c.b16 %v738, %v737
  %v993 = vpack.c.b16 %v740, %v739
  %v994 = vpack.c.b16 %v742, %v741
  %v995 = vpack.c.b16 %v744, %v743
  %v996 = vpack.c.b16 %v746, %v745
  %v997 = vpack.c.b16 %v748, %v747
  %v998 = vpack.c.b16 %v750, %v749
  %v999 = vpack.c.b16 %v752, %v751
  %v1000 = vpack.c.b16 %v754, %v753
  %v1001 = vpack.c.b16 %v756, %v755
  %v1002 = vpack.c.b16 %v758, %v757
  %v1003 = vpack.c.b16 %v760, %v759
  %v1004 = vpack.c.b16 %v762, %v761
  %v1005 = vpack.c.b16 %v764, %v763
  %v1006 = vpack.c.b16 %v766, %v765
  %v1007 = vpack.c.b16 %v768, %v767
  %v1008 = vpack.c.b16 %v770, %v769
  %v1009 = vpack.c.b16 %v772, %v771
  %v1010 = vpack.c.b16 %v774, %v773
  %v1011 = vpack.c.b16 %v776, %v775
  %v1012 = vpack.c.b16 %v778, %v777
  %v1013 = vpack.c.b16 %v780, %v779
  %v1014 = vpack.c.b16 %v782, %v781
  %v1015 = vpack.c.b16 %v784, %v783
  %v1016 = vpack.c.b16 %v786, %v785
  %v1017 = vpack.c.b16 %v788, %v787
  %v1018 = vpack.c.b16 %v790, %v789
  %v1019 = vpack.c.b16 %v792, %v791
  %v1020 = vpack.c.b16 %v794, %v793
  %v1021 = vpack.c.b16 %v796, %v795
  %v1022 = vpack.c.b16 %v798, %v797
  %v1023 = vpack.c.b16 %v800, %v799
  %v1024 = vpack.c.b16 %v802, %v801
  %v1025 = vpack.c.b16 %v804, %v803
  %v1026 = vpack.c.b16 %v806, %v805
  %v1027 = vpack.c.b16 %v808, %v807
  %v1028 = vpack.c.b16 %v810, %v809
  %v1029 = vpack.c.b16 %v812, %v811
  %v1030 = vpack.c.b16 %v814, %v813
  %v1031 = vpack.c.b16 %v816, %v815
  %v1032 = vpack.c.b16 %v818, %v817
  %v1033 = vpack.c.b16 %v820, %v819
  %v1034 = vpack.c.b16 %v822, %v821
  %v1035 = vpack.c.b16 %v824, %v823
  %v1036 = vpack.c.b16 %v826, %v825
  %v1037 = vpack.c.b16 %v828, %v827
  %v1038 = vpack.c.b16 %v830, %v829
  %v1039 = vpack.c.b16 %v832, %v831
  %v1040 = vpack.c.b16 %v834, %v833
  %v1041 = vpack.c.b16 %v836, %v835
  %v1042 = vpack.c.b16 %v838, %v837
  %v1043 = vpack.c.b16 %v840, %v839
  %v1044 = vpack.c.b16 %v842, %v841
  %v1045 = vpack.c.b16 %v844, %v843
  %v1046 = vpack.c.b16 %v846, %v845
  %v1047 = vpack.c.b16 %v848, %v847
  %v1048 = vpack.c.b16 %v850, %v849
  %v1049 = vpack.c.b16 %v852, %v851
  %v1050 = vpack.c.b16 %v854, %v853
  %v1051 = vpack.c.b16 %v856, %v855
  %v1052 = vpack.c.b16 %v858, %v857
  %v1053 = vpack.c.b16 %v860, %v859
  %v1054 = vpack.c.b16 %v862, %v861
  %v1055 = vpack.c.b16 %v864, %v863
  %v1056 = vpack.c.b16 %v866, %v865
  %v1057 = vpack.c.b16 %v868, %v867
  %v1058 = vpack.c.b16 %v870, %v869
  %v1059 = vpack.c.b16 %v872, %v871
  %v1060 = vpack.c.b16 %v874, %v873
  %v1061 = vpack.c.b16 %v876, %v875
  %v1062 = vpack.c.b16 %v878, %v877
  %v1063 = vpack.c.b16 %v880, %v879
  %v1064 = vpack.c.b16 %v882, %v881
  %v1065 = vpack.c.b16 %v884, %v883
  %v1066 = vpack.c.b16 %v886, %v885
  %v1067 = vpack.c.b16 %v888, %v887
  %v1068 = vpack.c.b16 %v890, %v889
  %v1069 = vpack.c.b16 %v892, %v891
  %v1070 = vpack.c.b16 %v894, %v893
  %v1071 = vpack.c.b16 %v896, %v895
  %v1072 = vpack.c.b16 %v898, %v897
  %v1073 = vpack.c.b16 %v900, %v899
  %v1074 = vpack.c.b16 %v902, %v901
  %v1075 = vpack.c.b16 %v904, %v903
  %v1076 = vpack.c.b16 %v906, %v905
  %v1077 = vpack.c.b16 %v908, %v907
  %v1078 = vpack.c.b16 %v910, %v909
  %v1079 = vpack.c.b16 %v912, %v911
  %v1080 = vpack.c.b16 %v914, %v913
  %v1081 = vpack.c.b16 %v916, %v915
  %v1082 = vpack.c.b16 %v918, %v917
  %v1083 = vpack.c.b16 %v920, %v919
  %v1084 = vpack.c.b16 %v922, %v921
  %v1085 = vpack.c.b16 %v924, %v923
  %v1086 = vpack.c.b16 %v926, %v925
  %v1087 = vpack.c.b16 %v928, %v927
  %v1088 = vpack.c.b16 %v930, %v929
  %v1089 = vpack.c.b16 %v932, %v931
  %v1090 = vpack.c.b16 %v934, %v933
  %v1091 = vpack.c.b16 %v936, %v935
  %v1092 = vpack.c.b16 %v938, %v937
  %v1093 = vpack.c.b16 %v940, %v939
  %v1094 = vpack.c.b16 %v942, %v941
  %v1095 = vpack.c.b16 %v944, %v943
  %v1096 = vpack.c.b16 %v946, %v945
  %v1097 = vpack.c.b16 %v948, %v947
  %v1098 = vpack.c.b16 %v950, %v949
  %v1099 = vpack.c.b16 %v952, %v951
  %v1100 = vpack.c.b16 %v954, %v953
  %v1101 = vpack.c.b16 %v956, %v955
  %v1102 = vpack.c.b16 %v958, %v957
  %v1103 = vpack.c.b16 %v960, %v959
  %v1104 = vpack.c.b16 %v962, %v961
  %v1105 = vpack.c.b16 %v964, %v963
  %v1106 = vpack.c.b16 %v966, %v965
  %v1107 = vpack.c.b16 %v968, %v967
  %v1108 = vpack.c.b16 %v970, %v969
  %v1109 = vpack.c.b16 %v972, %v971
  %v1110 = vpack.c.b16 %v974, %v973
  %v1111 = vpack.c.b16 %v976, %v975
  %v1112 = vpack.c.b16 %v978, %v977
  %v1113 = vpack.c.b16 %v980, %v979
  %v1114 = vpack.c.b16 %v982, %v981
  %v1115 = vpack.c.b16 %v984, %v983
  %v1116 = vpack.c.b16 %v986, %v985
  %v1117 = vpack.c.b16 %v988, %v987
  %v1118 = vpack.c.b16 %v990, %v989
  %1247 = vmatprep.subr.bf16.mxu0 0
  %1248 = vmatpush1.bf16.msra.mxu0 %v991
  %1249 = vmatprep.subr.bf16.mxu0 0
  %1250 = vmatpush1.bf16.msra.mxu0 %v992
  %1251 = vmatprep.subr.bf16.mxu0 0
  %1252 = vmatpush1.bf16.msra.mxu0 %v993
  %1253 = vmatprep.subr.bf16.mxu0 0
  %1254 = vmatpush1.bf16.msra.mxu0 %v994
  %1255 = vmatprep.subr.bf16.mxu0 0
  %1256 = vmatpush1.bf16.msra.mxu0 %v995
  %1257 = vmatprep.subr.bf16.mxu0 0
  %1258 = vmatpush1.bf16.msra.mxu0 %v996
  %1259 = vmatprep.subr.bf16.mxu0 0
  %1260 = vmatpush1.bf16.msra.mxu0 %v997
  %1261 = vmatprep.subr.bf16.mxu0 0
  %1262 = vmatpush1.bf16.msra.mxu0 %v998
  %1263 = vmatprep.subr.bf16.mxu0 0
  %1264 = vmatpush1.bf16.msra.mxu0 %v999
  %1265 = vmatprep.subr.bf16.mxu0 0
  %1266 = vmatpush1.bf16.msra.mxu0 %v1000
  %1267 = vmatprep.subr.bf16.mxu0 0
  %1268 = vmatpush1.bf16.msra.mxu0 %v1001
  %1269 = vmatprep.subr.bf16.mxu0 0
  %1270 = vmatpush1.bf16.msra.mxu0 %v1002
  %1271 = vmatprep.subr.bf16.mxu0 0
  %1272 = vmatpush1.bf16.msra.mxu0 %v1003
  %1273 = vmatprep.subr.bf16.mxu0 0
  %1274 = vmatpush1.bf16.msra.mxu0 %v1004
  %1275 = vmatprep.subr.bf16.mxu0 0
  %1276 = vmatpush1.bf16.msra.mxu0 %v1005
  %1277 = vmatprep.subr.bf16.mxu0 0
  %1278 = vmatpush1.bf16.msra.mxu0 %v1006
  %1279 = vmatprep.mubr.bf16.mxu0 %v416
  %1280 = vmatmul.mubr.bf16.gmra.mrb[0].mxu0 %v415
  %v1281 = vpop.f32.mrb[0].mxu0
  %v1282 = vadd.f32 %v317, %v1281
  %v1283 = vpop.f32.mrb[0].mxu0
  %v1284 = vpop.f32.mrb[0].mxu0
  %v1285 = vadd.f32 %v317, %v1284
  %v1286 = vpop.f32.mrb[0].mxu0
  %1287 = vmatprep.mubr.bf16.mxu0 %v432
  %1288 = vmatmul.mubr.bf16.gmra.mrb[0].mxu0 %v431
  %v1289 = vpop.f32.mrb[0].mxu0
  %v1290 = vadd.f32 %v317, %v1289
  %v1291 = vpop.f32.mrb[0].mxu0
  %v1292 = vpop.f32.mrb[0].mxu0
  %v1293 = vadd.f32 %v317, %v1292
  %v1294 = vpop.f32.mrb[0].mxu0
  %1295 = vdwg.mxu0
  %1296 = vmatprep.subr.bf16.mxu0 0
  %1297 = vmatpush1.bf16.msra.mxu0 %v1007
  %1298 = vmatprep.subr.bf16.mxu0 0
  %1299 = vmatpush1.bf16.msra.mxu0 %v1008
  %1300 = vmatprep.subr.bf16.mxu0 0
  %1301 = vmatpush1.bf16.msra.mxu0 %v1009
  %1302 = vmatprep.subr.bf16.mxu0 0
  %1303 = vmatpush1.bf16.msra.mxu0 %v1010
  %1304 = vmatprep.subr.bf16.mxu0 0
  %1305 = vmatpush1.bf16.msra.mxu0 %v1011
  %1306 = vmatprep.subr.bf16.mxu0 0
  %1307 = vmatpush1.bf16.msra.mxu0 %v1012
  %1308 = vmatprep.subr.bf16.mxu0 0
  %1309 = vmatpush1.bf16.msra.mxu0 %v1013
  %1310 = vmatprep.subr.bf16.mxu0 0
  %1311 = vmatpush1.bf16.msra.mxu0 %v1014
  %1312 = vmatprep.subr.bf16.mxu0 0
  %1313 = vmatpush1.bf16.msra.mxu0 %v1015
  %1314 = vmatprep.subr.bf16.mxu0 0
  %1315 = vmatpush1.bf16.msra.mxu0 %v1016
  %1316 = vmatprep.subr.bf16.mxu0 0
  %1317 = vmatpush1.bf16.msra.mxu0 %v1017
  %1318 = vmatprep.subr.bf16.mxu0 0
  %1319 = vmatpush1.bf16.msra.mxu0 %v1018
  %1320 = vmatprep.subr.bf16.mxu0 0
  %1321 = vmatpush1.bf16.msra.mxu0 %v1019
  %1322 = vmatprep.subr.bf16.mxu0 0
  %1323 = vmatpush1.bf16.msra.mxu0 %v1020
  %1324 = vmatprep.subr.bf16.mxu0 0
  %1325 = vmatpush1.bf16.msra.mxu0 %v1021
  %1326 = vmatprep.subr.bf16.mxu0 0
  %1327 = vmatpush1.bf16.msra.mxu0 %v1022
  %1328 = vmatprep.mubr.bf16.mxu0 %v418
  %1329 = vmatmul.mubr.bf16.gmra.mrb[0].mxu0 %v417
  %v1330 = vpop.f32.mrb[0].mxu0
  %v1331 = vadd.f32 %v1282, %v1330
  %v1332 = vpop.f32.mrb[0].mxu0
  %v1333 = vpop.f32.mrb[0].mxu0
  %v1334 = vadd.f32 %v1285, %v1333
  %v1335 = vpop.f32.mrb[0].mxu0
  %1336 = vmatprep.mubr.bf16.mxu0 %v434
  %1337 = vmatmul.mubr.bf16.gmra.mrb[0].mxu0 %v433
  %v1338 = vpop.f32.mrb[0].mxu0
  %v1339 = vadd.f32 %v1290, %v1338
  %v1340 = vpop.f32.mrb[0].mxu0
  %v1341 = vpop.f32.mrb[0].mxu0
  %v1342 = vadd.f32 %v1293, %v1341
  %v1343 = vpop.f32.mrb[0].mxu0
  %1344 = vdwg.mxu0
  %1345 = vmatprep.subr.bf16.mxu0 0
  %1346 = vmatpush1.bf16.msra.mxu0 %v1023
  %1347 = vmatprep.subr.bf16.mxu0 0
  %1348 = vmatpush1.bf16.msra.mxu0 %v1024
  %1349 = vmatprep.subr.bf16.mxu0 0
  %1350 = vmatpush1.bf16.msra.mxu0 %v1025
  %1351 = vmatprep.subr.bf16.mxu0 0
  %1352 = vmatpush1.bf16.msra.mxu0 %v1026
  %1353 = vmatprep.subr.bf16.mxu0 0
  %1354 = vmatpush1.bf16.msra.mxu0 %v1027
  %1355 = vmatprep.subr.bf16.mxu0 0
  %1356 = vmatpush1.bf16.msra.mxu0 %v1028
  %1357 = vmatprep.subr.bf16.mxu0 0
  %1358 = vmatpush1.bf16.msra.mxu0 %v1029
  %1359 = vmatprep.subr.bf16.mxu0 0
  %1360 = vmatpush1.bf16.msra.mxu0 %v1030
  %1361 = vmatprep.subr.bf16.mxu0 0
  %1362 = vmatpush1.bf16.msra.mxu0 %v1031
  %1363 = vmatprep.subr.bf16.mxu0 0
  %1364 = vmatpush1.bf16.msra.mxu0 %v1032
  %1365 = vmatprep.subr.bf16.mxu0 0
  %1366 = vmatpush1.bf16.msra.mxu0 %v1033
  %1367 = vmatprep.subr.bf16.mxu0 0
  %1368 = vmatpush1.bf16.msra.mxu0 %v1034
  %1369 = vmatprep.subr.bf16.mxu0 0
  %1370 = vmatpush1.bf16.msra.mxu0 %v1035
  %1371 = vmatprep.subr.bf16.mxu0 0
  %1372 = vmatpush1.bf16.msra.mxu0 %v1036
  %1373 = vmatprep.subr.bf16.mxu0 0
  %1374 = vmatpush1.bf16.msra.mxu0 %v1037
  %1375 = vmatprep.subr.bf16.mxu0 0
  %1376 = vmatpush1.bf16.msra.mxu0 %v1038
  %1377 = vmatprep.mubr.bf16.mxu0 %v420
  %1378 = vmatmul.mubr.bf16.gmra.mrb[0].mxu0 %v419
  %v1379 = vpop.f32.mrb[0].mxu0
  %v1380 = vadd.f32 %v1331, %v1379
  %v1381 = vpop.f32.mrb[0].mxu0
  %v1382 = vpop.f32.mrb[0].mxu0
  %v1383 = vadd.f32 %v1334, %v1382
  %v1384 = vpop.f32.mrb[0].mxu0
  %1385 = vmatprep.mubr.bf16.mxu0 %v436
  %1386 = vmatmul.mubr.bf16.gmra.mrb[0].mxu0 %v435
  %v1387 = vpop.f32.mrb[0].mxu0
  %v1388 = vadd.f32 %v1339, %v1387
  %v1389 = vpop.f32.mrb[0].mxu0
  %v1390 = vpop.f32.mrb[0].mxu0
  %v1391 = vadd.f32 %v1342, %v1390
  %v1392 = vpop.f32.mrb[0].mxu0
  %1393 = vdwg.mxu0
  %1394 = vmatprep.subr.bf16.mxu0 0
  %1395 = vmatpush1.bf16.msra.mxu0 %v1039
  %1396 = vmatprep.subr.bf16.mxu0 0
  %1397 = vmatpush1.bf16.msra.mxu0 %v1040
  %1398 = vmatprep.subr.bf16.mxu0 0
  %1399 = vmatpush1.bf16.msra.mxu0 %v1041
  %1400 = vmatprep.subr.bf16.mxu0 0
  %1401 = vmatpush1.bf16.msra.mxu0 %v1042
  %1402 = vmatprep.subr.bf16.mxu0 0
  %1403 = vmatpush1.bf16.msra.mxu0 %v1043
  %1404 = vmatprep.subr.bf16.mxu0 0
  %1405 = vmatpush1.bf16.msra.mxu0 %v1044
  %1406 = vmatprep.subr.bf16.mxu0 0
  %1407 = vmatpush1.bf16.msra.mxu0 %v1045
  %1408 = vmatprep.subr.bf16.mxu0 0
  %1409 = vmatpush1.bf16.msra.mxu0 %v1046
  %1410 = vmatprep.subr.bf16.mxu0 0
  %1411 = vmatpush1.bf16.msra.mxu0 %v1047
  %1412 = vmatprep.subr.bf16.mxu0 0
  %1413 = vmatpush1.bf16.msra.mxu0 %v1048
  %1414 = vmatprep.subr.bf16.mxu0 0
  %1415 = vmatpush1.bf16.msra.mxu0 %v1049
  %1416 = vmatprep.subr.bf16.mxu0 0
  %1417 = vmatpush1.bf16.msra.mxu0 %v1050
  %1418 = vmatprep.subr.bf16.mxu0 0
  %1419 = vmatpush1.bf16.msra.mxu0 %v1051
  %1420 = vmatprep.subr.bf16.mxu0 0
  %1421 = vmatpush1.bf16.msra.mxu0 %v1052
  %1422 = vmatprep.subr.bf16.mxu0 0
  %1423 = vmatpush1.bf16.msra.mxu0 %v1053
  %1424 = vmatprep.subr.bf16.mxu0 0
  %1425 = vmatpush1.bf16.msra.mxu0 %v1054
  %1426 = vmatprep.mubr.bf16.mxu0 %v422
  %1427 = vmatmul.mubr.bf16.gmra.mrb[0].mxu0 %v421
  %v1428 = vpop.f32.mrb[0].mxu0
  %v1429 = vadd.f32 %v1380, %v1428
  %v1430 = vpop.f32.mrb[0].mxu0
  %v1431 = vpop.f32.mrb[0].mxu0
  %v1432 = vadd.f32 %v1383, %v1431
  %v1433 = vpop.f32.mrb[0].mxu0
  %1434 = vmatprep.mubr.bf16.mxu0 %v438
  %1435 = vmatmul.mubr.bf16.gmra.mrb[0].mxu0 %v437
  %v1436 = vpop.f32.mrb[0].mxu0
  %v1437 = vadd.f32 %v1388, %v1436
  %v1438 = vpop.f32.mrb[0].mxu0
  %v1439 = vpop.f32.mrb[0].mxu0
  %v1440 = vadd.f32 %v1391, %v1439
  %v1441 = vpop.f32.mrb[0].mxu0
  %1442 = vdwg.mxu0
  %1443 = vmatprep.subr.bf16.mxu0 0
  %1444 = vmatpush1.bf16.msra.mxu0 %v1055
  %1445 = vmatprep.subr.bf16.mxu0 0
  %1446 = vmatpush1.bf16.msra.mxu0 %v1056
  %1447 = vmatprep.subr.bf16.mxu0 0
  %1448 = vmatpush1.bf16.msra.mxu0 %v1057
  %1449 = vmatprep.subr.bf16.mxu0 0
  %1450 = vmatpush1.bf16.msra.mxu0 %v1058
  %1451 = vmatprep.subr.bf16.mxu0 0
  %1452 = vmatpush1.bf16.msra.mxu0 %v1059
  %1453 = vmatprep.subr.bf16.mxu0 0
  %1454 = vmatpush1.bf16.msra.mxu0 %v1060
  %1455 = vmatprep.subr.bf16.mxu0 0
  %1456 = vmatpush1.bf16.msra.mxu0 %v1061
  %1457 = vmatprep.subr.bf16.mxu0 0
  %1458 = vmatpush1.bf16.msra.mxu0 %v1062
  %1459 = vmatprep.subr.bf16.mxu0 0
  %1460 = vmatpush1.bf16.msra.mxu0 %v1063
  %1461 = vmatprep.subr.bf16.mxu0 0
  %1462 = vmatpush1.bf16.msra.mxu0 %v1064
  %1463 = vmatprep.subr.bf16.mxu0 0
  %1464 = vmatpush1.bf16.msra.mxu0 %v1065
  %1465 = vmatprep.subr.bf16.mxu0 0
  %1466 = vmatpush1.bf16.msra.mxu0 %v1066
  %1467 = vmatprep.subr.bf16.mxu0 0
  %1468 = vmatpush1.bf16.msra.mxu0 %v1067
  %1469 = vmatprep.subr.bf16.mxu0 0
  %1470 = vmatpush1.bf16.msra.mxu0 %v1068
  %1471 = vmatprep.subr.bf16.mxu0 0
  %1472 = vmatpush1.bf16.msra.mxu0 %v1069
  %1473 = vmatprep.subr.bf16.mxu0 0
  %1474 = vmatpush1.bf16.msra.mxu0 %v1070
  %1475 = vmatprep.mubr.bf16.mxu0 %v424
  %1476 = vmatmul.mubr.bf16.gmra.mrb[0].mxu0 %v423
  %v1477 = vpop.f32.mrb[0].mxu0
  %v1478 = vadd.f32 %v1429, %v1477
  %v1479 = vpop.f32.mrb[0].mxu0
  %v1480 = vpop.f32.mrb[0].mxu0
  %v1481 = vadd.f32 %v1432, %v1480
  %v1482 = vpop.f32.mrb[0].mxu0
  %1483 = vmatprep.mubr.bf16.mxu0 %v440
  %1484 = vmatmul.mubr.bf16.gmra.mrb[0].mxu0 %v439
  %v1485 = vpop.f32.mrb[0].mxu0
  %v1486 = vadd.f32 %v1437, %v1485
  %v1487 = vpop.f32.mrb[0].mxu0
  %v1488 = vpop.f32.mrb[0].mxu0
  %v1489 = vadd.f32 %v1440, %v1488
  %v1490 = vpop.f32.mrb[0].mxu0
  %1491 = vdwg.mxu0
  %1492 = vmatprep.subr.bf16.mxu0 0
  %1493 = vmatpush1.bf16.msra.mxu0 %v1071
  %1494 = vmatprep.subr.bf16.mxu0 0
  %1495 = vmatpush1.bf16.msra.mxu0 %v1072
  %1496 = vmatprep.subr.bf16.mxu0 0
  %1497 = vmatpush1.bf16.msra.mxu0 %v1073
  %1498 = vmatprep.subr.bf16.mxu0 0
  %1499 = vmatpush1.bf16.msra.mxu0 %v1074
  %1500 = vmatprep.subr.bf16.mxu0 0
  %1501 = vmatpush1.bf16.msra.mxu0 %v1075
  %1502 = vmatprep.subr.bf16.mxu0 0
  %1503 = vmatpush1.bf16.msra.mxu0 %v1076
  %1504 = vmatprep.subr.bf16.mxu0 0
  %1505 = vmatpush1.bf16.msra.mxu0 %v1077
  %1506 = vmatprep.subr.bf16.mxu0 0
  %1507 = vmatpush1.bf16.msra.mxu0 %v1078
  %1508 = vmatprep.subr.bf16.mxu0 0
  %1509 = vmatpush1.bf16.msra.mxu0 %v1079
  %1510 = vmatprep.subr.bf16.mxu0 0
  %1511 = vmatpush1.bf16.msra.mxu0 %v1080
  %1512 = vmatprep.subr.bf16.mxu0 0
  %1513 = vmatpush1.bf16.msra.mxu0 %v1081
  %1514 = vmatprep.subr.bf16.mxu0 0
  %1515 = vmatpush1.bf16.msra.mxu0 %v1082
  %1516 = vmatprep.subr.bf16.mxu0 0
  %1517 = vmatpush1.bf16.msra.mxu0 %v1083
  %1518 = vmatprep.subr.bf16.mxu0 0
  %1519 = vmatpush1.bf16.msra.mxu0 %v1084
  %1520 = vmatprep.subr.bf16.mxu0 0
  %1521 = vmatpush1.bf16.msra.mxu0 %v1085
  %1522 = vmatprep.subr.bf16.mxu0 0
  %1523 = vmatpush1.bf16.msra.mxu0 %v1086
  %1524 = vmatprep.mubr.bf16.mxu0 %v426
  %1525 = vmatmul.mubr.bf16.gmra.mrb[0].mxu0 %v425
  %v1526 = vpop.f32.mrb[0].mxu0
  %v1527 = vadd.f32 %v1478, %v1526
  %v1528 = vpop.f32.mrb[0].mxu0
  %v1529 = vpop.f32.mrb[0].mxu0
  %v1530 = vadd.f32 %v1481, %v1529
  %v1531 = vpop.f32.mrb[0].mxu0
  %1532 = vmatprep.mubr.bf16.mxu0 %v442
  %1533 = vmatmul.mubr.bf16.gmra.mrb[0].mxu0 %v441
  %v1534 = vpop.f32.mrb[0].mxu0
  %v1535 = vadd.f32 %v1486, %v1534
  %v1536 = vpop.f32.mrb[0].mxu0
  %v1537 = vpop.f32.mrb[0].mxu0
  %v1538 = vadd.f32 %v1489, %v1537
  %v1539 = vpop.f32.mrb[0].mxu0
  %1540 = vdwg.mxu0
  %1541 = vmatprep.subr.bf16.mxu0 0
  %1542 = vmatpush1.bf16.msra.mxu0 %v1087
  %1543 = vmatprep.subr.bf16.mxu0 0
  %1544 = vmatpush1.bf16.msra.mxu0 %v1088
  %1545 = vmatprep.subr.bf16.mxu0 0
  %1546 = vmatpush1.bf16.msra.mxu0 %v1089
  %1547 = vmatprep.subr.bf16.mxu0 0
  %1548 = vmatpush1.bf16.msra.mxu0 %v1090
  %1549 = vmatprep.subr.bf16.mxu0 0
  %1550 = vmatpush1.bf16.msra.mxu0 %v1091
  %1551 = vmatprep.subr.bf16.mxu0 0
  %1552 = vmatpush1.bf16.msra.mxu0 %v1092
  %1553 = vmatprep.subr.bf16.mxu0 0
  %1554 = vmatpush1.bf16.msra.mxu0 %v1093
  %1555 = vmatprep.subr.bf16.mxu0 0
  %1556 = vmatpush1.bf16.msra.mxu0 %v1094
  %1557 = vmatprep.subr.bf16.mxu0 0
  %1558 = vmatpush1.bf16.msra.mxu0 %v1095
  %1559 = vmatprep.subr.bf16.mxu0 0
  %1560 = vmatpush1.bf16.msra.mxu0 %v1096
  %1561 = vmatprep.subr.bf16.mxu0 0
  %1562 = vmatpush1.bf16.msra.mxu0 %v1097
  %1563 = vmatprep.subr.bf16.mxu0 0
  %1564 = vmatpush1.bf16.msra.mxu0 %v1098
  %1565 = vmatprep.subr.bf16.mxu0 0
  %1566 = vmatpush1.bf16.msra.mxu0 %v1099
  %1567 = vmatprep.subr.bf16.mxu0 0
  %1568 = vmatpush1.bf16.msra.mxu0 %v1100
  %1569 = vmatprep.subr.bf16.mxu0 0
  %1570 = vmatpush1.bf16.msra.mxu0 %v1101
  %1571 = vmatprep.subr.bf16.mxu0 0
  %1572 = vmatpush1.bf16.msra.mxu0 %v1102
  %1573 = vmatprep.mubr.bf16.mxu0 %v428
  %1574 = vmatmul.mubr.bf16.gmra.mrb[0].mxu0 %v427
  %v1575 = vpop.f32.mrb[0].mxu0
  %v1576 = vadd.f32 %v1527, %v1575
  %v1577 = vpop.f32.mrb[0].mxu0
  %v1578 = vpop.f32.mrb[0].mxu0
  %v1579 = vadd.f32 %v1530, %v1578
  %v1580 = vpop.f32.mrb[0].mxu0
  %1581 = vmatprep.mubr.bf16.mxu0 %v444
  %1582 = vmatmul.mubr.bf16.gmra.mrb[0].mxu0 %v443
  %v1583 = vpop.f32.mrb[0].mxu0
  %v1584 = vadd.f32 %v1535, %v1583
  %v1585 = vpop.f32.mrb[0].mxu0
  %v1586 = vpop.f32.mrb[0].mxu0
  %v1587 = vadd.f32 %v1538, %v1586
  %v1588 = vpop.f32.mrb[0].mxu0
  %1589 = vdwg.mxu0
  %1590 = vmatprep.subr.bf16.mxu0 0
  %1591 = vmatpush1.bf16.msra.mxu0 %v1103
  %1592 = vmatprep.subr.bf16.mxu0 0
  %1593 = vmatpush1.bf16.msra.mxu0 %v1104
  %1594 = vmatprep.subr.bf16.mxu0 0
  %1595 = vmatpush1.bf16.msra.mxu0 %v1105
  %1596 = vmatprep.subr.bf16.mxu0 0
  %1597 = vmatpush1.bf16.msra.mxu0 %v1106
  %1598 = vmatprep.subr.bf16.mxu0 0
  %1599 = vmatpush1.bf16.msra.mxu0 %v1107
  %1600 = vmatprep.subr.bf16.mxu0 0
  %1601 = vmatpush1.bf16.msra.mxu0 %v1108
  %1602 = vmatprep.subr.bf16.mxu0 0
  %1603 = vmatpush1.bf16.msra.mxu0 %v1109
  %1604 = vmatprep.subr.bf16.mxu0 0
  %1605 = vmatpush1.bf16.msra.mxu0 %v1110
  %1606 = vmatprep.subr.bf16.mxu0 0
  %1607 = vmatpush1.bf16.msra.mxu0 %v1111
  %1608 = vmatprep.subr.bf16.mxu0 0
  %1609 = vmatpush1.bf16.msra.mxu0 %v1112
  %1610 = vmatprep.subr.bf16.mxu0 0
  %1611 = vmatpush1.bf16.msra.mxu0 %v1113
  %1612 = vmatprep.subr.bf16.mxu0 0
  %1613 = vmatpush1.bf16.msra.mxu0 %v1114
  %1614 = vmatprep.subr.bf16.mxu0 0
  %1615 = vmatpush1.bf16.msra.mxu0 %v1115
  %1616 = vmatprep.subr.bf16.mxu0 0
  %1617 = vmatpush1.bf16.msra.mxu0 %v1116
  %1618 = vmatprep.subr.bf16.mxu0 0
  %1619 = vmatpush1.bf16.msra.mxu0 %v1117
  %1620 = vmatprep.subr.bf16.mxu0 0
  %1621 = vmatpush1.bf16.msra.mxu0 %v1118
  %1622 = vmatprep.mubr.bf16.mxu0 %v430
  %1623 = vmatmul.mubr.bf16.gmra.mrb[0].mxu0 %v429
  %v1624 = vpop.f32.mrb[0].mxu0
  %v1625 = vadd.f32 %v1576, %v1624
  %v1626 = vpop.f32.mrb[0].mxu0
  %v1627 = vpop.f32.mrb[0].mxu0
  %v1628 = vadd.f32 %v1579, %v1627
  %v1629 = vpop.f32.mrb[0].mxu0
  %1630 = vmatprep.mubr.bf16.mxu0 %v446
  %1631 = vmatmul.mubr.bf16.gmra.mrb[0].mxu0 %v445
  %v1632 = vpop.f32.mrb[0].mxu0
  %v1633 = vadd.f32 %v1584, %v1632
  %v1634 = vpop.f32.mrb[0].mxu0
  %v1635 = vpop.f32.mrb[0].mxu0
  %v1636 = vadd.f32 %v1587, %v1635
  %v1637 = vpop.f32.mrb[0].mxu0
  %1638 = vdwg.mxu0
  %1639 = vst [vmem:[%s3] sm:$0xff] %v1625
  %1640 = vst [vmem:[%s3 + $0x8] sm:$0xff] %v1628
  %1641 = vst [vmem:[%s3 + $0x10] sm:$0xff] %v1633
  %1642 = vst [vmem:[%s3 + $0x18] sm:$0xff] %v1636
  %v1643 = vld [vmem:[%s4] sm:$0x1]
  %v1644 = vadd.f32 %v1625, %v1628
  %v1645 = vadd.f32 %v1644, %v1633
  %v1646 = vadd.f32 %v1645, %v1636
  %v1647 = vrot.slane %v1646, 4
  %v1648 = vadd.f32 %v1646, %v1647
  %v1649 = vrot.slane %v1648, 2
  %v1650 = vadd.f32 %v1648, %v1649
  %v1651 = vrot.slane %v1650, 1
  %v1652 = vadd.f32 %v1650, %v1651
  %v1653 = vadd.f32 %v1643, %v1652
  %1654 = vst [vmem:[%s4] sm:$0x1] %v1653
  %v1655 = vld [vmem:[%s5] sm:$0x1]
  %v1656 = vmul.f32 %v1625, %v1625
  %v1657 = vmul.f32 %v1628, %v1628
  %v1658 = vmul.f32 %v1633, %v1633
  %v1659 = vmul.f32 %v1636, %v1636
  %v1660 = vadd.f32 %v1656, %v1657
  %v1661 = vadd.f32 %v1660, %v1658
  %v1662 = vadd.f32 %v1661, %v1659
  %v1663 = vrot.slane %v1662, 4
  %v1664 = vadd.f32 %v1662, %v1663
  %v1665 = vrot.slane %v1664, 2
  %v1666 = vadd.f32 %v1664, %v1665
  %v1667 = vrot.slane %v1666, 1
  %v1668 = vadd.f32 %v1666, %v1667
  %v1669 = vadd.f32 %v1655, %v1668
  %1670 = vst [vmem:[%s5] sm:$0x1] %v1669
  // Predicated region
  $region18: #{discriminator_gan_forward.7} parent=0 // pred_check
    _
  $region19: #{discriminator_gan_forward.7} parent=0 // pred_check_branch
    %1672 = sbr.rel (0) target = $region21
  $region20: #{discriminator_gan_forward.7} parent=0 // pred_region
    _
  $region21: #{discriminator_gan_forward.7} parent=0 // pred_fallthru
    _
  // Predicated region
  $region22: #{discriminator_gan_forward.7} parent=0 // pred_check
    _
  $region23: #{discriminator_gan_forward.7} parent=0 // pred_check_branch
    %1674 = sbr.rel (0) target = $region25
  $region24: #{discriminator_gan_forward.7} parent=0 // pred_region
    _
  $region25: #{discriminator_gan_forward.7} parent=0 // pred_fallthru
    _
  // Predicated region
  $region26: #{discriminator_gan_forward.7} parent=0 // pred_check
    _
  $region27: #{discriminator_gan_forward.7} parent=0 // pred_check_branch
    %1676 = sbr.rel (0) target = $region29
  $region28: #{discriminator_gan_forward.7} parent=0 // pred_region
    _
  $region29: #{discriminator_gan_forward.7} parent=0 // pred_fallthru
    _
  // Predicated region
  $region30: #{discriminator_gan_forward.7} parent=0 // pred_check
    _
  $region31: #{discriminator_gan_forward.7} parent=0 // pred_check_branch
    %1678 = sbr.rel (0) target = $region33
  $region32: #{discriminator_gan_forward.7} parent=0 // pred_region
    _
  $region33: #{discriminator_gan_forward.7} parent=0 // pred_fallthru
    _
  // Predicated region
  $region34: #{discriminator_gan_forward.7} parent=0 // pred_check
    _
  $region35: #{discriminator_gan_forward.7} parent=0 // pred_check_branch
    %1680 = sbr.rel (0) target = $region37
  $region36: #{discriminator_gan_forward.7} parent=0 // pred_region
    _
  $region37: #{discriminator_gan_forward.7} parent=0 // pred_fallthru
    _
  // Predicated region
  $region38: #{discriminator_gan_forward.7} parent=0 // pred_check
    _
  $region39: #{discriminator_gan_forward.7} parent=0 // pred_check_branch
    %1682 = sbr.rel (0) target = $region41
  $region40: #{discriminator_gan_forward.7} parent=0 // pred_region
    _
  $region41: #{discriminator_gan_forward.7} parent=0 // pred_fallthru
    _

// kernel: discriminator_gan_forward.10
$region0: #{discriminator_gan_forward.10}
  #allocation0 [shape = 'u32[]', space=smem, size = 0x4, offset = 0x4, fixed_abs, tag = 'smem constant byte address 0x4 - core index']
  #allocation1 [shape = 'u32[144,128]{1,0:T(1,128)}', space=vmem, size = 0x12000, scoped, tag = 'internal scratch']
  %s0 = inlined_call_operand.vmem [shape: f32[8,256], index: 0, kind: input, shape index: {}]
  %s1 = inlined_call_operand.vmem [shape: f32[1,256], index: 1, kind: input, shape index: {}]
  %s2 = inlined_call_operand.vmem [shape: f32[1,256], index: 2, kind: input, shape index: {}]
  %s3 = inlined_call_operand.vmem [shape: bf16[8,256], index: 3, kind: output, shape index: {}]
  %s4 = sld [smem:[#allocation0]]
  $region22: #{discriminator_gan_forward.10} parent=0
    _
  %s6 = ssub.s32 1, %s4
  %s7 = scalar_select 0, %s6, %s4
  // Predicated region
  $region2: #{discriminator_gan_forward.10} parent=0 // pred_check
    _
  $region3: #{discriminator_gan_forward.10} parent=0 // pred_check_branch
    %9 = sbr.rel (0) target = $region5
  $region4: #{discriminator_gan_forward.10} parent=0 // pred_region
    _
  $region5: #{discriminator_gan_forward.10} parent=0 // pred_fallthru
    _
  // Predicated region
  $region6: #{discriminator_gan_forward.10} parent=0 // pred_check
    _
  $region7: #{discriminator_gan_forward.10} parent=0 // pred_check_branch
    %11 = sbr.rel (0) target = $region9
  $region8: #{discriminator_gan_forward.10} parent=0 // pred_region
    _
  $region9: #{discriminator_gan_forward.10} parent=0 // pred_fallthru
    _
  // Predicated region
  $region10: #{discriminator_gan_forward.10} parent=0 // pred_check
    _
  $region11: #{discriminator_gan_forward.10} parent=0 // pred_check_branch
    %13 = sbr.rel (0) target = $region13
  $region12: #{discriminator_gan_forward.10} parent=0 // pred_region
    _
  $region13: #{discriminator_gan_forward.10} parent=0 // pred_fallthru
    _
  %v14 = vld [vmem:[%s0] sm:$0xff]
  %v15 = vld [vmem:[%s0 + $0x8] sm:$0xff]
  %v16 = vld [vmem:[%s1] sm:$0x3]
  %v18 = vlaneseq
  %v19 = vshrl.u32 %v18, 7
  %v20 = vsub.s32 0, %v19
  %v21 = vrot.slane %v16, %v20
  %v22 = vlaneseq
  %v23 = vshrl.u32 %v22, 7
  %v24 = vsub.s32 1, %v23
  %v25 = vrot.slane %v16, %v24
  %v28 = vmul.f32 %v14, %v21
  %v29 = vmul.f32 %v15, %v25
  %v30 = vld [vmem:[%s2] sm:$0x3]
  %v32 = vlaneseq
  %v33 = vshrl.u32 %v32, 7
  %v34 = vsub.s32 0, %v33
  %v35 = vrot.slane %v30, %v34
  %v36 = vlaneseq
  %v37 = vshrl.u32 %v36, 7
  %v38 = vsub.s32 1, %v37
  %v39 = vrot.slane %v30, %v38
  %v42 = vadd.f32 %v28, %v35
  %v43 = vadd.f32 %v29, %v39
  %vm44 = vcmp.gt.f32.partialorder %v42, 0.0
  %vm45 = vcmp.gt.f32.partialorder %v43, 0.0
  %v46 = vmul.f32 %v42, 0.2
  %v47 = vmul.f32 %v43, 0.2
  %v48 = vsel %vm44, %v42, %v46
  %v49 = vsel %vm45, %v43, %v47
  %v50 = vpack.c.bf16 %v48, %v48
  %v51 = vpack.c.bf16 %v49, %v49
  %v54 = vunpack.c.l.b16 %v50
  %v55 = vunpack.c.l.b16 %v51
  %v56 = vpack.c.b16 %v55, %v54
  %58 = vst [vmem:[%s3] sm:$0xff] %v56
  // Predicated region
  $region14: #{discriminator_gan_forward.10} parent=0 // pred_check
    _
  $region15: #{discriminator_gan_forward.10} parent=0 // pred_check_branch
    %60 = sbr.rel (0) target = $region17
  $region16: #{discriminator_gan_forward.10} parent=0 // pred_region
    _
  $region17: #{discriminator_gan_forward.10} parent=0 // pred_fallthru
    _
  // Predicated region
  $region18: #{discriminator_gan_forward.10} parent=0 // pred_check
    _
  $region19: #{discriminator_gan_forward.10} parent=0 // pred_check_branch
    %62 = sbr.rel (0) target = $region21
  $region20: #{discriminator_gan_forward.10} parent=0 // pred_region
    _
  $region21: #{discriminator_gan_forward.10} parent=0 // pred_fallthru
    _

// kernel: discriminator_gan_forward.11
$region0: #{discriminator_gan_forward.11}
  #allocation0 [shape = 'u32[]', space=smem, size = 0x4, offset = 0x4, fixed_abs, tag = 'smem constant byte address 0x4 - core index']
  #allocation1 [shape = 'u32[144,128]{1,0:T(1,128)}', space=vmem, size = 0x12000, scoped, tag = 'internal scratch']
  %s0 = inlined_call_operand.vmem [shape: bf16[2,1024], index: 0, kind: input, shape index: {}]
  %s1 = inlined_call_operand.vmem [shape: bf16[1024,128], index: 1, kind: input, shape index: {}]
  %s2 = inlined_call_operand.vmem [shape: f32[1,128], index: 2, kind: input, shape index: {}]
  %s3 = inlined_call_operand.vmem [shape: f32[2,128], index: 3, kind: output, shape index: {}]
  %s4 = sld [smem:[#allocation0]]
  $region22: #{discriminator_gan_forward.11} parent=0
    _
  %s6 = ssub.s32 1, %s4
  %s7 = scalar_select 0, %s6, %s4
  // Predicated region
  $region2: #{discriminator_gan_forward.11} parent=0 // pred_check
    _
  $region3: #{discriminator_gan_forward.11} parent=0 // pred_check_branch
    %9 = sbr.rel (0) target = $region5
  $region4: #{discriminator_gan_forward.11} parent=0 // pred_region
    _
  $region5: #{discriminator_gan_forward.11} parent=0 // pred_fallthru
    _
  // Predicated region
  $region6: #{discriminator_gan_forward.11} parent=0 // pred_check
    _
  $region7: #{discriminator_gan_forward.11} parent=0 // pred_check_branch
    %11 = sbr.rel (0) target = $region9
  $region8: #{discriminator_gan_forward.11} parent=0 // pred_region
    _
  $region9: #{discriminator_gan_forward.11} parent=0 // pred_fallthru
    _
  // Predicated region
  $region10: #{discriminator_gan_forward.11} parent=0 // pred_check
    _
  $region11: #{discriminator_gan_forward.11} parent=0 // pred_check_branch
    %13 = sbr.rel (0) target = $region13
  $region12: #{discriminator_gan_forward.11} parent=0 // pred_region
    _
  $region13: #{discriminator_gan_forward.11} parent=0 // pred_fallthru
    _
  %v15 = vld [vmem:[%s0] sm:$0xff]
  %v16 = vld [vmem:[%s1] sm:$0xf]
  %v17 = vld [vmem:[%s1 + $0x4] sm:$0xf]
  %v18 = vld [vmem:[%s1 + $0x8] sm:$0xf]
  %v19 = vld [vmem:[%s1 + $0xc] sm:$0xf]
  %v20 = vld [vmem:[%s1 + $0x10] sm:$0xf]
  %v21 = vld [vmem:[%s1 + $0x14] sm:$0xf]
  %v22 = vld [vmem:[%s1 + $0x18] sm:$0xf]
  %v23 = vld [vmem:[%s1 + $0x1c] sm:$0xf]
  %v24 = vld [vmem:[%s1 + $0x20] sm:$0xf]
  %v25 = vld [vmem:[%s1 + $0x24] sm:$0xf]
  %v26 = vld [vmem:[%s1 + $0x28] sm:$0xf]
  %v27 = vld [vmem:[%s1 + $0x2c] sm:$0xf]
  %v28 = vld [vmem:[%s1 + $0x30] sm:$0xf]
  %v29 = vld [vmem:[%s1 + $0x34] sm:$0xf]
  %v30 = vld [vmem:[%s1 + $0x38] sm:$0xf]
  %v31 = vld [vmem:[%s1 + $0x3c] sm:$0xf]
  %v32 = vld [vmem:[%s1 + $0x40] sm:$0xf]
  %v33 = vld [vmem:[%s1 + $0x44] sm:$0xf]
  %v34 = vld [vmem:[%s1 + $0x48] sm:$0xf]
  %v35 = vld [vmem:[%s1 + $0x4c] sm:$0xf]
  %v36 = vld [vmem:[%s1 + $0x50] sm:$0xf]
  %v37 = vld [vmem:[%s1 + $0x54] sm:$0xf]
  %v38 = vld [vmem:[%s1 + $0x58] sm:$0xf]
  %v39 = vld [vmem:[%s1 + $0x5c] sm:$0xf]
  %v40 = vld [vmem:[%s1 + $0x60] sm:$0xf]
  %v41 = vld [vmem:[%s1 + $0x64] sm:$0xf]
  %v42 = vld [vmem:[%s1 + $0x68] sm:$0xf]
  %v43 = vld [vmem:[%s1 + $0x6c] sm:$0xf]
  %v44 = vld [vmem:[%s1 + $0x70] sm:$0xf]
  %v45 = vld [vmem:[%s1 + $0x74] sm:$0xf]
  %v46 = vld [vmem:[%s1 + $0x78] sm:$0xf]
  %v47 = vld [vmem:[%s1 + $0x7c] sm:$0xf]
  %v48 = vld [vmem:[%s1 + $0x80] sm:$0xf]
  %v49 = vld [vmem:[%s1 + $0x84] sm:$0xf]
  %v50 = vld [vmem:[%s1 + $0x88] sm:$0xf]
  %v51 = vld [vmem:[%s1 + $0x8c] sm:$0xf]
  %v52 = vld [vmem:[%s1 + $0x90] sm:$0xf]
  %v53 = vld [vmem:[%s1 + $0x94] sm:$0xf]
  %v54 = vld [vmem:[%s1 + $0x98] sm:$0xf]
  %v55 = vld [vmem:[%s1 + $0x9c] sm:$0xf]
  %v56 = vld [vmem:[%s1 + $0xa0] sm:$0xf]
  %v57 = vld [vmem:[%s1 + $0xa4] sm:$0xf]
  %v58 = vld [vmem:[%s1 + $0xa8] sm:$0xf]
  %v59 = vld [vmem:[%s1 + $0xac] sm:$0xf]
  %v60 = vld [vmem:[%s1 + $0xb0] sm:$0xf]
  %v61 = vld [vmem:[%s1 + $0xb4] sm:$0xf]
  %v62 = vld [vmem:[%s1 + $0xb8] sm:$0xf]
  %v63 = vld [vmem:[%s1 + $0xbc] sm:$0xf]
  %v64 = vld [vmem:[%s1 + $0xc0] sm:$0xf]
  %v65 = vld [vmem:[%s1 + $0xc4] sm:$0xf]
  %v66 = vld [vmem:[%s1 + $0xc8] sm:$0xf]
  %v67 = vld [vmem:[%s1 + $0xcc] sm:$0xf]
  %v68 = vld [vmem:[%s1 + $0xd0] sm:$0xf]
  %v69 = vld [vmem:[%s1 + $0xd4] sm:$0xf]
  %v70 = vld [vmem:[%s1 + $0xd8] sm:$0xf]
  %v71 = vld [vmem:[%s1 + $0xdc] sm:$0xf]
  %v72 = vld [vmem:[%s1 + $0xe0] sm:$0xf]
  %v73 = vld [vmem:[%s1 + $0xe4] sm:$0xf]
  %v74 = vld [vmem:[%s1 + $0xe8] sm:$0xf]
  %v75 = vld [vmem:[%s1 + $0xec] sm:$0xf]
  %v76 = vld [vmem:[%s1 + $0xf0] sm:$0xf]
  %v77 = vld [vmem:[%s1 + $0xf4] sm:$0xf]
  %v78 = vld [vmem:[%s1 + $0xf8] sm:$0xf]
  %v79 = vld [vmem:[%s1 + $0xfc] sm:$0xf]
  %v80 = vld [vmem:[%s1 + $0x100] sm:$0xf]
  %v81 = vld [vmem:[%s1 + $0x104] sm:$0xf]
  %v82 = vld [vmem:[%s1 + $0x108] sm:$0xf]
  %v83 = vld [vmem:[%s1 + $0x10c] sm:$0xf]
  %v84 = vld [vmem:[%s1 + $0x110] sm:$0xf]
  %v85 = vld [vmem:[%s1 + $0x114] sm:$0xf]
  %v86 = vld [vmem:[%s1 + $0x118] sm:$0xf]
  %v87 = vld [vmem:[%s1 + $0x11c] sm:$0xf]
  %v88 = vld [vmem:[%s1 + $0x120] sm:$0xf]
  %v89 = vld [vmem:[%s1 + $0x124] sm:$0xf]
  %v90 = vld [vmem:[%s1 + $0x128] sm:$0xf]
  %v91 = vld [vmem:[%s1 + $0x12c] sm:$0xf]
  %v92 = vld [vmem:[%s1 + $0x130] sm:$0xf]
  %v93 = vld [vmem:[%s1 + $0x134] sm:$0xf]
  %v94 = vld [vmem:[%s1 + $0x138] sm:$0xf]
  %v95 = vld [vmem:[%s1 + $0x13c] sm:$0xf]
  %v96 = vld [vmem:[%s1 + $0x140] sm:$0xf]
  %v97 = vld [vmem:[%s1 + $0x144] sm:$0xf]
  %v98 = vld [vmem:[%s1 + $0x148] sm:$0xf]
  %v99 = vld [vmem:[%s1 + $0x14c] sm:$0xf]
  %v100 = vld [vmem:[%s1 + $0x150] sm:$0xf]
  %v101 = vld [vmem:[%s1 + $0x154] sm:$0xf]
  %v102 = vld [vmem:[%s1 + $0x158] sm:$0xf]
  %v103 = vld [vmem:[%s1 + $0x15c] sm:$0xf]
  %v104 = vld [vmem:[%s1 + $0x160] sm:$0xf]
  %v105 = vld [vmem:[%s1 + $0x164] sm:$0xf]
  %v106 = vld [vmem:[%s1 + $0x168] sm:$0xf]
  %v107 = vld [vmem:[%s1 + $0x16c] sm:$0xf]
  %v108 = vld [vmem:[%s1 + $0x170] sm:$0xf]
  %v109 = vld [vmem:[%s1 + $0x174] sm:$0xf]
  %v110 = vld [vmem:[%s1 + $0x178] sm:$0xf]
  %v111 = vld [vmem:[%s1 + $0x17c] sm:$0xf]
  %v112 = vld [vmem:[%s1 + $0x180] sm:$0xf]
  %v113 = vld [vmem:[%s1 + $0x184] sm:$0xf]
  %v114 = vld [vmem:[%s1 + $0x188] sm:$0xf]
  %v115 = vld [vmem:[%s1 + $0x18c] sm:$0xf]
  %v116 = vld [vmem:[%s1 + $0x190] sm:$0xf]
  %v117 = vld [vmem:[%s1 + $0x194] sm:$0xf]
  %v118 = vld [vmem:[%s1 + $0x198] sm:$0xf]
  %v119 = vld [vmem:[%s1 + $0x19c] sm:$0xf]
  %v120 = vld [vmem:[%s1 + $0x1a0] sm:$0xf]
  %v121 = vld [vmem:[%s1 + $0x1a4] sm:$0xf]
  %v122 = vld [vmem:[%s1 + $0x1a8] sm:$0xf]
  %v123 = vld [vmem:[%s1 + $0x1ac] sm:$0xf]
  %v124 = vld [vmem:[%s1 + $0x1b0] sm:$0xf]
  %v125 = vld [vmem:[%s1 + $0x1b4] sm:$0xf]
  %v126 = vld [vmem:[%s1 + $0x1b8] sm:$0xf]
  %v127 = vld [vmem:[%s1 + $0x1bc] sm:$0xf]
  %v128 = vld [vmem:[%s1 + $0x1c0] sm:$0xf]
  %v129 = vld [vmem:[%s1 + $0x1c4] sm:$0xf]
  %v130 = vld [vmem:[%s1 + $0x1c8] sm:$0xf]
  %v131 = vld [vmem:[%s1 + $0x1cc] sm:$0xf]
  %v132 = vld [vmem:[%s1 + $0x1d0] sm:$0xf]
  %v133 = vld [vmem:[%s1 + $0x1d4] sm:$0xf]
  %v134 = vld [vmem:[%s1 + $0x1d8] sm:$0xf]
  %v135 = vld [vmem:[%s1 + $0x1dc] sm:$0xf]
  %v136 = vld [vmem:[%s1 + $0x1e0] sm:$0xf]
  %v137 = vld [vmem:[%s1 + $0x1e4] sm:$0xf]
  %v138 = vld [vmem:[%s1 + $0x1e8] sm:$0xf]
  %v139 = vld [vmem:[%s1 + $0x1ec] sm:$0xf]
  %v140 = vld [vmem:[%s1 + $0x1f0] sm:$0xf]
  %v141 = vld [vmem:[%s1 + $0x1f4] sm:$0xf]
  %v142 = vld [vmem:[%s1 + $0x1f8] sm:$0xf]
  %v143 = vld [vmem:[%s1 + $0x1fc] sm:$0xf]
  %v144 = vld [vmem:[%s2] sm:$0x1]
  %v146 = vlaneseq
  %v147 = vshrl.u32 %v146, 7
  %v148 = vsub.s32 0, %v147
  %v149 = vrot.slane %v144, %v148
  %v152 = vcombine.high %v15, %v15
  %v154 = vunpack.c.l.s4 1966171168
  %v155 = vunpack.c.0.s8 %v154
  %v156 = vlaneseq
  %v157 = vshrl.u32 %v156, 7
  %v158 = vsub.s32 %v155, %v157
  %v159 = vrot.slane %v15, %v158
  %v161 = vunpack.c.l.s4 1966171168
  %v162 = vunpack.c.0.s8 %v161
  %v163 = vlaneseq
  %v164 = vshrl.u32 %v163, 7
  %v165 = vsub.s32 %v162, %v164
  %v166 = vrot.slane %v152, %v165
  %v167 = vcombine.high %v159, %v159
  %v168 = vcombine.high %v166, %v166
  %v170 = vunpack.c.l.s4 1966171168
  %v171 = vunpack.c.0.s8 %v170
  %v172 = vlaneseq
  %v173 = vshrl.u32 %v172, 7
  %v174 = vsub.s32 %v171, %v173
  %v175 = vrot.slane %v159, %v174
  %v177 = vunpack.c.l.s4 1966171168
  %v178 = vunpack.c.0.s8 %v177
  %v179 = vlaneseq
  %v180 = vshrl.u32 %v179, 7
  %v181 = vsub.s32 %v178, %v180
  %v182 = vrot.slane %v166, %v181
  %v184 = vunpack.c.l.s4 1966171168
  %v185 = vunpack.c.0.s8 %v184
  %v186 = vlaneseq
  %v187 = vshrl.u32 %v186, 7
  %v188 = vsub.s32 %v185, %v187
  %v189 = vrot.slane %v167, %v188
  %v191 = vunpack.c.l.s4 1966171168
  %v192 = vunpack.c.0.s8 %v191
  %v193 = vlaneseq
  %v194 = vshrl.u32 %v193, 7
  %v195 = vsub.s32 %v192, %v194
  %v196 = vrot.slane %v168, %v195
  %v197 = vcombine.high %v175, %v175
  %v198 = vcombine.high %v182, %v182
  %v199 = vcombine.high %v189, %v189
  %v200 = vcombine.high %v196, %v196
  %v337 = vunpack.c.l.b16 %v16
  %v338 = vunpack.c.l.b16 %v17
  %v339 = vunpack.c.l.b16 %v18
  %v340 = vunpack.c.l.b16 %v19
  %v341 = vunpack.c.l.b16 %v20
  %v342 = vunpack.c.l.b16 %v21
  %v343 = vunpack.c.l.b16 %v22
  %v344 = vunpack.c.l.b16 %v23
  %v345 = vunpack.c.l.b16 %v24
  %v346 = vunpack.c.l.b16 %v25
  %v347 = vunpack.c.l.b16 %v26
  %v348 = vunpack.c.l.b16 %v27
  %v349 = vunpack.c.l.b16 %v28
  %v350 = vunpack.c.l.b16 %v29
  %v351 = vunpack.c.l.b16 %v30
  %v352 = vunpack.c.l.b16 %v31
  %v353 = vunpack.c.l.b16 %v32
  %v354 = vunpack.c.l.b16 %v33
  %v355 = vunpack.c.l.b16 %v34
  %v356 = vunpack.c.l.b16 %v35
  %v357 = vunpack.c.l.b16 %v36
  %v358 = vunpack.c.l.b16 %v37
  %v359 = vunpack.c.l.b16 %v38
  %v360 = vunpack.c.l.b16 %v39
  %v361 = vunpack.c.l.b16 %v40
  %v362 = vunpack.c.l.b16 %v41
  %v363 = vunpack.c.l.b16 %v42
  %v364 = vunpack.c.l.b16 %v43
  %v365 = vunpack.c.l.b16 %v44
  %v366 = vunpack.c.l.b16 %v45
  %v367 = vunpack.c.l.b16 %v46
  %v368 = vunpack.c.l.b16 %v47
  %v369 = vunpack.c.l.b16 %v48
  %v370 = vunpack.c.l.b16 %v49
  %v371 = vunpack.c.l.b16 %v50
  %v372 = vunpack.c.l.b16 %v51
  %v373 = vunpack.c.l.b16 %v52
  %v374 = vunpack.c.l.b16 %v53
  %v375 = vunpack.c.l.b16 %v54
  %v376 = vunpack.c.l.b16 %v55
  %v377 = vunpack.c.l.b16 %v56
  %v378 = vunpack.c.l.b16 %v57
  %v379 = vunpack.c.l.b16 %v58
  %v380 = vunpack.c.l.b16 %v59
  %v381 = vunpack.c.l.b16 %v60
  %v382 = vunpack.c.l.b16 %v61
  %v383 = vunpack.c.l.b16 %v62
  %v384 = vunpack.c.l.b16 %v63
  %v385 = vunpack.c.l.b16 %v64
  %v386 = vunpack.c.l.b16 %v65
  %v387 = vunpack.c.l.b16 %v66
  %v388 = vunpack.c.l.b16 %v67
  %v389 = vunpack.c.l.b16 %v68
  %v390 = vunpack.c.l.b16 %v69
  %v391 = vunpack.c.l.b16 %v70
  %v392 = vunpack.c.l.b16 %v71
  %v393 = vunpack.c.l.b16 %v72
  %v394 = vunpack.c.l.b16 %v73
  %v395 = vunpack.c.l.b16 %v74
  %v396 = vunpack.c.l.b16 %v75
  %v397 = vunpack.c.l.b16 %v76
  %v398 = vunpack.c.l.b16 %v77
  %v399 = vunpack.c.l.b16 %v78
  %v400 = vunpack.c.l.b16 %v79
  %v401 = vunpack.c.l.b16 %v80
  %v402 = vunpack.c.l.b16 %v81
  %v403 = vunpack.c.l.b16 %v82
  %v404 = vunpack.c.l.b16 %v83
  %v405 = vunpack.c.l.b16 %v84
  %v406 = vunpack.c.l.b16 %v85
  %v407 = vunpack.c.l.b16 %v86
  %v408 = vunpack.c.l.b16 %v87
  %v409 = vunpack.c.l.b16 %v88
  %v410 = vunpack.c.l.b16 %v89
  %v411 = vunpack.c.l.b16 %v90
  %v412 = vunpack.c.l.b16 %v91
  %v413 = vunpack.c.l.b16 %v92
  %v414 = vunpack.c.l.b16 %v93
  %v415 = vunpack.c.l.b16 %v94
  %v416 = vunpack.c.l.b16 %v95
  %v417 = vunpack.c.l.b16 %v96
  %v418 = vunpack.c.l.b16 %v97
  %v419 = vunpack.c.l.b16 %v98
  %v420 = vunpack.c.l.b16 %v99
  %v421 = vunpack.c.l.b16 %v100
  %v422 = vunpack.c.l.b16 %v101
  %v423 = vunpack.c.l.b16 %v102
  %v424 = vunpack.c.l.b16 %v103
  %v425 = vunpack.c.l.b16 %v104
  %v426 = vunpack.c.l.b16 %v105
  %v427 = vunpack.c.l.b16 %v106
  %v428 = vunpack.c.l.b16 %v107
  %v429 = vunpack.c.l.b16 %v108
  %v430 = vunpack.c.l.b16 %v109
  %v431 = vunpack.c.l.b16 %v110
  %v432 = vunpack.c.l.b16 %v111
  %v433 = vunpack.c.l.b16 %v112
  %v434 = vunpack.c.l.b16 %v113
  %v435 = vunpack.c.l.b16 %v114
  %v436 = vunpack.c.l.b16 %v115
  %v437 = vunpack.c.l.b16 %v116
  %v438 = vunpack.c.l.b16 %v117
  %v439 = vunpack.c.l.b16 %v118
  %v440 = vunpack.c.l.b16 %v119
  %v441 = vunpack.c.l.b16 %v120
  %v442 = vunpack.c.l.b16 %v121
  %v443 = vunpack.c.l.b16 %v122
  %v444 = vunpack.c.l.b16 %v123
  %v445 = vunpack.c.l.b16 %v124
  %v446 = vunpack.c.l.b16 %v125
  %v447 = vunpack.c.l.b16 %v126
  %v448 = vunpack.c.l.b16 %v127
  %v449 = vunpack.c.l.b16 %v128
  %v450 = vunpack.c.l.b16 %v129
  %v451 = vunpack.c.l.b16 %v130
  %v452 = vunpack.c.l.b16 %v131
  %v453 = vunpack.c.l.b16 %v132
  %v454 = vunpack.c.l.b16 %v133
  %v455 = vunpack.c.l.b16 %v134
  %v456 = vunpack.c.l.b16 %v135
  %v457 = vunpack.c.l.b16 %v136
  %v458 = vunpack.c.l.b16 %v137
  %v459 = vunpack.c.l.b16 %v138
  %v460 = vunpack.c.l.b16 %v139
  %v461 = vunpack.c.l.b16 %v140
  %v462 = vunpack.c.l.b16 %v141
  %v463 = vunpack.c.l.b16 %v142
  %v464 = vunpack.c.l.b16 %v143
  %v465 = vpack.c.b16 %v338, %v337
  %v466 = vpack.c.b16 %v340, %v339
  %v467 = vpack.c.b16 %v342, %v341
  %v468 = vpack.c.b16 %v344, %v343
  %v469 = vpack.c.b16 %v346, %v345
  %v470 = vpack.c.b16 %v348, %v347
  %v471 = vpack.c.b16 %v350, %v349
  %v472 = vpack.c.b16 %v352, %v351
  %v473 = vpack.c.b16 %v354, %v353
  %v474 = vpack.c.b16 %v356, %v355
  %v475 = vpack.c.b16 %v358, %v357
  %v476 = vpack.c.b16 %v360, %v359
  %v477 = vpack.c.b16 %v362, %v361
  %v478 = vpack.c.b16 %v364, %v363
  %v479 = vpack.c.b16 %v366, %v365
  %v480 = vpack.c.b16 %v368, %v367
  %v481 = vpack.c.b16 %v370, %v369
  %v482 = vpack.c.b16 %v372, %v371
  %v483 = vpack.c.b16 %v374, %v373
  %v484 = vpack.c.b16 %v376, %v375
  %v485 = vpack.c.b16 %v378, %v377
  %v486 = vpack.c.b16 %v380, %v379
  %v487 = vpack.c.b16 %v382, %v381
  %v488 = vpack.c.b16 %v384, %v383
  %v489 = vpack.c.b16 %v386, %v385
  %v490 = vpack.c.b16 %v388, %v387
  %v491 = vpack.c.b16 %v390, %v389
  %v492 = vpack.c.b16 %v392, %v391
  %v493 = vpack.c.b16 %v394, %v393
  %v494 = vpack.c.b16 %v396, %v395
  %v495 = vpack.c.b16 %v398, %v397
  %v496 = vpack.c.b16 %v400, %v399
  %v497 = vpack.c.b16 %v402, %v401
  %v498 = vpack.c.b16 %v404, %v403
  %v499 = vpack.c.b16 %v406, %v405
  %v500 = vpack.c.b16 %v408, %v407
  %v501 = vpack.c.b16 %v410, %v409
  %v502 = vpack.c.b16 %v412, %v411
  %v503 = vpack.c.b16 %v414, %v413
  %v504 = vpack.c.b16 %v416, %v415
  %v505 = vpack.c.b16 %v418, %v417
  %v506 = vpack.c.b16 %v420, %v419
  %v507 = vpack.c.b16 %v422, %v421
  %v508 = vpack.c.b16 %v424, %v423
  %v509 = vpack.c.b16 %v426, %v425
  %v510 = vpack.c.b16 %v428, %v427
  %v511 = vpack.c.b16 %v430, %v429
  %v512 = vpack.c.b16 %v432, %v431
  %v513 = vpack.c.b16 %v434, %v433
  %v514 = vpack.c.b16 %v436, %v435
  %v515 = vpack.c.b16 %v438, %v437
  %v516 = vpack.c.b16 %v440, %v439
  %v517 = vpack.c.b16 %v442, %v441
  %v518 = vpack.c.b16 %v444, %v443
  %v519 = vpack.c.b16 %v446, %v445
  %v520 = vpack.c.b16 %v448, %v447
  %v521 = vpack.c.b16 %v450, %v449
  %v522 = vpack.c.b16 %v452, %v451
  %v523 = vpack.c.b16 %v454, %v453
  %v524 = vpack.c.b16 %v456, %v455
  %v525 = vpack.c.b16 %v458, %v457
  %v526 = vpack.c.b16 %v460, %v459
  %v527 = vpack.c.b16 %v462, %v461
  %v528 = vpack.c.b16 %v464, %v463
  %593 = vmatprep.subr.bf16.mxu0 0
  %594 = vmatpush1.bf16.msra.mxu0 %v465
  %595 = vmatprep.subr.bf16.mxu0 0
  %596 = vmatpush1.bf16.msra.mxu0 %v466
  %597 = vmatprep.subr.bf16.mxu0 0
  %598 = vmatpush1.bf16.msra.mxu0 %v467
  %599 = vmatprep.subr.bf16.mxu0 0
  %600 = vmatpush1.bf16.msra.mxu0 %v468
  %601 = vmatprep.subr.bf16.mxu0 0
  %602 = vmatpush1.bf16.msra.mxu0 %v469
  %603 = vmatprep.subr.bf16.mxu0 0
  %604 = vmatpush1.bf16.msra.mxu0 %v470
  %605 = vmatprep.subr.bf16.mxu0 0
  %606 = vmatpush1.bf16.msra.mxu0 %v471
  %607 = vmatprep.subr.bf16.mxu0 0
  %608 = vmatpush1.bf16.msra.mxu0 %v472
  %609 = vmatprep.subr.bf16.mxu0 0
  %610 = vmatpush1.bf16.msra.mxu0 %v473
  %611 = vmatprep.subr.bf16.mxu0 0
  %612 = vmatpush1.bf16.msra.mxu0 %v474
  %613 = vmatprep.subr.bf16.mxu0 0
  %614 = vmatpush1.bf16.msra.mxu0 %v475
  %615 = vmatprep.subr.bf16.mxu0 0
  %616 = vmatpush1.bf16.msra.mxu0 %v476
  %617 = vmatprep.subr.bf16.mxu0 0
  %618 = vmatpush1.bf16.msra.mxu0 %v477
  %619 = vmatprep.subr.bf16.mxu0 0
  %620 = vmatpush1.bf16.msra.mxu0 %v478
  %621 = vmatprep.subr.bf16.mxu0 0
  %622 = vmatpush1.bf16.msra.mxu0 %v479
  %623 = vmatprep.subr.bf16.mxu0 0
  %624 = vmatpush1.bf16.msra.mxu0 %v480
  %625 = vmatprep.mubr.bf16.mxu0 %v189
  %626 = vmatmul.mubr.bf16.gmra.mrb[0].mxu0 %v175
  %v627 = vpop.f32.mrb[0].mxu0
  %v628 = vadd.f32 %v149, %v627
  %v629 = vpop.f32.mrb[0].mxu0
  %v630 = vpop.f32.mrb[0].mxu0
  %v631 = vpop.f32.mrb[0].mxu0
  %632 = vdwg.mxu0
  %633 = vmatprep.subr.bf16.mxu0 0
  %634 = vmatpush1.bf16.msra.mxu0 %v481
  %635 = vmatprep.subr.bf16.mxu0 0
  %636 = vmatpush1.bf16.msra.mxu0 %v482
  %637 = vmatprep.subr.bf16.mxu0 0
  %638 = vmatpush1.bf16.msra.mxu0 %v483
  %639 = vmatprep.subr.bf16.mxu0 0
  %640 = vmatpush1.bf16.msra.mxu0 %v484
  %641 = vmatprep.subr.bf16.mxu0 0
  %642 = vmatpush1.bf16.msra.mxu0 %v485
  %643 = vmatprep.subr.bf16.mxu0 0
  %644 = vmatpush1.bf16.msra.mxu0 %v486
  %645 = vmatprep.subr.bf16.mxu0 0
  %646 = vmatpush1.bf16.msra.mxu0 %v487
  %647 = vmatprep.subr.bf16.mxu0 0
  %648 = vmatpush1.bf16.msra.mxu0 %v488
  %649 = vmatprep.subr.bf16.mxu0 0
  %650 = vmatpush1.bf16.msra.mxu0 %v489
  %651 = vmatprep.subr.bf16.mxu0 0
  %652 = vmatpush1.bf16.msra.mxu0 %v490
  %653 = vmatprep.subr.bf16.mxu0 0
  %654 = vmatpush1.bf16.msra.mxu0 %v491
  %655 = vmatprep.subr.bf16.mxu0 0
  %656 = vmatpush1.bf16.msra.mxu0 %v492
  %657 = vmatprep.subr.bf16.mxu0 0
  %658 = vmatpush1.bf16.msra.mxu0 %v493
  %659 = vmatprep.subr.bf16.mxu0 0
  %660 = vmatpush1.bf16.msra.mxu0 %v494
  %661 = vmatprep.subr.bf16.mxu0 0
  %662 = vmatpush1.bf16.msra.mxu0 %v495
  %663 = vmatprep.subr.bf16.mxu0 0
  %664 = vmatpush1.bf16.msra.mxu0 %v496
  %665 = vmatprep.mubr.bf16.mxu0 %v199
  %666 = vmatmul.mubr.bf16.gmra.mrb[0].mxu0 %v197
  %v667 = vpop.f32.mrb[0].mxu0
  %v668 = vadd.f32 %v628, %v667
  %v669 = vpop.f32.mrb[0].mxu0
  %v670 = vpop.f32.mrb[0].mxu0
  %v671 = vpop.f32.mrb[0].mxu0
  %672 = vdwg.mxu0
  %673 = vmatprep.subr.bf16.mxu0 0
  %674 = vmatpush1.bf16.msra.mxu0 %v497
  %675 = vmatprep.subr.bf16.mxu0 0
  %676 = vmatpush1.bf16.msra.mxu0 %v498
  %677 = vmatprep.subr.bf16.mxu0 0
  %678 = vmatpush1.bf16.msra.mxu0 %v499
  %679 = vmatprep.subr.bf16.mxu0 0
  %680 = vmatpush1.bf16.msra.mxu0 %v500
  %681 = vmatprep.subr.bf16.mxu0 0
  %682 = vmatpush1.bf16.msra.mxu0 %v501
  %683 = vmatprep.subr.bf16.mxu0 0
  %684 = vmatpush1.bf16.msra.mxu0 %v502
  %685 = vmatprep.subr.bf16.mxu0 0
  %686 = vmatpush1.bf16.msra.mxu0 %v503
  %687 = vmatprep.subr.bf16.mxu0 0
  %688 = vmatpush1.bf16.msra.mxu0 %v504
  %689 = vmatprep.subr.bf16.mxu0 0
  %690 = vmatpush1.bf16.msra.mxu0 %v505
  %691 = vmatprep.subr.bf16.mxu0 0
  %692 = vmatpush1.bf16.msra.mxu0 %v506
  %693 = vmatprep.subr.bf16.mxu0 0
  %694 = vmatpush1.bf16.msra.mxu0 %v507
  %695 = vmatprep.subr.bf16.mxu0 0
  %696 = vmatpush1.bf16.msra.mxu0 %v508
  %697 = vmatprep.subr.bf16.mxu0 0
  %698 = vmatpush1.bf16.msra.mxu0 %v509
  %699 = vmatprep.subr.bf16.mxu0 0
  %700 = vmatpush1.bf16.msra.mxu0 %v510
  %701 = vmatprep.subr.bf16.mxu0 0
  %702 = vmatpush1.bf16.msra.mxu0 %v511
  %703 = vmatprep.subr.bf16.mxu0 0
  %704 = vmatpush1.bf16.msra.mxu0 %v512
  %705 = vmatprep.mubr.bf16.mxu0 %v196
  %706 = vmatmul.mubr.bf16.gmra.mrb[0].mxu0 %v182
  %v707 = vpop.f32.mrb[0].mxu0
  %v708 = vadd.f32 %v668, %v707
  %v709 = vpop.f32.mrb[0].mxu0
  %v710 = vpop.f32.mrb[0].mxu0
  %v711 = vpop.f32.mrb[0].mxu0
  %712 = vdwg.mxu0
  %713 = vmatprep.subr.bf16.mxu0 0
  %714 = vmatpush1.bf16.msra.mxu0 %v513
  %715 = vmatprep.subr.bf16.mxu0 0
  %716 = vmatpush1.bf16.msra.mxu0 %v514
  %717 = vmatprep.subr.bf16.mxu0 0
  %718 = vmatpush1.bf16.msra.mxu0 %v515
  %719 = vmatprep.subr.bf16.mxu0 0
  %720 = vmatpush1.bf16.msra.mxu0 %v516
  %721 = vmatprep.subr.bf16.mxu0 0
  %722 = vmatpush1.bf16.msra.mxu0 %v517
  %723 = vmatprep.subr.bf16.mxu0 0
  %724 = vmatpush1.bf16.msra.mxu0 %v518
  %725 = vmatprep.subr.bf16.mxu0 0
  %726 = vmatpush1.bf16.msra.mxu0 %v519
  %727 = vmatprep.subr.bf16.mxu0 0
  %728 = vmatpush1.bf16.msra.mxu0 %v520
  %729 = vmatprep.subr.bf16.mxu0 0
  %730 = vmatpush1.bf16.msra.mxu0 %v521
  %731 = vmatprep.subr.bf16.mxu0 0
  %732 = vmatpush1.bf16.msra.mxu0 %v522
  %733 = vmatprep.subr.bf16.mxu0 0
  %734 = vmatpush1.bf16.msra.mxu0 %v523
  %735 = vmatprep.subr.bf16.mxu0 0
  %736 = vmatpush1.bf16.msra.mxu0 %v524
  %737 = vmatprep.subr.bf16.mxu0 0
  %738 = vmatpush1.bf16.msra.mxu0 %v525
  %739 = vmatprep.subr.bf16.mxu0 0
  %740 = vmatpush1.bf16.msra.mxu0 %v526
  %741 = vmatprep.subr.bf16.mxu0 0
  %742 = vmatpush1.bf16.msra.mxu0 %v527
  %743 = vmatprep.subr.bf16.mxu0 0
  %744 = vmatpush1.bf16.msra.mxu0 %v528
  %745 = vmatprep.mubr.bf16.mxu0 %v200
  %746 = vmatmul.mubr.bf16.gmra.mrb[0].mxu0 %v198
  %v747 = vpop.f32.mrb[0].mxu0
  %v748 = vadd.f32 %v708, %v747
  %v749 = vpop.f32.mrb[0].mxu0
  %v750 = vpop.f32.mrb[0].mxu0
  %v751 = vpop.f32.mrb[0].mxu0
  %752 = vdwg.mxu0
  %v753 = vand.u32 2147483647, %v748
  %v754 = vsub.f32 0.0, %v753
  %v755 = vmul.f32 %v754, 1.442695
  %v756 = vpow.pop %v755
  %vm757 = vcmp.ge.f32.partialorder %v748, 0.0
  %v758 = vadd.f32 %v756, 1.0
  %v759 = vrcp.pop %v758
  %v760 = vmul.f32 1.0, %v759
  %v761 = vmul.f32 %v756, %v759
  %v762 = vsel %vm757, %v760, %v761
  %763 = vst [vmem:[%s3] sm:$0x3] %v762
  // Predicated region
  $region14: #{discriminator_gan_forward.11} parent=0 // pred_check
    _
  $region15: #{discriminator_gan_forward.11} parent=0 // pred_check_branch
    %765 = sbr.rel (0) target = $region17
  $region16: #{discriminator_gan_forward.11} parent=0 // pred_region
    _
  $region17: #{discriminator_gan_forward.11} parent=0 // pred_fallthru
    _
  // Predicated region
  $region18: #{discriminator_gan_forward.11} parent=0 // pred_check
    _
  $region19: #{discriminator_gan_forward.11} parent=0 // pred_check_branch
    %767 = sbr.rel (0) target = $region21
  $region20: #{discriminator_gan_forward.11} parent=0 // pred_region
    _
  $region21: #{discriminator_gan_forward.11} parent=0 // pred_fallthru
    _

// kernel: discriminator_gan_forward.9
$region0: #{discriminator_gan_forward.9}
  #allocation0 [shape = 'u32[]', space=smem, size = 0x4, offset = 0x4, fixed_abs, tag = 'smem constant byte address 0x4 - core index']
  #allocation1 [shape = 'u32[144,128]{1,0:T(1,128)}', space=vmem, size = 0x12000, scoped, tag = 'internal scratch']
  %s0 = inlined_call_operand.vmem [shape: bf16[8,2048], index: 0, kind: input, shape index: {}]
  %s1 = inlined_call_operand.vmem [shape: bf16[2048,256], index: 1, kind: input, shape index: {}]
  %s2 = inlined_call_operand.vmem [shape: f32[1,256], index: 2, kind: input, shape index: {}]
  %s3 = inlined_call_operand.vmem [shape: f32[8,256], index: 3, kind: output, shape index: {0}]
  %s4 = inlined_call_operand.vmem [shape: f32[1,256], index: 4, kind: output, shape index: {1}]
  %s5 = inlined_call_operand.vmem [shape: f32[1,256], index: 5, kind: output, shape index: {2}]
  %6 = xla_tuple %s3, %s4, %s5
  %s7 = sld [smem:[#allocation0]]
  $region42: #{discriminator_gan_forward.9} parent=0
    _
  %s9 = ssub.s32 1, %s7
  %s10 = scalar_select 0, %s9, %s7
  // Predicated region
  $region2: #{discriminator_gan_forward.9} parent=0 // pred_check
    _
  $region3: #{discriminator_gan_forward.9} parent=0 // pred_check_branch
    %12 = sbr.rel (0) target = $region5
  $region4: #{discriminator_gan_forward.9} parent=0 // pred_region
    _
  $region5: #{discriminator_gan_forward.9} parent=0 // pred_fallthru
    _
  // Predicated region
  $region6: #{discriminator_gan_forward.9} parent=0 // pred_check
    _
  $region7: #{discriminator_gan_forward.9} parent=0 // pred_check_branch
    %14 = sbr.rel (0) target = $region9
  $region8: #{discriminator_gan_forward.9} parent=0 // pred_region
    _
  $region9: #{discriminator_gan_forward.9} parent=0 // pred_fallthru
    _
  // Predicated region
  $region10: #{discriminator_gan_forward.9} parent=0 // pred_check
    _
  $region11: #{discriminator_gan_forward.9} parent=0 // pred_check_branch
    %16 = sbr.rel (0) target = $region13
  $region12: #{discriminator_gan_forward.9} parent=0 // pred_region
    _
  $region13: #{discriminator_gan_forward.9} parent=0 // pred_fallthru
    _
  %p17 = scmp.eq.s32.totalorder 0, 0
  // Predicated region
  $region14: #{discriminator_gan_forward.9} parent=0 // pred_check
    %p18 = pneg %p17
  $region15: #{discriminator_gan_forward.9} parent=0 // pred_check_branch
    %20 = sbr.rel (%p18) target = $region17
  $region16: #{discriminator_gan_forward.9} parent=0 // pred_region
    %v21 = vlaneseq
    %vm22 = vcmp.ge.s32.totalorder %v21, 0
    %vm23 = vcmp.lt.s32.totalorder %v21, 256
    %vm24 = vmand %vm22, %vm23
    %25 = vst.msk [vmem:[%s4] sm:$0x3] %vm24, 0.0
    %26 = vst.msk [vmem:[%s5] sm:$0x3] %vm24, 0.0
  $region17: #{discriminator_gan_forward.9} parent=0 // pred_fallthru
    _
  %v27 = vld [vmem:[%s0] sm:$0xff]
  %v28 = vld [vmem:[%s0 + $0x8] sm:$0xff]
  %v29 = vld [vmem:[%s0 + $0x10] sm:$0xff]
  %v30 = vld [vmem:[%s0 + $0x18] sm:$0xff]
  %v31 = vld [vmem:[%s0 + $0x20] sm:$0xff]
  %v32 = vld [vmem:[%s0 + $0x28] sm:$0xff]
  %v33 = vld [vmem:[%s0 + $0x30] sm:$0xff]
  %v34 = vld [vmem:[%s0 + $0x38] sm:$0xff]
  %v35 = vld [vmem:[%s1] sm:$0xff]
  %v36 = vld [vmem:[%s1 + $0x8] sm:$0xff]
  %v37 = vld [vmem:[%s1 + $0x10] sm:$0xff]
  %v38 = vld [vmem:[%s1 + $0x18] sm:$0xff]
  %v39 = vld [vmem:[%s1 + $0x20] sm:$0xff]
  %v40 = vld [vmem:[%s1 + $0x28] sm:$0xff]
  %v41 = vld [vmem:[%s1 + $0x30] sm:$0xff]
  %v42 = vld [vmem:[%s1 + $0x38] sm:$0xff]
  %v43 = vld [vmem:[%s1 + $0x40] sm:$0xff]
  %v44 = vld [vmem:[%s1 + $0x48] sm:$0xff]
  %v45 = vld [vmem:[%s1 + $0x50] sm:$0xff]
  %v46 = vld [vmem:[%s1 + $0x58] sm:$0xff]
  %v47 = vld [vmem:[%s1 + $0x60] sm:$0xff]
  %v48 = vld [vmem:[%s1 + $0x68] sm:$0xff]
  %v49 = vld [vmem:[%s1 + $0x70] sm:$0xff]
  %v50 = vld [vmem:[%s1 + $0x78] sm:$0xff]
  %v51 = vld [vmem:[%s1 + $0x80] sm:$0xff]
  %v52 = vld [vmem:[%s1 + $0x88] sm:$0xff]
  %v53 = vld [vmem:[%s1 + $0x90] sm:$0xff]
  %v54 = vld [vmem:[%s1 + $0x98] sm:$0xff]
  %v55 = vld [vmem:[%s1 + $0xa0] sm:$0xff]
  %v56 = vld [vmem:[%s1 + $0xa8] sm:$0xff]
  %v57 = vld [vmem:[%s1 + $0xb0] sm:$0xff]
  %v58 = vld [vmem:[%s1 + $0xb8] sm:$0xff]
  %v59 = vld [vmem:[%s1 + $0xc0] sm:$0xff]
  %v60 = vld [vmem:[%s1 + $0xc8] sm:$0xff]
  %v61 = vld [vmem:[%s1 + $0xd0] sm:$0xff]
  %v62 = vld [vmem:[%s1 + $0xd8] sm:$0xff]
  %v63 = vld [vmem:[%s1 + $0xe0] sm:$0xff]
  %v64 = vld [vmem:[%s1 + $0xe8] sm:$0xff]
  %v65 = vld [vmem:[%s1 + $0xf0] sm:$0xff]
  %v66 = vld [vmem:[%s1 + $0xf8] sm:$0xff]
  %v67 = vld [vmem:[%s1 + $0x100] sm:$0xff]
  %v68 = vld [vmem:[%s1 + $0x108] sm:$0xff]
  %v69 = vld [vmem:[%s1 + $0x110] sm:$0xff]
  %v70 = vld [vmem:[%s1 + $0x118] sm:$0xff]
  %v71 = vld [vmem:[%s1 + $0x120] sm:$0xff]
  %v72 = vld [vmem:[%s1 + $0x128] sm:$0xff]
  %v73 = vld [vmem:[%s1 + $0x130] sm:$0xff]
  %v74 = vld [vmem:[%s1 + $0x138] sm:$0xff]
  %v75 = vld [vmem:[%s1 + $0x140] sm:$0xff]
  %v76 = vld [vmem:[%s1 + $0x148] sm:$0xff]
  %v77 = vld [vmem:[%s1 + $0x150] sm:$0xff]
  %v78 = vld [vmem:[%s1 + $0x158] sm:$0xff]
  %v79 = vld [vmem:[%s1 + $0x160] sm:$0xff]
  %v80 = vld [vmem:[%s1 + $0x168] sm:$0xff]
  %v81 = vld [vmem:[%s1 + $0x170] sm:$0xff]
  %v82 = vld [vmem:[%s1 + $0x178] sm:$0xff]
  %v83 = vld [vmem:[%s1 + $0x180] sm:$0xff]
  %v84 = vld [vmem:[%s1 + $0x188] sm:$0xff]
  %v85 = vld [vmem:[%s1 + $0x190] sm:$0xff]
  %v86 = vld [vmem:[%s1 + $0x198] sm:$0xff]
  %v87 = vld [vmem:[%s1 + $0x1a0] sm:$0xff]
  %v88 = vld [vmem:[%s1 + $0x1a8] sm:$0xff]
  %v89 = vld [vmem:[%s1 + $0x1b0] sm:$0xff]
  %v90 = vld [vmem:[%s1 + $0x1b8] sm:$0xff]
  %v91 = vld [vmem:[%s1 + $0x1c0] sm:$0xff]
  %v92 = vld [vmem:[%s1 + $0x1c8] sm:$0xff]
  %v93 = vld [vmem:[%s1 + $0x1d0] sm:$0xff]
  %v94 = vld [vmem:[%s1 + $0x1d8] sm:$0xff]
  %v95 = vld [vmem:[%s1 + $0x1e0] sm:$0xff]
  %v96 = vld [vmem:[%s1 + $0x1e8] sm:$0xff]
  %v97 = vld [vmem:[%s1 + $0x1f0] sm:$0xff]
  %v98 = vld [vmem:[%s1 + $0x1f8] sm:$0xff]
  %v99 = vld [vmem:[%s1 + $0x200] sm:$0xff]
  %v100 = vld [vmem:[%s1 + $0x208] sm:$0xff]
  %v101 = vld [vmem:[%s1 + $0x210] sm:$0xff]
  %v102 = vld [vmem:[%s1 + $0x218] sm:$0xff]
  %v103 = vld [vmem:[%s1 + $0x220] sm:$0xff]
  %v104 = vld [vmem:[%s1 + $0x228] sm:$0xff]
  %v105 = vld [vmem:[%s1 + $0x230] sm:$0xff]
  %v106 = vld [vmem:[%s1 + $0x238] sm:$0xff]
  %v107 = vld [vmem:[%s1 + $0x240] sm:$0xff]
  %v108 = vld [vmem:[%s1 + $0x248] sm:$0xff]
  %v109 = vld [vmem:[%s1 + $0x250] sm:$0xff]
  %v110 = vld [vmem:[%s1 + $0x258] sm:$0xff]
  %v111 = vld [vmem:[%s1 + $0x260] sm:$0xff]
  %v112 = vld [vmem:[%s1 + $0x268] sm:$0xff]
  %v113 = vld [vmem:[%s1 + $0x270] sm:$0xff]
  %v114 = vld [vmem:[%s1 + $0x278] sm:$0xff]
  %v115 = vld [vmem:[%s1 + $0x280] sm:$0xff]
  %v116 = vld [vmem:[%s1 + $0x288] sm:$0xff]
  %v117 = vld [vmem:[%s1 + $0x290] sm:$0xff]
  %v118 = vld [vmem:[%s1 + $0x298] sm:$0xff]
  %v119 = vld [vmem:[%s1 + $0x2a0] sm:$0xff]
  %v120 = vld [vmem:[%s1 + $0x2a8] sm:$0xff]
  %v121 = vld [vmem:[%s1 + $0x2b0] sm:$0xff]
  %v122 = vld [vmem:[%s1 + $0x2b8] sm:$0xff]
  %v123 = vld [vmem:[%s1 + $0x2c0] sm:$0xff]
  %v124 = vld [vmem:[%s1 + $0x2c8] sm:$0xff]
  %v125 = vld [vmem:[%s1 + $0x2d0] sm:$0xff]
  %v126 = vld [vmem:[%s1 + $0x2d8] sm:$0xff]
  %v127 = vld [vmem:[%s1 + $0x2e0] sm:$0xff]
  %v128 = vld [vmem:[%s1 + $0x2e8] sm:$0xff]
  %v129 = vld [vmem:[%s1 + $0x2f0] sm:$0xff]
  %v130 = vld [vmem:[%s1 + $0x2f8] sm:$0xff]
  %v131 = vld [vmem:[%s1 + $0x300] sm:$0xff]
  %v132 = vld [vmem:[%s1 + $0x308] sm:$0xff]
  %v133 = vld [vmem:[%s1 + $0x310] sm:$0xff]
  %v134 = vld [vmem:[%s1 + $0x318] sm:$0xff]
  %v135 = vld [vmem:[%s1 + $0x320] sm:$0xff]
  %v136 = vld [vmem:[%s1 + $0x328] sm:$0xff]
  %v137 = vld [vmem:[%s1 + $0x330] sm:$0xff]
  %v138 = vld [vmem:[%s1 + $0x338] sm:$0xff]
  %v139 = vld [vmem:[%s1 + $0x340] sm:$0xff]
  %v140 = vld [vmem:[%s1 + $0x348] sm:$0xff]
  %v141 = vld [vmem:[%s1 + $0x350] sm:$0xff]
  %v142 = vld [vmem:[%s1 + $0x358] sm:$0xff]
  %v143 = vld [vmem:[%s1 + $0x360] sm:$0xff]
  %v144 = vld [vmem:[%s1 + $0x368] sm:$0xff]
  %v145 = vld [vmem:[%s1 + $0x370] sm:$0xff]
  %v146 = vld [vmem:[%s1 + $0x378] sm:$0xff]
  %v147 = vld [vmem:[%s1 + $0x380] sm:$0xff]
  %v148 = vld [vmem:[%s1 + $0x388] sm:$0xff]
  %v149 = vld [vmem:[%s1 + $0x390] sm:$0xff]
  %v150 = vld [vmem:[%s1 + $0x398] sm:$0xff]
  %v151 = vld [vmem:[%s1 + $0x3a0] sm:$0xff]
  %v152 = vld [vmem:[%s1 + $0x3a8] sm:$0xff]
  %v153 = vld [vmem:[%s1 + $0x3b0] sm:$0xff]
  %v154 = vld [vmem:[%s1 + $0x3b8] sm:$0xff]
  %v155 = vld [vmem:[%s1 + $0x3c0] sm:$0xff]
  %v156 = vld [vmem:[%s1 + $0x3c8] sm:$0xff]
  %v157 = vld [vmem:[%s1 + $0x3d0] sm:$0xff]
  %v158 = vld [vmem:[%s1 + $0x3d8] sm:$0xff]
  %v159 = vld [vmem:[%s1 + $0x3e0] sm:$0xff]
  %v160 = vld [vmem:[%s1 + $0x3e8] sm:$0xff]
  %v161 = vld [vmem:[%s1 + $0x3f0] sm:$0xff]
  %v162 = vld [vmem:[%s1 + $0x3f8] sm:$0xff]
  %v163 = vld [vmem:[%s1 + $0x400] sm:$0xff]
  %v164 = vld [vmem:[%s1 + $0x408] sm:$0xff]
  %v165 = vld [vmem:[%s1 + $0x410] sm:$0xff]
  %v166 = vld [vmem:[%s1 + $0x418] sm:$0xff]
  %v167 = vld [vmem:[%s1 + $0x420] sm:$0xff]
  %v168 = vld [vmem:[%s1 + $0x428] sm:$0xff]
  %v169 = vld [vmem:[%s1 + $0x430] sm:$0xff]
  %v170 = vld [vmem:[%s1 + $0x438] sm:$0xff]
  %v171 = vld [vmem:[%s1 + $0x440] sm:$0xff]
  %v172 = vld [vmem:[%s1 + $0x448] sm:$0xff]
  %v173 = vld [vmem:[%s1 + $0x450] sm:$0xff]
  %v174 = vld [vmem:[%s1 + $0x458] sm:$0xff]
  %v175 = vld [vmem:[%s1 + $0x460] sm:$0xff]
  %v176 = vld [vmem:[%s1 + $0x468] sm:$0xff]
  %v177 = vld [vmem:[%s1 + $0x470] sm:$0xff]
  %v178 = vld [vmem:[%s1 + $0x478] sm:$0xff]
  %v179 = vld [vmem:[%s1 + $0x480] sm:$0xff]
  %v180 = vld [vmem:[%s1 + $0x488] sm:$0xff]
  %v181 = vld [vmem:[%s1 + $0x490] sm:$0xff]
  %v182 = vld [vmem:[%s1 + $0x498] sm:$0xff]
  %v183 = vld [vmem:[%s1 + $0x4a0] sm:$0xff]
  %v184 = vld [vmem:[%s1 + $0x4a8] sm:$0xff]
  %v185 = vld [vmem:[%s1 + $0x4b0] sm:$0xff]
  %v186 = vld [vmem:[%s1 + $0x4b8] sm:$0xff]
  %v187 = vld [vmem:[%s1 + $0x4c0] sm:$0xff]
  %v188 = vld [vmem:[%s1 + $0x4c8] sm:$0xff]
  %v189 = vld [vmem:[%s1 + $0x4d0] sm:$0xff]
  %v190 = vld [vmem:[%s1 + $0x4d8] sm:$0xff]
  %v191 = vld [vmem:[%s1 + $0x4e0] sm:$0xff]
  %v192 = vld [vmem:[%s1 + $0x4e8] sm:$0xff]
  %v193 = vld [vmem:[%s1 + $0x4f0] sm:$0xff]
  %v194 = vld [vmem:[%s1 + $0x4f8] sm:$0xff]
  %v195 = vld [vmem:[%s1 + $0x500] sm:$0xff]
  %v196 = vld [vmem:[%s1 + $0x508] sm:$0xff]
  %v197 = vld [vmem:[%s1 + $0x510] sm:$0xff]
  %v198 = vld [vmem:[%s1 + $0x518] sm:$0xff]
  %v199 = vld [vmem:[%s1 + $0x520] sm:$0xff]
  %v200 = vld [vmem:[%s1 + $0x528] sm:$0xff]
  %v201 = vld [vmem:[%s1 + $0x530] sm:$0xff]
  %v202 = vld [vmem:[%s1 + $0x538] sm:$0xff]
  %v203 = vld [vmem:[%s1 + $0x540] sm:$0xff]
  %v204 = vld [vmem:[%s1 + $0x548] sm:$0xff]
  %v205 = vld [vmem:[%s1 + $0x550] sm:$0xff]
  %v206 = vld [vmem:[%s1 + $0x558] sm:$0xff]
  %v207 = vld [vmem:[%s1 + $0x560] sm:$0xff]
  %v208 = vld [vmem:[%s1 + $0x568] sm:$0xff]
  %v209 = vld [vmem:[%s1 + $0x570] sm:$0xff]
  %v210 = vld [vmem:[%s1 + $0x578] sm:$0xff]
  %v211 = vld [vmem:[%s1 + $0x580] sm:$0xff]
  %v212 = vld [vmem:[%s1 + $0x588] sm:$0xff]
  %v213 = vld [vmem:[%s1 + $0x590] sm:$0xff]
  %v214 = vld [vmem:[%s1 + $0x598] sm:$0xff]
  %v215 = vld [vmem:[%s1 + $0x5a0] sm:$0xff]
  %v216 = vld [vmem:[%s1 + $0x5a8] sm:$0xff]
  %v217 = vld [vmem:[%s1 + $0x5b0] sm:$0xff]
  %v218 = vld [vmem:[%s1 + $0x5b8] sm:$0xff]
  %v219 = vld [vmem:[%s1 + $0x5c0] sm:$0xff]
  %v220 = vld [vmem:[%s1 + $0x5c8] sm:$0xff]
  %v221 = vld [vmem:[%s1 + $0x5d0] sm:$0xff]
  %v222 = vld [vmem:[%s1 + $0x5d8] sm:$0xff]
  %v223 = vld [vmem:[%s1 + $0x5e0] sm:$0xff]
  %v224 = vld [vmem:[%s1 + $0x5e8] sm:$0xff]
  %v225 = vld [vmem:[%s1 + $0x5f0] sm:$0xff]
  %v226 = vld [vmem:[%s1 + $0x5f8] sm:$0xff]
  %v227 = vld [vmem:[%s1 + $0x600] sm:$0xff]
  %v228 = vld [vmem:[%s1 + $0x608] sm:$0xff]
  %v229 = vld [vmem:[%s1 + $0x610] sm:$0xff]
  %v230 = vld [vmem:[%s1 + $0x618] sm:$0xff]
  %v231 = vld [vmem:[%s1 + $0x620] sm:$0xff]
  %v232 = vld [vmem:[%s1 + $0x628] sm:$0xff]
  %v233 = vld [vmem:[%s1 + $0x630] sm:$0xff]
  %v234 = vld [vmem:[%s1 + $0x638] sm:$0xff]
  %v235 = vld [vmem:[%s1 + $0x640] sm:$0xff]
  %v236 = vld [vmem:[%s1 + $0x648] sm:$0xff]
  %v237 = vld [vmem:[%s1 + $0x650] sm:$0xff]
  %v238 = vld [vmem:[%s1 + $0x658] sm:$0xff]
  %v239 = vld [vmem:[%s1 + $0x660] sm:$0xff]
  %v240 = vld [vmem:[%s1 + $0x668] sm:$0xff]
  %v241 = vld [vmem:[%s1 + $0x670] sm:$0xff]
  %v242 = vld [vmem:[%s1 + $0x678] sm:$0xff]
  %v243 = vld [vmem:[%s1 + $0x680] sm:$0xff]
  %v244 = vld [vmem:[%s1 + $0x688] sm:$0xff]
  %v245 = vld [vmem:[%s1 + $0x690] sm:$0xff]
  %v246 = vld [vmem:[%s1 + $0x698] sm:$0xff]
  %v247 = vld [vmem:[%s1 + $0x6a0] sm:$0xff]
  %v248 = vld [vmem:[%s1 + $0x6a8] sm:$0xff]
  %v249 = vld [vmem:[%s1 + $0x6b0] sm:$0xff]
  %v250 = vld [vmem:[%s1 + $0x6b8] sm:$0xff]
  %v251 = vld [vmem:[%s1 + $0x6c0] sm:$0xff]
  %v252 = vld [vmem:[%s1 + $0x6c8] sm:$0xff]
  %v253 = vld [vmem:[%s1 + $0x6d0] sm:$0xff]
  %v254 = vld [vmem:[%s1 + $0x6d8] sm:$0xff]
  %v255 = vld [vmem:[%s1 + $0x6e0] sm:$0xff]
  %v256 = vld [vmem:[%s1 + $0x6e8] sm:$0xff]
  %v257 = vld [vmem:[%s1 + $0x6f0] sm:$0xff]
  %v258 = vld [vmem:[%s1 + $0x6f8] sm:$0xff]
  %v259 = vld [vmem:[%s1 + $0x700] sm:$0xff]
  %v260 = vld [vmem:[%s1 + $0x708] sm:$0xff]
  %v261 = vld [vmem:[%s1 + $0x710] sm:$0xff]
  %v262 = vld [vmem:[%s1 + $0x718] sm:$0xff]
  %v263 = vld [vmem:[%s1 + $0x720] sm:$0xff]
  %v264 = vld [vmem:[%s1 + $0x728] sm:$0xff]
  %v265 = vld [vmem:[%s1 + $0x730] sm:$0xff]
  %v266 = vld [vmem:[%s1 + $0x738] sm:$0xff]
  %v267 = vld [vmem:[%s1 + $0x740] sm:$0xff]
  %v268 = vld [vmem:[%s1 + $0x748] sm:$0xff]
  %v269 = vld [vmem:[%s1 + $0x750] sm:$0xff]
  %v270 = vld [vmem:[%s1 + $0x758] sm:$0xff]
  %v271 = vld [vmem:[%s1 + $0x760] sm:$0xff]
  %v272 = vld [vmem:[%s1 + $0x768] sm:$0xff]
  %v273 = vld [vmem:[%s1 + $0x770] sm:$0xff]
  %v274 = vld [vmem:[%s1 + $0x778] sm:$0xff]
  %v275 = vld [vmem:[%s1 + $0x780] sm:$0xff]
  %v276 = vld [vmem:[%s1 + $0x788] sm:$0xff]
  %v277 = vld [vmem:[%s1 + $0x790] sm:$0xff]
  %v278 = vld [vmem:[%s1 + $0x798] sm:$0xff]
  %v279 = vld [vmem:[%s1 + $0x7a0] sm:$0xff]
  %v280 = vld [vmem:[%s1 + $0x7a8] sm:$0xff]
  %v281 = vld [vmem:[%s1 + $0x7b0] sm:$0xff]
  %v282 = vld [vmem:[%s1 + $0x7b8] sm:$0xff]
  %v283 = vld [vmem:[%s1 + $0x7c0] sm:$0xff]
  %v284 = vld [vmem:[%s1 + $0x7c8] sm:$0xff]
  %v285 = vld [vmem:[%s1 + $0x7d0] sm:$0xff]
  %v286 = vld [vmem:[%s1 + $0x7d8] sm:$0xff]
  %v287 = vld [vmem:[%s1 + $0x7e0] sm:$0xff]
  %v288 = vld [vmem:[%s1 + $0x7e8] sm:$0xff]
  %v289 = vld [vmem:[%s1 + $0x7f0] sm:$0xff]
  %v290 = vld [vmem:[%s1 + $0x7f8] sm:$0xff]
  %v291 = vld [vmem:[%s2] sm:$0x3]
  %v293 = vlaneseq
  %v294 = vshrl.u32 %v293, 7
  %v295 = vsub.s32 0, %v294
  %v296 = vrot.slane %v291, %v295
  %v297 = vlaneseq
  %v298 = vshrl.u32 %v297, 7
  %v299 = vsub.s32 1, %v298
  %v300 = vrot.slane %v291, %v299
  %v311 = vunpack.c.l.b16 %v27
  %v312 = vunpack.c.h.b16 %v27
  %v313 = vunpack.c.l.b16 %v28
  %v314 = vunpack.c.h.b16 %v28
  %v315 = vunpack.c.l.b16 %v29
  %v316 = vunpack.c.h.b16 %v29
  %v317 = vunpack.c.l.b16 %v30
  %v318 = vunpack.c.h.b16 %v30
  %v319 = vunpack.c.l.b16 %v31
  %v320 = vunpack.c.h.b16 %v31
  %v321 = vunpack.c.l.b16 %v32
  %v322 = vunpack.c.h.b16 %v32
  %v323 = vunpack.c.l.b16 %v33
  %v324 = vunpack.c.h.b16 %v33
  %v325 = vunpack.c.l.b16 %v34
  %v326 = vunpack.c.h.b16 %v34
  %v327 = vpack.c.b16 %v311, %v311
  %v328 = vpack.c.b16 %v312, %v312
  %v329 = vpack.c.b16 %v313, %v313
  %v330 = vpack.c.b16 %v314, %v314
  %v331 = vpack.c.b16 %v315, %v315
  %v332 = vpack.c.b16 %v316, %v316
  %v333 = vpack.c.b16 %v317, %v317
  %v334 = vpack.c.b16 %v318, %v318
  %v335 = vpack.c.b16 %v319, %v319
  %v336 = vpack.c.b16 %v320, %v320
  %v337 = vpack.c.b16 %v321, %v321
  %v338 = vpack.c.b16 %v322, %v322
  %v339 = vpack.c.b16 %v323, %v323
  %v340 = vpack.c.b16 %v324, %v324
  %v341 = vpack.c.b16 %v325, %v325
  %v342 = vpack.c.b16 %v326, %v326
  %v615 = vunpack.c.l.b16 %v35
  %v616 = vunpack.c.h.b16 %v35
  %v617 = vunpack.c.l.b16 %v36
  %v618 = vunpack.c.h.b16 %v36
  %v619 = vunpack.c.l.b16 %v37
  %v620 = vunpack.c.h.b16 %v37
  %v621 = vunpack.c.l.b16 %v38
  %v622 = vunpack.c.h.b16 %v38
  %v623 = vunpack.c.l.b16 %v39
  %v624 = vunpack.c.h.b16 %v39
  %v625 = vunpack.c.l.b16 %v40
  %v626 = vunpack.c.h.b16 %v40
  %v627 = vunpack.c.l.b16 %v41
  %v628 = vunpack.c.h.b16 %v41
  %v629 = vunpack.c.l.b16 %v42
  %v630 = vunpack.c.h.b16 %v42
  %v631 = vunpack.c.l.b16 %v43
  %v632 = vunpack.c.h.b16 %v43
  %v633 = vunpack.c.l.b16 %v44
  %v634 = vunpack.c.h.b16 %v44
  %v635 = vunpack.c.l.b16 %v45
  %v636 = vunpack.c.h.b16 %v45
  %v637 = vunpack.c.l.b16 %v46
  %v638 = vunpack.c.h.b16 %v46
  %v639 = vunpack.c.l.b16 %v47
  %v640 = vunpack.c.h.b16 %v47
  %v641 = vunpack.c.l.b16 %v48
  %v642 = vunpack.c.h.b16 %v48
  %v643 = vunpack.c.l.b16 %v49
  %v644 = vunpack.c.h.b16 %v49
  %v645 = vunpack.c.l.b16 %v50
  %v646 = vunpack.c.h.b16 %v50
  %v647 = vunpack.c.l.b16 %v51
  %v648 = vunpack.c.h.b16 %v51
  %v649 = vunpack.c.l.b16 %v52
  %v650 = vunpack.c.h.b16 %v52
  %v651 = vunpack.c.l.b16 %v53
  %v652 = vunpack.c.h.b16 %v53
  %v653 = vunpack.c.l.b16 %v54
  %v654 = vunpack.c.h.b16 %v54
  %v655 = vunpack.c.l.b16 %v55
  %v656 = vunpack.c.h.b16 %v55
  %v657 = vunpack.c.l.b16 %v56
  %v658 = vunpack.c.h.b16 %v56
  %v659 = vunpack.c.l.b16 %v57
  %v660 = vunpack.c.h.b16 %v57
  %v661 = vunpack.c.l.b16 %v58
  %v662 = vunpack.c.h.b16 %v58
  %v663 = vunpack.c.l.b16 %v59
  %v664 = vunpack.c.h.b16 %v59
  %v665 = vunpack.c.l.b16 %v60
  %v666 = vunpack.c.h.b16 %v60
  %v667 = vunpack.c.l.b16 %v61
  %v668 = vunpack.c.h.b16 %v61
  %v669 = vunpack.c.l.b16 %v62
  %v670 = vunpack.c.h.b16 %v62
  %v671 = vunpack.c.l.b16 %v63
  %v672 = vunpack.c.h.b16 %v63
  %v673 = vunpack.c.l.b16 %v64
  %v674 = vunpack.c.h.b16 %v64
  %v675 = vunpack.c.l.b16 %v65
  %v676 = vunpack.c.h.b16 %v65
  %v677 = vunpack.c.l.b16 %v66
  %v678 = vunpack.c.h.b16 %v66
  %v679 = vunpack.c.l.b16 %v67
  %v680 = vunpack.c.h.b16 %v67
  %v681 = vunpack.c.l.b16 %v68
  %v682 = vunpack.c.h.b16 %v68
  %v683 = vunpack.c.l.b16 %v69
  %v684 = vunpack.c.h.b16 %v69
  %v685 = vunpack.c.l.b16 %v70
  %v686 = vunpack.c.h.b16 %v70
  %v687 = vunpack.c.l.b16 %v71
  %v688 = vunpack.c.h.b16 %v71
  %v689 = vunpack.c.l.b16 %v72
  %v690 = vunpack.c.h.b16 %v72
  %v691 = vunpack.c.l.b16 %v73
  %v692 = vunpack.c.h.b16 %v73
  %v693 = vunpack.c.l.b16 %v74
  %v694 = vunpack.c.h.b16 %v74
  %v695 = vunpack.c.l.b16 %v75
  %v696 = vunpack.c.h.b16 %v75
  %v697 = vunpack.c.l.b16 %v76
  %v698 = vunpack.c.h.b16 %v76
  %v699 = vunpack.c.l.b16 %v77
  %v700 = vunpack.c.h.b16 %v77
  %v701 = vunpack.c.l.b16 %v78
  %v702 = vunpack.c.h.b16 %v78
  %v703 = vunpack.c.l.b16 %v79
  %v704 = vunpack.c.h.b16 %v79
  %v705 = vunpack.c.l.b16 %v80
  %v706 = vunpack.c.h.b16 %v80
  %v707 = vunpack.c.l.b16 %v81
  %v708 = vunpack.c.h.b16 %v81
  %v709 = vunpack.c.l.b16 %v82
  %v710 = vunpack.c.h.b16 %v82
  %v711 = vunpack.c.l.b16 %v83
  %v712 = vunpack.c.h.b16 %v83
  %v713 = vunpack.c.l.b16 %v84
  %v714 = vunpack.c.h.b16 %v84
  %v715 = vunpack.c.l.b16 %v85
  %v716 = vunpack.c.h.b16 %v85
  %v717 = vunpack.c.l.b16 %v86
  %v718 = vunpack.c.h.b16 %v86
  %v719 = vunpack.c.l.b16 %v87
  %v720 = vunpack.c.h.b16 %v87
  %v721 = vunpack.c.l.b16 %v88
  %v722 = vunpack.c.h.b16 %v88
  %v723 = vunpack.c.l.b16 %v89
  %v724 = vunpack.c.h.b16 %v89
  %v725 = vunpack.c.l.b16 %v90
  %v726 = vunpack.c.h.b16 %v90
  %v727 = vunpack.c.l.b16 %v91
  %v728 = vunpack.c.h.b16 %v91
  %v729 = vunpack.c.l.b16 %v92
  %v730 = vunpack.c.h.b16 %v92
  %v731 = vunpack.c.l.b16 %v93
  %v732 = vunpack.c.h.b16 %v93
  %v733 = vunpack.c.l.b16 %v94
  %v734 = vunpack.c.h.b16 %v94
  %v735 = vunpack.c.l.b16 %v95
  %v736 = vunpack.c.h.b16 %v95
  %v737 = vunpack.c.l.b16 %v96
  %v738 = vunpack.c.h.b16 %v96
  %v739 = vunpack.c.l.b16 %v97
  %v740 = vunpack.c.h.b16 %v97
  %v741 = vunpack.c.l.b16 %v98
  %v742 = vunpack.c.h.b16 %v98
  %v743 = vunpack.c.l.b16 %v99
  %v744 = vunpack.c.h.b16 %v99
  %v745 = vunpack.c.l.b16 %v100
  %v746 = vunpack.c.h.b16 %v100
  %v747 = vunpack.c.l.b16 %v101
  %v748 = vunpack.c.h.b16 %v101
  %v749 = vunpack.c.l.b16 %v102
  %v750 = vunpack.c.h.b16 %v102
  %v751 = vunpack.c.l.b16 %v103
  %v752 = vunpack.c.h.b16 %v103
  %v753 = vunpack.c.l.b16 %v104
  %v754 = vunpack.c.h.b16 %v104
  %v755 = vunpack.c.l.b16 %v105
  %v756 = vunpack.c.h.b16 %v105
  %v757 = vunpack.c.l.b16 %v106
  %v758 = vunpack.c.h.b16 %v106
  %v759 = vunpack.c.l.b16 %v107
  %v760 = vunpack.c.h.b16 %v107
  %v761 = vunpack.c.l.b16 %v108
  %v762 = vunpack.c.h.b16 %v108
  %v763 = vunpack.c.l.b16 %v109
  %v764 = vunpack.c.h.b16 %v109
  %v765 = vunpack.c.l.b16 %v110
  %v766 = vunpack.c.h.b16 %v110
  %v767 = vunpack.c.l.b16 %v111
  %v768 = vunpack.c.h.b16 %v111
  %v769 = vunpack.c.l.b16 %v112
  %v770 = vunpack.c.h.b16 %v112
  %v771 = vunpack.c.l.b16 %v113
  %v772 = vunpack.c.h.b16 %v113
  %v773 = vunpack.c.l.b16 %v114
  %v774 = vunpack.c.h.b16 %v114
  %v775 = vunpack.c.l.b16 %v115
  %v776 = vunpack.c.h.b16 %v115
  %v777 = vunpack.c.l.b16 %v116
  %v778 = vunpack.c.h.b16 %v116
  %v779 = vunpack.c.l.b16 %v117
  %v780 = vunpack.c.h.b16 %v117
  %v781 = vunpack.c.l.b16 %v118
  %v782 = vunpack.c.h.b16 %v118
  %v783 = vunpack.c.l.b16 %v119
  %v784 = vunpack.c.h.b16 %v119
  %v785 = vunpack.c.l.b16 %v120
  %v786 = vunpack.c.h.b16 %v120
  %v787 = vunpack.c.l.b16 %v121
  %v788 = vunpack.c.h.b16 %v121
  %v789 = vunpack.c.l.b16 %v122
  %v790 = vunpack.c.h.b16 %v122
  %v791 = vunpack.c.l.b16 %v123
  %v792 = vunpack.c.h.b16 %v123
  %v793 = vunpack.c.l.b16 %v124
  %v794 = vunpack.c.h.b16 %v124
  %v795 = vunpack.c.l.b16 %v125
  %v796 = vunpack.c.h.b16 %v125
  %v797 = vunpack.c.l.b16 %v126
  %v798 = vunpack.c.h.b16 %v126
  %v799 = vunpack.c.l.b16 %v127
  %v800 = vunpack.c.h.b16 %v127
  %v801 = vunpack.c.l.b16 %v128
  %v802 = vunpack.c.h.b16 %v128
  %v803 = vunpack.c.l.b16 %v129
  %v804 = vunpack.c.h.b16 %v129
  %v805 = vunpack.c.l.b16 %v130
  %v806 = vunpack.c.h.b16 %v130
  %v807 = vunpack.c.l.b16 %v131
  %v808 = vunpack.c.h.b16 %v131
  %v809 = vunpack.c.l.b16 %v132
  %v810 = vunpack.c.h.b16 %v132
  %v811 = vunpack.c.l.b16 %v133
  %v812 = vunpack.c.h.b16 %v133
  %v813 = vunpack.c.l.b16 %v134
  %v814 = vunpack.c.h.b16 %v134
  %v815 = vunpack.c.l.b16 %v135
  %v816 = vunpack.c.h.b16 %v135
  %v817 = vunpack.c.l.b16 %v136
  %v818 = vunpack.c.h.b16 %v136
  %v819 = vunpack.c.l.b16 %v137
  %v820 = vunpack.c.h.b16 %v137
  %v821 = vunpack.c.l.b16 %v138
  %v822 = vunpack.c.h.b16 %v138
  %v823 = vunpack.c.l.b16 %v139
  %v824 = vunpack.c.h.b16 %v139
  %v825 = vunpack.c.l.b16 %v140
  %v826 = vunpack.c.h.b16 %v140
  %v827 = vunpack.c.l.b16 %v141
  %v828 = vunpack.c.h.b16 %v141
  %v829 = vunpack.c.l.b16 %v142
  %v830 = vunpack.c.h.b16 %v142
  %v831 = vunpack.c.l.b16 %v143
  %v832 = vunpack.c.h.b16 %v143
  %v833 = vunpack.c.l.b16 %v144
  %v834 = vunpack.c.h.b16 %v144
  %v835 = vunpack.c.l.b16 %v145
  %v836 = vunpack.c.h.b16 %v145
  %v837 = vunpack.c.l.b16 %v146
  %v838 = vunpack.c.h.b16 %v146
  %v839 = vunpack.c.l.b16 %v147
  %v840 = vunpack.c.h.b16 %v147
  %v841 = vunpack.c.l.b16 %v148
  %v842 = vunpack.c.h.b16 %v148
  %v843 = vunpack.c.l.b16 %v149
  %v844 = vunpack.c.h.b16 %v149
  %v845 = vunpack.c.l.b16 %v150
  %v846 = vunpack.c.h.b16 %v150
  %v847 = vunpack.c.l.b16 %v151
  %v848 = vunpack.c.h.b16 %v151
  %v849 = vunpack.c.l.b16 %v152
  %v850 = vunpack.c.h.b16 %v152
  %v851 = vunpack.c.l.b16 %v153
  %v852 = vunpack.c.h.b16 %v153
  %v853 = vunpack.c.l.b16 %v154
  %v854 = vunpack.c.h.b16 %v154
  %v855 = vunpack.c.l.b16 %v155
  %v856 = vunpack.c.h.b16 %v155
  %v857 = vunpack.c.l.b16 %v156
  %v858 = vunpack.c.h.b16 %v156
  %v859 = vunpack.c.l.b16 %v157
  %v860 = vunpack.c.h.b16 %v157
  %v861 = vunpack.c.l.b16 %v158
  %v862 = vunpack.c.h.b16 %v158
  %v863 = vunpack.c.l.b16 %v159
  %v864 = vunpack.c.h.b16 %v159
  %v865 = vunpack.c.l.b16 %v160
  %v866 = vunpack.c.h.b16 %v160
  %v867 = vunpack.c.l.b16 %v161
  %v868 = vunpack.c.h.b16 %v161
  %v869 = vunpack.c.l.b16 %v162
  %v870 = vunpack.c.h.b16 %v162
  %v871 = vunpack.c.l.b16 %v163
  %v872 = vunpack.c.h.b16 %v163
  %v873 = vunpack.c.l.b16 %v164
  %v874 = vunpack.c.h.b16 %v164
  %v875 = vunpack.c.l.b16 %v165
  %v876 = vunpack.c.h.b16 %v165
  %v877 = vunpack.c.l.b16 %v166
  %v878 = vunpack.c.h.b16 %v166
  %v879 = vunpack.c.l.b16 %v167
  %v880 = vunpack.c.h.b16 %v167
  %v881 = vunpack.c.l.b16 %v168
  %v882 = vunpack.c.h.b16 %v168
  %v883 = vunpack.c.l.b16 %v169
  %v884 = vunpack.c.h.b16 %v169
  %v885 = vunpack.c.l.b16 %v170
  %v886 = vunpack.c.h.b16 %v170
  %v887 = vunpack.c.l.b16 %v171
  %v888 = vunpack.c.h.b16 %v171
  %v889 = vunpack.c.l.b16 %v172
  %v890 = vunpack.c.h.b16 %v172
  %v891 = vunpack.c.l.b16 %v173
  %v892 = vunpack.c.h.b16 %v173
  %v893 = vunpack.c.l.b16 %v174
  %v894 = vunpack.c.h.b16 %v174
  %v895 = vunpack.c.l.b16 %v175
  %v896 = vunpack.c.h.b16 %v175
  %v897 = vunpack.c.l.b16 %v176
  %v898 = vunpack.c.h.b16 %v176
  %v899 = vunpack.c.l.b16 %v177
  %v900 = vunpack.c.h.b16 %v177
  %v901 = vunpack.c.l.b16 %v178
  %v902 = vunpack.c.h.b16 %v178
  %v903 = vunpack.c.l.b16 %v179
  %v904 = vunpack.c.h.b16 %v179
  %v905 = vunpack.c.l.b16 %v180
  %v906 = vunpack.c.h.b16 %v180
  %v907 = vunpack.c.l.b16 %v181
  %v908 = vunpack.c.h.b16 %v181
  %v909 = vunpack.c.l.b16 %v182
  %v910 = vunpack.c.h.b16 %v182
  %v911 = vunpack.c.l.b16 %v183
  %v912 = vunpack.c.h.b16 %v183
  %v913 = vunpack.c.l.b16 %v184
  %v914 = vunpack.c.h.b16 %v184
  %v915 = vunpack.c.l.b16 %v185
  %v916 = vunpack.c.h.b16 %v185
  %v917 = vunpack.c.l.b16 %v186
  %v918 = vunpack.c.h.b16 %v186
  %v919 = vunpack.c.l.b16 %v187
  %v920 = vunpack.c.h.b16 %v187
  %v921 = vunpack.c.l.b16 %v188
  %v922 = vunpack.c.h.b16 %v188
  %v923 = vunpack.c.l.b16 %v189
  %v924 = vunpack.c.h.b16 %v189
  %v925 = vunpack.c.l.b16 %v190
  %v926 = vunpack.c.h.b16 %v190
  %v927 = vunpack.c.l.b16 %v191
  %v928 = vunpack.c.h.b16 %v191
  %v929 = vunpack.c.l.b16 %v192
  %v930 = vunpack.c.h.b16 %v192
  %v931 = vunpack.c.l.b16 %v193
  %v932 = vunpack.c.h.b16 %v193
  %v933 = vunpack.c.l.b16 %v194
  %v934 = vunpack.c.h.b16 %v194
  %v935 = vunpack.c.l.b16 %v195
  %v936 = vunpack.c.h.b16 %v195
  %v937 = vunpack.c.l.b16 %v196
  %v938 = vunpack.c.h.b16 %v196
  %v939 = vunpack.c.l.b16 %v197
  %v940 = vunpack.c.h.b16 %v197
  %v941 = vunpack.c.l.b16 %v198
  %v942 = vunpack.c.h.b16 %v198
  %v943 = vunpack.c.l.b16 %v199
  %v944 = vunpack.c.h.b16 %v199
  %v945 = vunpack.c.l.b16 %v200
  %v946 = vunpack.c.h.b16 %v200
  %v947 = vunpack.c.l.b16 %v201
  %v948 = vunpack.c.h.b16 %v201
  %v949 = vunpack.c.l.b16 %v202
  %v950 = vunpack.c.h.b16 %v202
  %v951 = vunpack.c.l.b16 %v203
  %v952 = vunpack.c.h.b16 %v203
  %v953 = vunpack.c.l.b16 %v204
  %v954 = vunpack.c.h.b16 %v204
  %v955 = vunpack.c.l.b16 %v205
  %v956 = vunpack.c.h.b16 %v205
  %v957 = vunpack.c.l.b16 %v206
  %v958 = vunpack.c.h.b16 %v206
  %v959 = vunpack.c.l.b16 %v207
  %v960 = vunpack.c.h.b16 %v207
  %v961 = vunpack.c.l.b16 %v208
  %v962 = vunpack.c.h.b16 %v208
  %v963 = vunpack.c.l.b16 %v209
  %v964 = vunpack.c.h.b16 %v209
  %v965 = vunpack.c.l.b16 %v210
  %v966 = vunpack.c.h.b16 %v210
  %v967 = vunpack.c.l.b16 %v211
  %v968 = vunpack.c.h.b16 %v211
  %v969 = vunpack.c.l.b16 %v212
  %v970 = vunpack.c.h.b16 %v212
  %v971 = vunpack.c.l.b16 %v213
  %v972 = vunpack.c.h.b16 %v213
  %v973 = vunpack.c.l.b16 %v214
  %v974 = vunpack.c.h.b16 %v214
  %v975 = vunpack.c.l.b16 %v215
  %v976 = vunpack.c.h.b16 %v215
  %v977 = vunpack.c.l.b16 %v216
  %v978 = vunpack.c.h.b16 %v216
  %v979 = vunpack.c.l.b16 %v217
  %v980 = vunpack.c.h.b16 %v217
  %v981 = vunpack.c.l.b16 %v218
  %v982 = vunpack.c.h.b16 %v218
  %v983 = vunpack.c.l.b16 %v219
  %v984 = vunpack.c.h.b16 %v219
  %v985 = vunpack.c.l.b16 %v220
  %v986 = vunpack.c.h.b16 %v220
  %v987 = vunpack.c.l.b16 %v221
  %v988 = vunpack.c.h.b16 %v221
  %v989 = vunpack.c.l.b16 %v222
  %v990 = vunpack.c.h.b16 %v222
  %v991 = vunpack.c.l.b16 %v223
  %v992 = vunpack.c.h.b16 %v223
  %v993 = vunpack.c.l.b16 %v224
  %v994 = vunpack.c.h.b16 %v224
  %v995 = vunpack.c.l.b16 %v225
  %v996 = vunpack.c.h.b16 %v225
  %v997 = vunpack.c.l.b16 %v226
  %v998 = vunpack.c.h.b16 %v226
  %v999 = vunpack.c.l.b16 %v227
  %v1000 = vunpack.c.h.b16 %v227
  %v1001 = vunpack.c.l.b16 %v228
  %v1002 = vunpack.c.h.b16 %v228
  %v1003 = vunpack.c.l.b16 %v229
  %v1004 = vunpack.c.h.b16 %v229
  %v1005 = vunpack.c.l.b16 %v230
  %v1006 = vunpack.c.h.b16 %v230
  %v1007 = vunpack.c.l.b16 %v231
  %v1008 = vunpack.c.h.b16 %v231
  %v1009 = vunpack.c.l.b16 %v232
  %v1010 = vunpack.c.h.b16 %v232
  %v1011 = vunpack.c.l.b16 %v233
  %v1012 = vunpack.c.h.b16 %v233
  %v1013 = vunpack.c.l.b16 %v234
  %v1014 = vunpack.c.h.b16 %v234
  %v1015 = vunpack.c.l.b16 %v235
  %v1016 = vunpack.c.h.b16 %v235
  %v1017 = vunpack.c.l.b16 %v236
  %v1018 = vunpack.c.h.b16 %v236
  %v1019 = vunpack.c.l.b16 %v237
  %v1020 = vunpack.c.h.b16 %v237
  %v1021 = vunpack.c.l.b16 %v238
  %v1022 = vunpack.c.h.b16 %v238
  %v1023 = vunpack.c.l.b16 %v239
  %v1024 = vunpack.c.h.b16 %v239
  %v1025 = vunpack.c.l.b16 %v240
  %v1026 = vunpack.c.h.b16 %v240
  %v1027 = vunpack.c.l.b16 %v241
  %v1028 = vunpack.c.h.b16 %v241
  %v1029 = vunpack.c.l.b16 %v242
  %v1030 = vunpack.c.h.b16 %v242
  %v1031 = vunpack.c.l.b16 %v243
  %v1032 = vunpack.c.h.b16 %v243
  %v1033 = vunpack.c.l.b16 %v244
  %v1034 = vunpack.c.h.b16 %v244
  %v1035 = vunpack.c.l.b16 %v245
  %v1036 = vunpack.c.h.b16 %v245
  %v1037 = vunpack.c.l.b16 %v246
  %v1038 = vunpack.c.h.b16 %v246
  %v1039 = vunpack.c.l.b16 %v247
  %v1040 = vunpack.c.h.b16 %v247
  %v1041 = vunpack.c.l.b16 %v248
  %v1042 = vunpack.c.h.b16 %v248
  %v1043 = vunpack.c.l.b16 %v249
  %v1044 = vunpack.c.h.b16 %v249
  %v1045 = vunpack.c.l.b16 %v250
  %v1046 = vunpack.c.h.b16 %v250
  %v1047 = vunpack.c.l.b16 %v251
  %v1048 = vunpack.c.h.b16 %v251
  %v1049 = vunpack.c.l.b16 %v252
  %v1050 = vunpack.c.h.b16 %v252
  %v1051 = vunpack.c.l.b16 %v253
  %v1052 = vunpack.c.h.b16 %v253
  %v1053 = vunpack.c.l.b16 %v254
  %v1054 = vunpack.c.h.b16 %v254
  %v1055 = vunpack.c.l.b16 %v255
  %v1056 = vunpack.c.h.b16 %v255
  %v1057 = vunpack.c.l.b16 %v256
  %v1058 = vunpack.c.h.b16 %v256
  %v1059 = vunpack.c.l.b16 %v257
  %v1060 = vunpack.c.h.b16 %v257
  %v1061 = vunpack.c.l.b16 %v258
  %v1062 = vunpack.c.h.b16 %v258
  %v1063 = vunpack.c.l.b16 %v259
  %v1064 = vunpack.c.h.b16 %v259
  %v1065 = vunpack.c.l.b16 %v260
  %v1066 = vunpack.c.h.b16 %v260
  %v1067 = vunpack.c.l.b16 %v261
  %v1068 = vunpack.c.h.b16 %v261
  %v1069 = vunpack.c.l.b16 %v262
  %v1070 = vunpack.c.h.b16 %v262
  %v1071 = vunpack.c.l.b16 %v263
  %v1072 = vunpack.c.h.b16 %v263
  %v1073 = vunpack.c.l.b16 %v264
  %v1074 = vunpack.c.h.b16 %v264
  %v1075 = vunpack.c.l.b16 %v265
  %v1076 = vunpack.c.h.b16 %v265
  %v1077 = vunpack.c.l.b16 %v266
  %v1078 = vunpack.c.h.b16 %v266
  %v1079 = vunpack.c.l.b16 %v267
  %v1080 = vunpack.c.h.b16 %v267
  %v1081 = vunpack.c.l.b16 %v268
  %v1082 = vunpack.c.h.b16 %v268
  %v1083 = vunpack.c.l.b16 %v269
  %v1084 = vunpack.c.h.b16 %v269
  %v1085 = vunpack.c.l.b16 %v270
  %v1086 = vunpack.c.h.b16 %v270
  %v1087 = vunpack.c.l.b16 %v271
  %v1088 = vunpack.c.h.b16 %v271
  %v1089 = vunpack.c.l.b16 %v272
  %v1090 = vunpack.c.h.b16 %v272
  %v1091 = vunpack.c.l.b16 %v273
  %v1092 = vunpack.c.h.b16 %v273
  %v1093 = vunpack.c.l.b16 %v274
  %v1094 = vunpack.c.h.b16 %v274
  %v1095 = vunpack.c.l.b16 %v275
  %v1096 = vunpack.c.h.b16 %v275
  %v1097 = vunpack.c.l.b16 %v276
  %v1098 = vunpack.c.h.b16 %v276
  %v1099 = vunpack.c.l.b16 %v277
  %v1100 = vunpack.c.h.b16 %v277
  %v1101 = vunpack.c.l.b16 %v278
  %v1102 = vunpack.c.h.b16 %v278
  %v1103 = vunpack.c.l.b16 %v279
  %v1104 = vunpack.c.h.b16 %v279
  %v1105 = vunpack.c.l.b16 %v280
  %v1106 = vunpack.c.h.b16 %v280
  %v1107 = vunpack.c.l.b16 %v281
  %v1108 = vunpack.c.h.b16 %v281
  %v1109 = vunpack.c.l.b16 %v282
  %v1110 = vunpack.c.h.b16 %v282
  %v1111 = vunpack.c.l.b16 %v283
  %v1112 = vunpack.c.h.b16 %v283
  %v1113 = vunpack.c.l.b16 %v284
  %v1114 = vunpack.c.h.b16 %v284
  %v1115 = vunpack.c.l.b16 %v285
  %v1116 = vunpack.c.h.b16 %v285
  %v1117 = vunpack.c.l.b16 %v286
  %v1118 = vunpack.c.h.b16 %v286
  %v1119 = vunpack.c.l.b16 %v287
  %v1120 = vunpack.c.h.b16 %v287
  %v1121 = vunpack.c.l.b16 %v288
  %v1122 = vunpack.c.h.b16 %v288
  %v1123 = vunpack.c.l.b16 %v289
  %v1124 = vunpack.c.h.b16 %v289
  %v1125 = vunpack.c.l.b16 %v290
  %v1126 = vunpack.c.h.b16 %v290
  %v1127 = vpack.c.b16 %v617, %v615
  %v1128 = vpack.c.b16 %v618, %v616
  %v1129 = vpack.c.b16 %v621, %v619
  %v1130 = vpack.c.b16 %v622, %v620
  %v1131 = vpack.c.b16 %v625, %v623
  %v1132 = vpack.c.b16 %v626, %v624
  %v1133 = vpack.c.b16 %v629, %v627
  %v1134 = vpack.c.b16 %v630, %v628
  %v1135 = vpack.c.b16 %v633, %v631
  %v1136 = vpack.c.b16 %v634, %v632
  %v1137 = vpack.c.b16 %v637, %v635
  %v1138 = vpack.c.b16 %v638, %v636
  %v1139 = vpack.c.b16 %v641, %v639
  %v1140 = vpack.c.b16 %v642, %v640
  %v1141 = vpack.c.b16 %v645, %v643
  %v1142 = vpack.c.b16 %v646, %v644
  %v1143 = vpack.c.b16 %v649, %v647
  %v1144 = vpack.c.b16 %v650, %v648
  %v1145 = vpack.c.b16 %v653, %v651
  %v1146 = vpack.c.b16 %v654, %v652
  %v1147 = vpack.c.b16 %v657, %v655
  %v1148 = vpack.c.b16 %v658, %v656
  %v1149 = vpack.c.b16 %v661, %v659
  %v1150 = vpack.c.b16 %v662, %v660
  %v1151 = vpack.c.b16 %v665, %v663
  %v1152 = vpack.c.b16 %v666, %v664
  %v1153 = vpack.c.b16 %v669, %v667
  %v1154 = vpack.c.b16 %v670, %v668
  %v1155 = vpack.c.b16 %v673, %v671
  %v1156 = vpack.c.b16 %v674, %v672
  %v1157 = vpack.c.b16 %v677, %v675
  %v1158 = vpack.c.b16 %v678, %v676
  %v1159 = vpack.c.b16 %v681, %v679
  %v1160 = vpack.c.b16 %v682, %v680
  %v1161 = vpack.c.b16 %v685, %v683
  %v1162 = vpack.c.b16 %v686, %v684
  %v1163 = vpack.c.b16 %v689, %v687
  %v1164 = vpack.c.b16 %v690, %v688
  %v1165 = vpack.c.b16 %v693, %v691
  %v1166 = vpack.c.b16 %v694, %v692
  %v1167 = vpack.c.b16 %v697, %v695
  %v1168 = vpack.c.b16 %v698, %v696
  %v1169 = vpack.c.b16 %v701, %v699
  %v1170 = vpack.c.b16 %v702, %v700
  %v1171 = vpack.c.b16 %v705, %v703
  %v1172 = vpack.c.b16 %v706, %v704
  %v1173 = vpack.c.b16 %v709, %v707
  %v1174 = vpack.c.b16 %v710, %v708
  %v1175 = vpack.c.b16 %v713, %v711
  %v1176 = vpack.c.b16 %v714, %v712
  %v1177 = vpack.c.b16 %v717, %v715
  %v1178 = vpack.c.b16 %v718, %v716
  %v1179 = vpack.c.b16 %v721, %v719
  %v1180 = vpack.c.b16 %v722, %v720
  %v1181 = vpack.c.b16 %v725, %v723
  %v1182 = vpack.c.b16 %v726, %v724
  %v1183 = vpack.c.b16 %v729, %v727
  %v1184 = vpack.c.b16 %v730, %v728
  %v1185 = vpack.c.b16 %v733, %v731
  %v1186 = vpack.c.b16 %v734, %v732
  %v1187 = vpack.c.b16 %v737, %v735
  %v1188 = vpack.c.b16 %v738, %v736
  %v1189 = vpack.c.b16 %v741, %v739
  %v1190 = vpack.c.b16 %v742, %v740
  %v1191 = vpack.c.b16 %v745, %v743
  %v1192 = vpack.c.b16 %v746, %v744
  %v1193 = vpack.c.b16 %v749, %v747
  %v1194 = vpack.c.b16 %v750, %v748
  %v1195 = vpack.c.b16 %v753, %v751
  %v1196 = vpack.c.b16 %v754, %v752
  %v1197 = vpack.c.b16 %v757, %v755
  %v1198 = vpack.c.b16 %v758, %v756
  %v1199 = vpack.c.b16 %v761, %v759
  %v1200 = vpack.c.b16 %v762, %v760
  %v1201 = vpack.c.b16 %v765, %v763
  %v1202 = vpack.c.b16 %v766, %v764
  %v1203 = vpack.c.b16 %v769, %v767
  %v1204 = vpack.c.b16 %v770, %v768
  %v1205 = vpack.c.b16 %v773, %v771
  %v1206 = vpack.c.b16 %v774, %v772
  %v1207 = vpack.c.b16 %v777, %v775
  %v1208 = vpack.c.b16 %v778, %v776
  %v1209 = vpack.c.b16 %v781, %v779
  %v1210 = vpack.c.b16 %v782, %v780
  %v1211 = vpack.c.b16 %v785, %v783
  %v1212 = vpack.c.b16 %v786, %v784
  %v1213 = vpack.c.b16 %v789, %v787
  %v1214 = vpack.c.b16 %v790, %v788
  %v1215 = vpack.c.b16 %v793, %v791
  %v1216 = vpack.c.b16 %v794, %v792
  %v1217 = vpack.c.b16 %v797, %v795
  %v1218 = vpack.c.b16 %v798, %v796
  %v1219 = vpack.c.b16 %v801, %v799
  %v1220 = vpack.c.b16 %v802, %v800
  %v1221 = vpack.c.b16 %v805, %v803
  %v1222 = vpack.c.b16 %v806, %v804
  %v1223 = vpack.c.b16 %v809, %v807
  %v1224 = vpack.c.b16 %v810, %v808
  %v1225 = vpack.c.b16 %v813, %v811
  %v1226 = vpack.c.b16 %v814, %v812
  %v1227 = vpack.c.b16 %v817, %v815
  %v1228 = vpack.c.b16 %v818, %v816
  %v1229 = vpack.c.b16 %v821, %v819
  %v1230 = vpack.c.b16 %v822, %v820
  %v1231 = vpack.c.b16 %v825, %v823
  %v1232 = vpack.c.b16 %v826, %v824
  %v1233 = vpack.c.b16 %v829, %v827
  %v1234 = vpack.c.b16 %v830, %v828
  %v1235 = vpack.c.b16 %v833, %v831
  %v1236 = vpack.c.b16 %v834, %v832
  %v1237 = vpack.c.b16 %v837, %v835
  %v1238 = vpack.c.b16 %v838, %v836
  %v1239 = vpack.c.b16 %v841, %v839
  %v1240 = vpack.c.b16 %v842, %v840
  %v1241 = vpack.c.b16 %v845, %v843
  %v1242 = vpack.c.b16 %v846, %v844
  %v1243 = vpack.c.b16 %v849, %v847
  %v1244 = vpack.c.b16 %v850, %v848
  %v1245 = vpack.c.b16 %v853, %v851
  %v1246 = vpack.c.b16 %v854, %v852
  %v1247 = vpack.c.b16 %v857, %v855
  %v1248 = vpack.c.b16 %v858, %v856
  %v1249 = vpack.c.b16 %v861, %v859
  %v1250 = vpack.c.b16 %v862, %v860
  %v1251 = vpack.c.b16 %v865, %v863
  %v1252 = vpack.c.b16 %v866, %v864
  %v1253 = vpack.c.b16 %v869, %v867
  %v1254 = vpack.c.b16 %v870, %v868
  %v1255 = vpack.c.b16 %v873, %v871
  %v1256 = vpack.c.b16 %v874, %v872
  %v1257 = vpack.c.b16 %v877, %v875
  %v1258 = vpack.c.b16 %v878, %v876
  %v1259 = vpack.c.b16 %v881, %v879
  %v1260 = vpack.c.b16 %v882, %v880
  %v1261 = vpack.c.b16 %v885, %v883
  %v1262 = vpack.c.b16 %v886, %v884
  %v1263 = vpack.c.b16 %v889, %v887
  %v1264 = vpack.c.b16 %v890, %v888
  %v1265 = vpack.c.b16 %v893, %v891
  %v1266 = vpack.c.b16 %v894, %v892
  %v1267 = vpack.c.b16 %v897, %v895
  %v1268 = vpack.c.b16 %v898, %v896
  %v1269 = vpack.c.b16 %v901, %v899
  %v1270 = vpack.c.b16 %v902, %v900
  %v1271 = vpack.c.b16 %v905, %v903
  %v1272 = vpack.c.b16 %v906, %v904
  %v1273 = vpack.c.b16 %v909, %v907
  %v1274 = vpack.c.b16 %v910, %v908
  %v1275 = vpack.c.b16 %v913, %v911
  %v1276 = vpack.c.b16 %v914, %v912
  %v1277 = vpack.c.b16 %v917, %v915
  %v1278 = vpack.c.b16 %v918, %v916
  %v1279 = vpack.c.b16 %v921, %v919
  %v1280 = vpack.c.b16 %v922, %v920
  %v1281 = vpack.c.b16 %v925, %v923
  %v1282 = vpack.c.b16 %v926, %v924
  %v1283 = vpack.c.b16 %v929, %v927
  %v1284 = vpack.c.b16 %v930, %v928
  %v1285 = vpack.c.b16 %v933, %v931
  %v1286 = vpack.c.b16 %v934, %v932
  %v1287 = vpack.c.b16 %v937, %v935
  %v1288 = vpack.c.b16 %v938, %v936
  %v1289 = vpack.c.b16 %v941, %v939
  %v1290 = vpack.c.b16 %v942, %v940
  %v1291 = vpack.c.b16 %v945, %v943
  %v1292 = vpack.c.b16 %v946, %v944
  %v1293 = vpack.c.b16 %v949, %v947
  %v1294 = vpack.c.b16 %v950, %v948
  %v1295 = vpack.c.b16 %v953, %v951
  %v1296 = vpack.c.b16 %v954, %v952
  %v1297 = vpack.c.b16 %v957, %v955
  %v1298 = vpack.c.b16 %v958, %v956
  %v1299 = vpack.c.b16 %v961, %v959
  %v1300 = vpack.c.b16 %v962, %v960
  %v1301 = vpack.c.b16 %v965, %v963
  %v1302 = vpack.c.b16 %v966, %v964
  %v1303 = vpack.c.b16 %v969, %v967
  %v1304 = vpack.c.b16 %v970, %v968
  %v1305 = vpack.c.b16 %v973, %v971
  %v1306 = vpack.c.b16 %v974, %v972
  %v1307 = vpack.c.b16 %v977, %v975
  %v1308 = vpack.c.b16 %v978, %v976
  %v1309 = vpack.c.b16 %v981, %v979
  %v1310 = vpack.c.b16 %v982, %v980
  %v1311 = vpack.c.b16 %v985, %v983
  %v1312 = vpack.c.b16 %v986, %v984
  %v1313 = vpack.c.b16 %v989, %v987
  %v1314 = vpack.c.b16 %v990, %v988
  %v1315 = vpack.c.b16 %v993, %v991
  %v1316 = vpack.c.b16 %v994, %v992
  %v1317 = vpack.c.b16 %v997, %v995
  %v1318 = vpack.c.b16 %v998, %v996
  %v1319 = vpack.c.b16 %v1001, %v999
  %v1320 = vpack.c.b16 %v1002, %v1000
  %v1321 = vpack.c.b16 %v1005, %v1003
  %v1322 = vpack.c.b16 %v1006, %v1004
  %v1323 = vpack.c.b16 %v1009, %v1007
  %v1324 = vpack.c.b16 %v1010, %v1008
  %v1325 = vpack.c.b16 %v1013, %v1011
  %v1326 = vpack.c.b16 %v1014, %v1012
  %v1327 = vpack.c.b16 %v1017, %v1015
  %v1328 = vpack.c.b16 %v1018, %v1016
  %v1329 = vpack.c.b16 %v1021, %v1019
  %v1330 = vpack.c.b16 %v1022, %v1020
  %v1331 = vpack.c.b16 %v1025, %v1023
  %v1332 = vpack.c.b16 %v1026, %v1024
  %v1333 = vpack.c.b16 %v1029, %v1027
  %v1334 = vpack.c.b16 %v1030, %v1028
  %v1335 = vpack.c.b16 %v1033, %v1031
  %v1336 = vpack.c.b16 %v1034, %v1032
  %v1337 = vpack.c.b16 %v1037, %v1035
  %v1338 = vpack.c.b16 %v1038, %v1036
  %v1339 = vpack.c.b16 %v1041, %v1039
  %v1340 = vpack.c.b16 %v1042, %v1040
  %v1341 = vpack.c.b16 %v1045, %v1043
  %v1342 = vpack.c.b16 %v1046, %v1044
  %v1343 = vpack.c.b16 %v1049, %v1047
  %v1344 = vpack.c.b16 %v1050, %v1048
  %v1345 = vpack.c.b16 %v1053, %v1051
  %v1346 = vpack.c.b16 %v1054, %v1052
  %v1347 = vpack.c.b16 %v1057, %v1055
  %v1348 = vpack.c.b16 %v1058, %v1056
  %v1349 = vpack.c.b16 %v1061, %v1059
  %v1350 = vpack.c.b16 %v1062, %v1060
  %v1351 = vpack.c.b16 %v1065, %v1063
  %v1352 = vpack.c.b16 %v1066, %v1064
  %v1353 = vpack.c.b16 %v1069, %v1067
  %v1354 = vpack.c.b16 %v1070, %v1068
  %v1355 = vpack.c.b16 %v1073, %v1071
  %v1356 = vpack.c.b16 %v1074, %v1072
  %v1357 = vpack.c.b16 %v1077, %v1075
  %v1358 = vpack.c.b16 %v1078, %v1076
  %v1359 = vpack.c.b16 %v1081, %v1079
  %v1360 = vpack.c.b16 %v1082, %v1080
  %v1361 = vpack.c.b16 %v1085, %v1083
  %v1362 = vpack.c.b16 %v1086, %v1084
  %v1363 = vpack.c.b16 %v1089, %v1087
  %v1364 = vpack.c.b16 %v1090, %v1088
  %v1365 = vpack.c.b16 %v1093, %v1091
  %v1366 = vpack.c.b16 %v1094, %v1092
  %v1367 = vpack.c.b16 %v1097, %v1095
  %v1368 = vpack.c.b16 %v1098, %v1096
  %v1369 = vpack.c.b16 %v1101, %v1099
  %v1370 = vpack.c.b16 %v1102, %v1100
  %v1371 = vpack.c.b16 %v1105, %v1103
  %v1372 = vpack.c.b16 %v1106, %v1104
  %v1373 = vpack.c.b16 %v1109, %v1107
  %v1374 = vpack.c.b16 %v1110, %v1108
  %v1375 = vpack.c.b16 %v1113, %v1111
  %v1376 = vpack.c.b16 %v1114, %v1112
  %v1377 = vpack.c.b16 %v1117, %v1115
  %v1378 = vpack.c.b16 %v1118, %v1116
  %v1379 = vpack.c.b16 %v1121, %v1119
  %v1380 = vpack.c.b16 %v1122, %v1120
  %v1381 = vpack.c.b16 %v1125, %v1123
  %v1382 = vpack.c.b16 %v1126, %v1124
  %1639 = vmatprep.subr.bf16.mxu0 %v1128
  %1640 = vmatpush1.bf16.msra.mxu0 %v1127
  %1641 = vmatprep.subr.bf16.mxu0 %v1130
  %1642 = vmatpush1.bf16.msra.mxu0 %v1129
  %1643 = vmatprep.subr.bf16.mxu0 %v1132
  %1644 = vmatpush1.bf16.msra.mxu0 %v1131
  %1645 = vmatprep.subr.bf16.mxu0 %v1134
  %1646 = vmatpush1.bf16.msra.mxu0 %v1133
  %1647 = vmatprep.subr.bf16.mxu0 %v1136
  %1648 = vmatpush1.bf16.msra.mxu0 %v1135
  %1649 = vmatprep.subr.bf16.mxu0 %v1138
  %1650 = vmatpush1.bf16.msra.mxu0 %v1137
  %1651 = vmatprep.subr.bf16.mxu0 %v1140
  %1652 = vmatpush1.bf16.msra.mxu0 %v1139
  %1653 = vmatprep.subr.bf16.mxu0 %v1142
  %1654 = vmatpush1.bf16.msra.mxu0 %v1141
  %1655 = vmatprep.subr.bf16.mxu0 %v1144
  %1656 = vmatpush1.bf16.msra.mxu0 %v1143
  %1657 = vmatprep.subr.bf16.mxu0 %v1146
  %1658 = vmatpush1.bf16.msra.mxu0 %v1145
  %1659 = vmatprep.subr.bf16.mxu0 %v1148
  %1660 = vmatpush1.bf16.msra.mxu0 %v1147
  %1661 = vmatprep.subr.bf16.mxu0 %v1150
  %1662 = vmatpush1.bf16.msra.mxu0 %v1149
  %1663 = vmatprep.subr.bf16.mxu0 %v1152
  %1664 = vmatpush1.bf16.msra.mxu0 %v1151
  %1665 = vmatprep.subr.bf16.mxu0 %v1154
  %1666 = vmatpush1.bf16.msra.mxu0 %v1153
  %1667 = vmatprep.subr.bf16.mxu0 %v1156
  %1668 = vmatpush1.bf16.msra.mxu0 %v1155
  %1669 = vmatprep.subr.bf16.mxu0 %v1158
  %1670 = vmatpush1.bf16.msra.mxu0 %v1157
  %1671 = vmatprep.mubr.bf16.mxu0 %v328
  %1672 = vmatmul.mubr.bf16.gmra.mrb[0].mxu0 %v327
  %v1673 = vpop.f32.mrb[0].mxu0
  %v1674 = vadd.f32 %v296, %v1673
  %v1675 = vpop.f32.mrb[0].mxu0
  %v1676 = vadd.f32 %v300, %v1675
  %v1677 = vpop.f32.mrb[0].mxu0
  %v1678 = vpop.f32.mrb[0].mxu0
  %1679 = vdwg.mxu0
  %1680 = vmatprep.subr.bf16.mxu0 %v1160
  %1681 = vmatpush1.bf16.msra.mxu0 %v1159
  %1682 = vmatprep.subr.bf16.mxu0 %v1162
  %1683 = vmatpush1.bf16.msra.mxu0 %v1161
  %1684 = vmatprep.subr.bf16.mxu0 %v1164
  %1685 = vmatpush1.bf16.msra.mxu0 %v1163
  %1686 = vmatprep.subr.bf16.mxu0 %v1166
  %1687 = vmatpush1.bf16.msra.mxu0 %v1165
  %1688 = vmatprep.subr.bf16.mxu0 %v1168
  %1689 = vmatpush1.bf16.msra.mxu0 %v1167
  %1690 = vmatprep.subr.bf16.mxu0 %v1170
  %1691 = vmatpush1.bf16.msra.mxu0 %v1169
  %1692 = vmatprep.subr.bf16.mxu0 %v1172
  %1693 = vmatpush1.bf16.msra.mxu0 %v1171
  %1694 = vmatprep.subr.bf16.mxu0 %v1174
  %1695 = vmatpush1.bf16.msra.mxu0 %v1173
  %1696 = vmatprep.subr.bf16.mxu0 %v1176
  %1697 = vmatpush1.bf16.msra.mxu0 %v1175
  %1698 = vmatprep.subr.bf16.mxu0 %v1178
  %1699 = vmatpush1.bf16.msra.mxu0 %v1177
  %1700 = vmatprep.subr.bf16.mxu0 %v1180
  %1701 = vmatpush1.bf16.msra.mxu0 %v1179
  %1702 = vmatprep.subr.bf16.mxu0 %v1182
  %1703 = vmatpush1.bf16.msra.mxu0 %v1181
  %1704 = vmatprep.subr.bf16.mxu0 %v1184
  %1705 = vmatpush1.bf16.msra.mxu0 %v1183
  %1706 = vmatprep.subr.bf16.mxu0 %v1186
  %1707 = vmatpush1.bf16.msra.mxu0 %v1185
  %1708 = vmatprep.subr.bf16.mxu0 %v1188
  %1709 = vmatpush1.bf16.msra.mxu0 %v1187
  %1710 = vmatprep.subr.bf16.mxu0 %v1190
  %1711 = vmatpush1.bf16.msra.mxu0 %v1189
  %1712 = vmatprep.mubr.bf16.mxu0 %v330
  %1713 = vmatmul.mubr.bf16.gmra.mrb[0].mxu0 %v329
  %v1714 = vpop.f32.mrb[0].mxu0
  %v1715 = vadd.f32 %v1674, %v1714
  %v1716 = vpop.f32.mrb[0].mxu0
  %v1717 = vadd.f32 %v1676, %v1716
  %v1718 = vpop.f32.mrb[0].mxu0
  %v1719 = vpop.f32.mrb[0].mxu0
  %1720 = vdwg.mxu0
  %1721 = vmatprep.subr.bf16.mxu0 %v1192
  %1722 = vmatpush1.bf16.msra.mxu0 %v1191
  %1723 = vmatprep.subr.bf16.mxu0 %v1194
  %1724 = vmatpush1.bf16.msra.mxu0 %v1193
  %1725 = vmatprep.subr.bf16.mxu0 %v1196
  %1726 = vmatpush1.bf16.msra.mxu0 %v1195
  %1727 = vmatprep.subr.bf16.mxu0 %v1198
  %1728 = vmatpush1.bf16.msra.mxu0 %v1197
  %1729 = vmatprep.subr.bf16.mxu0 %v1200
  %1730 = vmatpush1.bf16.msra.mxu0 %v1199
  %1731 = vmatprep.subr.bf16.mxu0 %v1202
  %1732 = vmatpush1.bf16.msra.mxu0 %v1201
  %1733 = vmatprep.subr.bf16.mxu0 %v1204
  %1734 = vmatpush1.bf16.msra.mxu0 %v1203
  %1735 = vmatprep.subr.bf16.mxu0 %v1206
  %1736 = vmatpush1.bf16.msra.mxu0 %v1205
  %1737 = vmatprep.subr.bf16.mxu0 %v1208
  %1738 = vmatpush1.bf16.msra.mxu0 %v1207
  %1739 = vmatprep.subr.bf16.mxu0 %v1210
  %1740 = vmatpush1.bf16.msra.mxu0 %v1209
  %1741 = vmatprep.subr.bf16.mxu0 %v1212
  %1742 = vmatpush1.bf16.msra.mxu0 %v1211
  %1743 = vmatprep.subr.bf16.mxu0 %v1214
  %1744 = vmatpush1.bf16.msra.mxu0 %v1213
  %1745 = vmatprep.subr.bf16.mxu0 %v1216
  %1746 = vmatpush1.bf16.msra.mxu0 %v1215
  %1747 = vmatprep.subr.bf16.mxu0 %v1218
  %1748 = vmatpush1.bf16.msra.mxu0 %v1217
  %1749 = vmatprep.subr.bf16.mxu0 %v1220
  %1750 = vmatpush1.bf16.msra.mxu0 %v1219
  %1751 = vmatprep.subr.bf16.mxu0 %v1222
  %1752 = vmatpush1.bf16.msra.mxu0 %v1221
  %1753 = vmatprep.mubr.bf16.mxu0 %v332
  %1754 = vmatmul.mubr.bf16.gmra.mrb[0].mxu0 %v331
  %v1755 = vpop.f32.mrb[0].mxu0
  %v1756 = vadd.f32 %v1715, %v1755
  %v1757 = vpop.f32.mrb[0].mxu0
  %v1758 = vadd.f32 %v1717, %v1757
  %v1759 = vpop.f32.mrb[0].mxu0
  %v1760 = vpop.f32.mrb[0].mxu0
  %1761 = vdwg.mxu0
  %1762 = vmatprep.subr.bf16.mxu0 %v1224
  %1763 = vmatpush1.bf16.msra.mxu0 %v1223
  %1764 = vmatprep.subr.bf16.mxu0 %v1226
  %1765 = vmatpush1.bf16.msra.mxu0 %v1225
  %1766 = vmatprep.subr.bf16.mxu0 %v1228
  %1767 = vmatpush1.bf16.msra.mxu0 %v1227
  %1768 = vmatprep.subr.bf16.mxu0 %v1230
  %1769 = vmatpush1.bf16.msra.mxu0 %v1229
  %1770 = vmatprep.subr.bf16.mxu0 %v1232
  %1771 = vmatpush1.bf16.msra.mxu0 %v1231
  %1772 = vmatprep.subr.bf16.mxu0 %v1234
  %1773 = vmatpush1.bf16.msra.mxu0 %v1233
  %1774 = vmatprep.subr.bf16.mxu0 %v1236
  %1775 = vmatpush1.bf16.msra.mxu0 %v1235
  %1776 = vmatprep.subr.bf16.mxu0 %v1238
  %1777 = vmatpush1.bf16.msra.mxu0 %v1237
  %1778 = vmatprep.subr.bf16.mxu0 %v1240
  %1779 = vmatpush1.bf16.msra.mxu0 %v1239
  %1780 = vmatprep.subr.bf16.mxu0 %v1242
  %1781 = vmatpush1.bf16.msra.mxu0 %v1241
  %1782 = vmatprep.subr.bf16.mxu0 %v1244
  %1783 = vmatpush1.bf16.msra.mxu0 %v1243
  %1784 = vmatprep.subr.bf16.mxu0 %v1246
  %1785 = vmatpush1.bf16.msra.mxu0 %v1245
  %1786 = vmatprep.subr.bf16.mxu0 %v1248
  %1787 = vmatpush1.bf16.msra.mxu0 %v1247
  %1788 = vmatprep.subr.bf16.mxu0 %v1250
  %1789 = vmatpush1.bf16.msra.mxu0 %v1249
  %1790 = vmatprep.subr.bf16.mxu0 %v1252
  %1791 = vmatpush1.bf16.msra.mxu0 %v1251
  %1792 = vmatprep.subr.bf16.mxu0 %v1254
  %1793 = vmatpush1.bf16.msra.mxu0 %v1253
  %1794 = vmatprep.mubr.bf16.mxu0 %v334
  %1795 = vmatmul.mubr.bf16.gmra.mrb[0].mxu0 %v333
  %v1796 = vpop.f32.mrb[0].mxu0
  %v1797 = vadd.f32 %v1756, %v1796
  %v1798 = vpop.f32.mrb[0].mxu0
  %v1799 = vadd.f32 %v1758, %v1798
  %v1800 = vpop.f32.mrb[0].mxu0
  %v1801 = vpop.f32.mrb[0].mxu0
  %1802 = vdwg.mxu0
  %1803 = vmatprep.subr.bf16.mxu0 %v1256
  %1804 = vmatpush1.bf16.msra.mxu0 %v1255
  %1805 = vmatprep.subr.bf16.mxu0 %v1258
  %1806 = vmatpush1.bf16.msra.mxu0 %v1257
  %1807 = vmatprep.subr.bf16.mxu0 %v1260
  %1808 = vmatpush1.bf16.msra.mxu0 %v1259
  %1809 = vmatprep.subr.bf16.mxu0 %v1262
  %1810 = vmatpush1.bf16.msra.mxu0 %v1261
  %1811 = vmatprep.subr.bf16.mxu0 %v1264
  %1812 = vmatpush1.bf16.msra.mxu0 %v1263
  %1813 = vmatprep.subr.bf16.mxu0 %v1266
  %1814 = vmatpush1.bf16.msra.mxu0 %v1265
  %1815 = vmatprep.subr.bf16.mxu0 %v1268
  %1816 = vmatpush1.bf16.msra.mxu0 %v1267
  %1817 = vmatprep.subr.bf16.mxu0 %v1270
  %1818 = vmatpush1.bf16.msra.mxu0 %v1269
  %1819 = vmatprep.subr.bf16.mxu0 %v1272
  %1820 = vmatpush1.bf16.msra.mxu0 %v1271
  %1821 = vmatprep.subr.bf16.mxu0 %v1274
  %1822 = vmatpush1.bf16.msra.mxu0 %v1273
  %1823 = vmatprep.subr.bf16.mxu0 %v1276
  %1824 = vmatpush1.bf16.msra.mxu0 %v1275
  %1825 = vmatprep.subr.bf16.mxu0 %v1278
  %1826 = vmatpush1.bf16.msra.mxu0 %v1277
  %1827 = vmatprep.subr.bf16.mxu0 %v1280
  %1828 = vmatpush1.bf16.msra.mxu0 %v1279
  %1829 = vmatprep.subr.bf16.mxu0 %v1282
  %1830 = vmatpush1.bf16.msra.mxu0 %v1281
  %1831 = vmatprep.subr.bf16.mxu0 %v1284
  %1832 = vmatpush1.bf16.msra.mxu0 %v1283
  %1833 = vmatprep.subr.bf16.mxu0 %v1286
  %1834 = vmatpush1.bf16.msra.mxu0 %v1285
  %1835 = vmatprep.mubr.bf16.mxu0 %v336
  %1836 = vmatmul.mubr.bf16.gmra.mrb[0].mxu0 %v335
  %v1837 = vpop.f32.mrb[0].mxu0
  %v1838 = vadd.f32 %v1797, %v1837
  %v1839 = vpop.f32.mrb[0].mxu0
  %v1840 = vadd.f32 %v1799, %v1839
  %v1841 = vpop.f32.mrb[0].mxu0
  %v1842 = vpop.f32.mrb[0].mxu0
  %1843 = vdwg.mxu0
  %1844 = vmatprep.subr.bf16.mxu0 %v1288
  %1845 = vmatpush1.bf16.msra.mxu0 %v1287
  %1846 = vmatprep.subr.bf16.mxu0 %v1290
  %1847 = vmatpush1.bf16.msra.mxu0 %v1289
  %1848 = vmatprep.subr.bf16.mxu0 %v1292
  %1849 = vmatpush1.bf16.msra.mxu0 %v1291
  %1850 = vmatprep.subr.bf16.mxu0 %v1294
  %1851 = vmatpush1.bf16.msra.mxu0 %v1293
  %1852 = vmatprep.subr.bf16.mxu0 %v1296
  %1853 = vmatpush1.bf16.msra.mxu0 %v1295
  %1854 = vmatprep.subr.bf16.mxu0 %v1298
  %1855 = vmatpush1.bf16.msra.mxu0 %v1297
  %1856 = vmatprep.subr.bf16.mxu0 %v1300
  %1857 = vmatpush1.bf16.msra.mxu0 %v1299
  %1858 = vmatprep.subr.bf16.mxu0 %v1302
  %1859 = vmatpush1.bf16.msra.mxu0 %v1301
  %1860 = vmatprep.subr.bf16.mxu0 %v1304
  %1861 = vmatpush1.bf16.msra.mxu0 %v1303
  %1862 = vmatprep.subr.bf16.mxu0 %v1306
  %1863 = vmatpush1.bf16.msra.mxu0 %v1305
  %1864 = vmatprep.subr.bf16.mxu0 %v1308
  %1865 = vmatpush1.bf16.msra.mxu0 %v1307
  %1866 = vmatprep.subr.bf16.mxu0 %v1310
  %1867 = vmatpush1.bf16.msra.mxu0 %v1309
  %1868 = vmatprep.subr.bf16.mxu0 %v1312
  %1869 = vmatpush1.bf16.msra.mxu0 %v1311
  %1870 = vmatprep.subr.bf16.mxu0 %v1314
  %1871 = vmatpush1.bf16.msra.mxu0 %v1313
  %1872 = vmatprep.subr.bf16.mxu0 %v1316
  %1873 = vmatpush1.bf16.msra.mxu0 %v1315
  %1874 = vmatprep.subr.bf16.mxu0 %v1318
  %1875 = vmatpush1.bf16.msra.mxu0 %v1317
  %1876 = vmatprep.mubr.bf16.mxu0 %v338
  %1877 = vmatmul.mubr.bf16.gmra.mrb[0].mxu0 %v337
  %v1878 = vpop.f32.mrb[0].mxu0
  %v1879 = vadd.f32 %v1838, %v1878
  %v1880 = vpop.f32.mrb[0].mxu0
  %v1881 = vadd.f32 %v1840, %v1880
  %v1882 = vpop.f32.mrb[0].mxu0
  %v1883 = vpop.f32.mrb[0].mxu0
  %1884 = vdwg.mxu0
  %1885 = vmatprep.subr.bf16.mxu0 %v1320
  %1886 = vmatpush1.bf16.msra.mxu0 %v1319
  %1887 = vmatprep.subr.bf16.mxu0 %v1322
  %1888 = vmatpush1.bf16.msra.mxu0 %v1321
  %1889 = vmatprep.subr.bf16.mxu0 %v1324
  %1890 = vmatpush1.bf16.msra.mxu0 %v1323
  %1891 = vmatprep.subr.bf16.mxu0 %v1326
  %1892 = vmatpush1.bf16.msra.mxu0 %v1325
  %1893 = vmatprep.subr.bf16.mxu0 %v1328
  %1894 = vmatpush1.bf16.msra.mxu0 %v1327
  %1895 = vmatprep.subr.bf16.mxu0 %v1330
  %1896 = vmatpush1.bf16.msra.mxu0 %v1329
  %1897 = vmatprep.subr.bf16.mxu0 %v1332
  %1898 = vmatpush1.bf16.msra.mxu0 %v1331
  %1899 = vmatprep.subr.bf16.mxu0 %v1334
  %1900 = vmatpush1.bf16.msra.mxu0 %v1333
  %1901 = vmatprep.subr.bf16.mxu0 %v1336
  %1902 = vmatpush1.bf16.msra.mxu0 %v1335
  %1903 = vmatprep.subr.bf16.mxu0 %v1338
  %1904 = vmatpush1.bf16.msra.mxu0 %v1337
  %1905 = vmatprep.subr.bf16.mxu0 %v1340
  %1906 = vmatpush1.bf16.msra.mxu0 %v1339
  %1907 = vmatprep.subr.bf16.mxu0 %v1342
  %1908 = vmatpush1.bf16.msra.mxu0 %v1341
  %1909 = vmatprep.subr.bf16.mxu0 %v1344
  %1910 = vmatpush1.bf16.msra.mxu0 %v1343
  %1911 = vmatprep.subr.bf16.mxu0 %v1346
  %1912 = vmatpush1.bf16.msra.mxu0 %v1345
  %1913 = vmatprep.subr.bf16.mxu0 %v1348
  %1914 = vmatpush1.bf16.msra.mxu0 %v1347
  %1915 = vmatprep.subr.bf16.mxu0 %v1350
  %1916 = vmatpush1.bf16.msra.mxu0 %v1349
  %1917 = vmatprep.mubr.bf16.mxu0 %v340
  %1918 = vmatmul.mubr.bf16.gmra.mrb[0].mxu0 %v339
  %v1919 = vpop.f32.mrb[0].mxu0
  %v1920 = vadd.f32 %v1879, %v1919
  %v1921 = vpop.f32.mrb[0].mxu0
  %v1922 = vadd.f32 %v1881, %v1921
  %v1923 = vpop.f32.mrb[0].mxu0
  %v1924 = vpop.f32.mrb[0].mxu0
  %1925 = vdwg.mxu0
  %1926 = vmatprep.subr.bf16.mxu0 %v1352
  %1927 = vmatpush1.bf16.msra.mxu0 %v1351
  %1928 = vmatprep.subr.bf16.mxu0 %v1354
  %1929 = vmatpush1.bf16.msra.mxu0 %v1353
  %1930 = vmatprep.subr.bf16.mxu0 %v1356
  %1931 = vmatpush1.bf16.msra.mxu0 %v1355
  %1932 = vmatprep.subr.bf16.mxu0 %v1358
  %1933 = vmatpush1.bf16.msra.mxu0 %v1357
  %1934 = vmatprep.subr.bf16.mxu0 %v1360
  %1935 = vmatpush1.bf16.msra.mxu0 %v1359
  %1936 = vmatprep.subr.bf16.mxu0 %v1362
  %1937 = vmatpush1.bf16.msra.mxu0 %v1361
  %1938 = vmatprep.subr.bf16.mxu0 %v1364
  %1939 = vmatpush1.bf16.msra.mxu0 %v1363
  %1940 = vmatprep.subr.bf16.mxu0 %v1366
  %1941 = vmatpush1.bf16.msra.mxu0 %v1365
  %1942 = vmatprep.subr.bf16.mxu0 %v1368
  %1943 = vmatpush1.bf16.msra.mxu0 %v1367
  %1944 = vmatprep.subr.bf16.mxu0 %v1370
  %1945 = vmatpush1.bf16.msra.mxu0 %v1369
  %1946 = vmatprep.subr.bf16.mxu0 %v1372
  %1947 = vmatpush1.bf16.msra.mxu0 %v1371
  %1948 = vmatprep.subr.bf16.mxu0 %v1374
  %1949 = vmatpush1.bf16.msra.mxu0 %v1373
  %1950 = vmatprep.subr.bf16.mxu0 %v1376
  %1951 = vmatpush1.bf16.msra.mxu0 %v1375
  %1952 = vmatprep.subr.bf16.mxu0 %v1378
  %1953 = vmatpush1.bf16.msra.mxu0 %v1377
  %1954 = vmatprep.subr.bf16.mxu0 %v1380
  %1955 = vmatpush1.bf16.msra.mxu0 %v1379
  %1956 = vmatprep.subr.bf16.mxu0 %v1382
  %1957 = vmatpush1.bf16.msra.mxu0 %v1381
  %1958 = vmatprep.mubr.bf16.mxu0 %v342
  %1959 = vmatmul.mubr.bf16.gmra.mrb[0].mxu0 %v341
  %v1960 = vpop.f32.mrb[0].mxu0
  %v1961 = vadd.f32 %v1920, %v1960
  %v1962 = vpop.f32.mrb[0].mxu0
  %v1963 = vadd.f32 %v1922, %v1962
  %v1964 = vpop.f32.mrb[0].mxu0
  %v1965 = vpop.f32.mrb[0].mxu0
  %1966 = vdwg.mxu0
  %1967 = vst [vmem:[%s3] sm:$0xff] %v1961
  %1968 = vst [vmem:[%s3 + $0x8] sm:$0xff] %v1963
  %v1969 = vld [vmem:[%s4] sm:$0x3]
  %v1970 = vrot.slane %v1961, 4
  %v1971 = vadd.f32 %v1961, %v1970
  %v1972 = vrot.slane %v1971, 2
  %v1973 = vadd.f32 %v1971, %v1972
  %v1974 = vrot.slane %v1973, 1
  %v1975 = vadd.f32 %v1973, %v1974
  %v1976 = vrot.slane %v1963, 4
  %v1977 = vadd.f32 %v1963, %v1976
  %v1978 = vrot.slane %v1977, 2
  %v1979 = vadd.f32 %v1977, %v1978
  %v1980 = vrot.slane %v1979, 1
  %v1981 = vadd.f32 %v1979, %v1980
  %v1984 = vcombine.low %v1975, %v1981
  %v1986 = vunpack.c.l.s4 1966171168
  %v1987 = vunpack.c.0.s8 %v1986
  %v1988 = vlaneseq
  %v1989 = vshrl.u32 %v1988, 7
  %v1990 = vsub.s32 %v1987, %v1989
  %v1991 = vrot.slane %v1984, %v1990
  %v1993 = vunpack.c.l.s4 1966171168
  %v1994 = vunpack.c.0.s8 %v1993
  %v1995 = vlaneseq
  %v1996 = vshrl.u32 %v1995, 7
  %v1997 = vsub.s32 %v1994, %v1996
  %v1998 = vrot.slane %v1991, %v1997
  %v2000 = vadd.f32 %v1969, %v1998
  %v2001 = vlaneseq
  %vm2002 = vcmp.ge.s32.totalorder %v2001, 0
  %vm2003 = vcmp.lt.s32.totalorder %v2001, 256
  %vm2004 = vmand %vm2002, %vm2003
  %2005 = vst.msk [vmem:[%s4] sm:$0x3] %vm2004, %v2000
  %v2006 = vld [vmem:[%s5] sm:$0x3]
  %v2007 = vmul.f32 %v1961, %v1961
  %v2008 = vmul.f32 %v1963, %v1963
  %v2009 = vrot.slane %v2007, 4
  %v2010 = vadd.f32 %v2007, %v2009
  %v2011 = vrot.slane %v2010, 2
  %v2012 = vadd.f32 %v2010, %v2011
  %v2013 = vrot.slane %v2012, 1
  %v2014 = vadd.f32 %v2012, %v2013
  %v2015 = vrot.slane %v2008, 4
  %v2016 = vadd.f32 %v2008, %v2015
  %v2017 = vrot.slane %v2016, 2
  %v2018 = vadd.f32 %v2016, %v2017
  %v2019 = vrot.slane %v2018, 1
  %v2020 = vadd.f32 %v2018, %v2019
  %v2023 = vcombine.low %v2014, %v2020
  %v2025 = vunpack.c.l.s4 1966171168
  %v2026 = vunpack.c.0.s8 %v2025
  %v2027 = vlaneseq
  %v2028 = vshrl.u32 %v2027, 7
  %v2029 = vsub.s32 %v2026, %v2028
  %v2030 = vrot.slane %v2023, %v2029
  %v2032 = vunpack.c.l.s4 1966171168
  %v2033 = vunpack.c.0.s8 %v2032
  %v2034 = vlaneseq
  %v2035 = vshrl.u32 %v2034, 7
  %v2036 = vsub.s32 %v2033, %v2035
  %v2037 = vrot.slane %v2030, %v2036
  %v2039 = vadd.f32 %v2006, %v2037
  %2040 = vst.msk [vmem:[%s5] sm:$0x3] %vm2004, %v2039
  // Predicated region
  $region18: #{discriminator_gan_forward.9} parent=0 // pred_check
    _
  $region19: #{discriminator_gan_forward.9} parent=0 // pred_check_branch
    %2042 = sbr.rel (0) target = $region21
  $region20: #{discriminator_gan_forward.9} parent=0 // pred_region
    _
  $region21: #{discriminator_gan_forward.9} parent=0 // pred_fallthru
    _
  // Predicated region
  $region22: #{discriminator_gan_forward.9} parent=0 // pred_check
    _
  $region23: #{discriminator_gan_forward.9} parent=0 // pred_check_branch
    %2044 = sbr.rel (0) target = $region25
  $region24: #{discriminator_gan_forward.9} parent=0 // pred_region
    _
  $region25: #{discriminator_gan_forward.9} parent=0 // pred_fallthru
    _
  // Predicated region
  $region26: #{discriminator_gan_forward.9} parent=0 // pred_check
    _
  $region27: #{discriminator_gan_forward.9} parent=0 // pred_check_branch
    %2046 = sbr.rel (0) target = $region29
  $region28: #{discriminator_gan_forward.9} parent=0 // pred_region
    _
  $region29: #{discriminator_gan_forward.9} parent=0 // pred_fallthru
    _
  // Predicated region
  $region30: #{discriminator_gan_forward.9} parent=0 // pred_check
    _
  $region31: #{discriminator_gan_forward.9} parent=0 // pred_check_branch
    %2048 = sbr.rel (0) target = $region33
  $region32: #{discriminator_gan_forward.9} parent=0 // pred_region
    _
  $region33: #{discriminator_gan_forward.9} parent=0 // pred_fallthru
    _
  // Predicated region
  $region34: #{discriminator_gan_forward.9} parent=0 // pred_check
    _
  $region35: #{discriminator_gan_forward.9} parent=0 // pred_check_branch
    %2050 = sbr.rel (0) target = $region37
  $region36: #{discriminator_gan_forward.9} parent=0 // pred_region
    _
  $region37: #{discriminator_gan_forward.9} parent=0 // pred_fallthru
    _
  // Predicated region
  $region38: #{discriminator_gan_forward.9} parent=0 // pred_check
    _
  $region39: #{discriminator_gan_forward.9} parent=0 // pred_check_branch
    %2052 = sbr.rel (0) target = $region41
  $region40: #{discriminator_gan_forward.9} parent=0 // pred_region
    _
  $region41: #{discriminator_gan_forward.9} parent=0 // pred_fallthru
    _

</llo_original>
